<compile_context>
chip_gen: v7x
topology: tpu7x:2x2x1
jax: 0.10.0
libtpu: 0.0.40
codegen_flags: <defaults>
</compile_context>

<pallas_src>
import jax
import jax.numpy as jnp
from jax.experimental import pallas as pl
from jax.experimental.pallas import tpu as pltpu

IN_FEATURES = 28 * 28          # 784
K_PAD = 896                    # 7 * 128 lane-aligned padding of the input features


def _round_up(x, m):
    return ((x + m - 1) // m) * m


def _leaky_relu(x, slope=0.2):
    return jnp.where(x > 0, x, slope * x)


def discriminator_kernel(x_ref,
                         w1_ref, b1_ref,
                         w2_ref, b2_ref,
                         w3_ref, b3_ref,
                         w4_ref, b4_ref,
                         o_ref):
    # Layer 1: 896 (zero-padded 784) -> 1024, bf16 MXU inputs, f32 accumulation.
    h = jnp.dot(x_ref[...], w1_ref[...], preferred_element_type=jnp.float32)
    h = _leaky_relu(h + b1_ref[...])                    # (TM, 1024) f32; Dropout = identity

    # Layer 2: 1024 -> 512.
    h = jnp.dot(h.astype(jnp.bfloat16), w2_ref[...], preferred_element_type=jnp.float32)
    h = _leaky_relu(h + b2_ref[...])                    # (TM, 512)

    # Layer 3: 512 -> 256.
    h = jnp.dot(h.astype(jnp.bfloat16), w3_ref[...], preferred_element_type=jnp.float32)
    h = _leaky_relu(h + b3_ref[...])                    # (TM, 256)

    # Layer 4: 256 -> 1 as a lane reduction (avoid an N=1 MXU matmul / masked store).
    logits = jnp.sum(h * w4_ref[...], axis=-1, keepdims=True) + b4_ref[...]   # (TM, 1)
    o_ref[...] = jax.nn.sigmoid(logits).astype(o_ref.dtype)


def make_params(key):
    """Deterministic PyTorch-style (uniform +-1/sqrt(fan_in)) init for the 4 Linear layers."""
    dims = [(IN_FEATURES, 1024), (1024, 512), (512, 256), (256, 1)]
    params = []
    for i, (fan_in, fan_out) in enumerate(dims):
        kw, kb = jax.random.split(jax.random.fold_in(key, i))
        bound = 1.0 / jnp.sqrt(jnp.float32(fan_in))
        w = jax.random.uniform(kw, (fan_in, fan_out), jnp.float32, -bound, bound)
        b = jax.random.uniform(kb, (1, fan_out), jnp.float32, -bound, bound)
        params += [w, b]
    return params


@jax.jit
def discriminator_forward(x_img, w1, b1, w2, b2, w3, b3, w4, b4):
    # inputs.view(-1, 28*28)
    x = x_img.reshape(-1, IN_FEATURES).astype(jnp.float32)
    B = x.shape[0]

    # Batch tile: 256 rows for large batches; round small batches up to a multiple of 16
    # (bf16-friendly sublane count).
    TM = 256 if B >= 256 else _round_up(B, 16)
    B_pad = _round_up(B, TM)

    # Pad batch rows and feature columns; cast the streamed activations to bf16.
    x_p = jnp.pad(x, ((0, B_pad - B), (0, K_PAD - IN_FEATURES))).astype(jnp.bfloat16)

    # bf16 weights for the large layers (zero rows for the padded input features of w1).
    w1_p = jnp.pad(w1, ((0, K_PAD - IN_FEATURES), (0, 0))).astype(jnp.bfloat16)
    w2_b = w2.astype(jnp.bfloat16)
    w3_b = w3.astype(jnp.bfloat16)
    # Final layer stays f32: it is a tiny lane reduction, not an MXU matmul.
    w4_r = w4.reshape(1, 256).astype(jnp.float32)

    b1_r = b1.reshape(1, 1024).astype(jnp.float32)
    b2_r = b2.reshape(1, 512).astype(jnp.float32)
    b3_r = b3.reshape(1, 256).astype(jnp.float32)
    b4_r = b4.reshape(1, 1).astype(jnp.float32)

    grid = (B_pad // TM,)
    const = lambda i: (0, 0)     # weights/biases resident in VMEM across grid steps

    out = pl.pallas_call(
        discriminator_kernel,
        out_shape=jax.ShapeDtypeStruct((B_pad, 1), jnp.float32),
        grid=grid,
        in_specs=[
            pl.BlockSpec((TM, K_PAD), lambda i: (i, 0)),      # x tile streams over batch
            pl.BlockSpec((K_PAD, 1024), const),               # w1
            pl.BlockSpec((1, 1024), const),                   # b1
            pl.BlockSpec((1024, 512), const),                 # w2
            pl.BlockSpec((1, 512), const),                    # b2
            pl.BlockSpec((512, 256), const),                  # w3
            pl.BlockSpec((1, 256), const),                    # b3
            pl.BlockSpec((1, 256), const),                    # w4 (row vector)
            pl.BlockSpec((1, 1), const),                      # b4
        ],
        out_specs=pl.BlockSpec((TM, 1), lambda i: (i, 0)),
        compiler_params=pltpu.CompilerParams(
            dimension_semantics=("parallel",),
            vmem_limit_bytes=32 << 20,
        ),
    )(x_p, w1_p, b1_r, w2_b, b2_r, w3_b, b3_r, w4_r, b4_r)

    # o.view(-1, 1), dropping padded batch rows.
    return out[:B].reshape(-1, 1)


if __name__ == "__main__":
    key = jax.random.PRNGKey(0)
    k_x, k_p = jax.random.split(key)

    # Small NCHW batch consistent with the module: (B, 1, 28, 28)
    x_img = jax.random.normal(k_x, (8, 1, 28, 28), jnp.float32)
    params = make_params(k_p)

    out = discriminator_forward(x_img, *params)
    out = jax.block_until_ready(out)

    # Pure-JAX f32 reference (dropout = identity, eval semantics).
    def ref(x_img, w1, b1, w2, b2, w3, b3, w4, b4):
        h = x_img.reshape(-1, IN_FEATURES)
        h = _leaky_relu(h @ w1 + b1)
        h = _leaky_relu(h @ w2 + b2)
        h = _leaky_relu(h @ w3 + b3)
        return jax.nn.sigmoid(h @ w4 + b4).reshape(-1, 1)

    expected = ref(x_img, *params)
    assert out.shape == (8, 1)
    # Loose tolerance: kernel uses bf16 MXU inputs with f32 accumulation.
    assert jnp.allclose(out, expected, atol=2e-2, rtol=2e-2), (
        f"max abs err {jnp.max(jnp.abs(out - expected))}")

    print("KERNEL_OK")
</pallas_src>

<mosaic_0001>
module attributes {stable_mosaic.version = 11 : i64} {
  func.func @discriminator_kernel(%arg0: i32, %arg1: memref<16x896xbf16, #tpu.memory_space<vmem>>, %arg2: memref<896x1024xbf16, #tpu.memory_space<vmem>>, %arg3: memref<1x1024xf32, #tpu.memory_space<vmem>>, %arg4: memref<1024x512xbf16, #tpu.memory_space<vmem>>, %arg5: memref<1x512xf32, #tpu.memory_space<vmem>>, %arg6: memref<512x256xbf16, #tpu.memory_space<vmem>>, %arg7: memref<1x256xf32, #tpu.memory_space<vmem>>, %arg8: memref<1x256xf32, #tpu.memory_space<vmem>>, %arg9: memref<1x1xf32, #tpu.memory_space<vmem>>, %arg10: memref<16x1xf32, #tpu.memory_space<vmem>>) attributes {dimension_semantics = [#tpu.dimension_semantics<parallel>], iteration_bounds = array<i64: 1>, scalar_prefetch = 0 : i64, scratch_operands = 0 : i64, tpu.core_type = #tpu.core_type<tc>, window_params = [{transform_indices = @transform_0, window_bounds = array<i64: 16, 896>}, {pipeline_mode = #tpu.pipeline_mode<synchronous>, transform_indices = @transform_1, window_bounds = array<i64: 896, 1024>}, {pipeline_mode = #tpu.pipeline_mode<synchronous>, transform_indices = @transform_2, window_bounds = array<i64: 1, 1024>}, {pipeline_mode = #tpu.pipeline_mode<synchronous>, transform_indices = @transform_3, window_bounds = array<i64: 1024, 512>}, {pipeline_mode = #tpu.pipeline_mode<synchronous>, transform_indices = @transform_4, window_bounds = array<i64: 1, 512>}, {pipeline_mode = #tpu.pipeline_mode<synchronous>, transform_indices = @transform_5, window_bounds = array<i64: 512, 256>}, {pipeline_mode = #tpu.pipeline_mode<synchronous>, transform_indices = @transform_6, window_bounds = array<i64: 1, 256>}, {pipeline_mode = #tpu.pipeline_mode<synchronous>, transform_indices = @transform_7, window_bounds = array<i64: 1, 256>}, {pipeline_mode = #tpu.pipeline_mode<synchronous>, transform_indices = @transform_8, window_bounds = array<i64: 1, 1>}, {transform_indices = @transform_9, window_bounds = array<i64: 16, 1>}]} {
    %c0 = arith.constant 0 : index
    %c0_0 = arith.constant 0 : index
    %0 = vector.load %arg1[%c0, %c0_0] : memref<16x896xbf16, #tpu.memory_space<vmem>>, vector<16x896xbf16>
    %c0_1 = arith.constant 0 : index
    %c0_2 = arith.constant 0 : index
    %1 = vector.load %arg2[%c0_1, %c0_2] : memref<896x1024xbf16, #tpu.memory_space<vmem>>, vector<896x1024xbf16>
    %cst = arith.constant dense<0.000000e+00> : vector<16x1024xf32>
    %2 = tpu.matmul %0, %1, %cst {dimension_numbers = #tpu.dot_dimension_numbers<[1], [0], [0], [1], [0, 0, 1, 1], [], []>} : vector<16x896xbf16>, vector<896x1024xbf16>, vector<16x1024xf32> -> vector<16x1024xf32>
    %c0_3 = arith.constant 0 : index
    %c0_4 = arith.constant 0 : index
    %3 = vector.load %arg3[%c0_3, %c0_4] : memref<1x1024xf32, #tpu.memory_space<vmem>>, vector<1x1024xf32>
    %4 = vector.broadcast %3 : vector<1x1024xf32> to vector<16x1024xf32>
    %5 = arith.addf %2, %4 : vector<16x1024xf32>
    %cst_5 = arith.constant 0.000000e+00 : f32
    %6 = vector.broadcast %cst_5 : f32 to vector<16x1024xf32>
    %7 = arith.cmpf ogt, %5, %6 : vector<16x1024xf32>
    %cst_6 = arith.constant 2.000000e-01 : f32
    %8 = vector.broadcast %cst_6 : f32 to vector<16x1024xf32>
    %9 = arith.mulf %8, %5 : vector<16x1024xf32>
    %10 = arith.select %7, %5, %9 : vector<16x1024xi1>, vector<16x1024xf32>
    %11 = arith.truncf %10 : vector<16x1024xf32> to vector<16x1024xbf16>
    %c0_7 = arith.constant 0 : index
    %c0_8 = arith.constant 0 : index
    %12 = vector.load %arg4[%c0_7, %c0_8] : memref<1024x512xbf16, #tpu.memory_space<vmem>>, vector<1024x512xbf16>
    %cst_9 = arith.constant dense<0.000000e+00> : vector<16x512xf32>
    %13 = tpu.matmul %11, %12, %cst_9 {dimension_numbers = #tpu.dot_dimension_numbers<[1], [0], [0], [1], [0, 0, 1, 1], [], []>} : vector<16x1024xbf16>, vector<1024x512xbf16>, vector<16x512xf32> -> vector<16x512xf32>
    %c0_10 = arith.constant 0 : index
    %c0_11 = arith.constant 0 : index
    %14 = vector.load %arg5[%c0_10, %c0_11] : memref<1x512xf32, #tpu.memory_space<vmem>>, vector<1x512xf32>
    %15 = vector.broadcast %14 : vector<1x512xf32> to vector<16x512xf32>
    %16 = arith.addf %13, %15 : vector<16x512xf32>
    %cst_12 = arith.constant 0.000000e+00 : f32
    %17 = vector.broadcast %cst_12 : f32 to vector<16x512xf32>
    %18 = arith.cmpf ogt, %16, %17 : vector<16x512xf32>
    %cst_13 = arith.constant 2.000000e-01 : f32
    %19 = vector.broadcast %cst_13 : f32 to vector<16x512xf32>
    %20 = arith.mulf %19, %16 : vector<16x512xf32>
    %21 = arith.select %18, %16, %20 : vector<16x512xi1>, vector<16x512xf32>
    %22 = arith.truncf %21 : vector<16x512xf32> to vector<16x512xbf16>
    %c0_14 = arith.constant 0 : index
    %c0_15 = arith.constant 0 : index
    %23 = vector.load %arg6[%c0_14, %c0_15] : memref<512x256xbf16, #tpu.memory_space<vmem>>, vector<512x256xbf16>
    %cst_16 = arith.constant dense<0.000000e+00> : vector<16x256xf32>
    %24 = tpu.matmul %22, %23, %cst_16 {dimension_numbers = #tpu.dot_dimension_numbers<[1], [0], [0], [1], [0, 0, 1, 1], [], []>} : vector<16x512xbf16>, vector<512x256xbf16>, vector<16x256xf32> -> vector<16x256xf32>
    %c0_17 = arith.constant 0 : index
    %c0_18 = arith.constant 0 : index
    %25 = vector.load %arg7[%c0_17, %c0_18] : memref<1x256xf32, #tpu.memory_space<vmem>>, vector<1x256xf32>
    %26 = vector.broadcast %25 : vector<1x256xf32> to vector<16x256xf32>
    %27 = arith.addf %24, %26 : vector<16x256xf32>
    %cst_19 = arith.constant 0.000000e+00 : f32
    %28 = vector.broadcast %cst_19 : f32 to vector<16x256xf32>
    %29 = arith.cmpf ogt, %27, %28 : vector<16x256xf32>
    %cst_20 = arith.constant 2.000000e-01 : f32
    %30 = vector.broadcast %cst_20 : f32 to vector<16x256xf32>
    %31 = arith.mulf %30, %27 : vector<16x256xf32>
    %32 = arith.select %29, %27, %31 : vector<16x256xi1>, vector<16x256xf32>
    %c0_21 = arith.constant 0 : index
    %c0_22 = arith.constant 0 : index
    %33 = vector.load %arg8[%c0_21, %c0_22] : memref<1x256xf32, #tpu.memory_space<vmem>>, vector<1x256xf32>
    %34 = vector.broadcast %33 : vector<1x256xf32> to vector<16x256xf32>
    %35 = arith.mulf %32, %34 : vector<16x256xf32>
    %cst_23 = arith.constant dense<0.000000e+00> : vector<16xf32>
    %36 = vector.multi_reduction <add>, %35, %cst_23 [1] : vector<16x256xf32> to vector<16xf32>
    %37 = vector.shape_cast %36 : vector<16xf32> to vector<16x1xf32>
    %c0_24 = arith.constant 0 : index
    %c0_25 = arith.constant 0 : index
    %38 = vector.load %arg9[%c0_24, %c0_25] : memref<1x1xf32, #tpu.memory_space<vmem>>, vector<1x1xf32>
    %39 = vector.broadcast %38 : vector<1x1xf32> to vector<16x1xf32>
    %40 = arith.addf %37, %39 : vector<16x1xf32>
    %41 = arith.negf %40 : vector<16x1xf32>
    %42 = math.exp %41 : vector<16x1xf32>
    %cst_26 = arith.constant 1.000000e+00 : f32
    %43 = vector.broadcast %cst_26 : f32 to vector<16x1xf32>
    %44 = arith.addf %43, %42 : vector<16x1xf32>
    %45 = arith.divf %43, %44 : vector<16x1xf32>
    %c0_27 = arith.constant 0 : index
    %c0_28 = arith.constant 0 : index
    %46 = vector.load %arg10[%c0_27, %c0_28] : memref<16x1xf32, #tpu.memory_space<vmem>>, vector<16x1xf32>
    tpu.vector_store %arg10[%c0_27, %c0_28], %45 {strides = array<i32>} : memref<16x1xf32, #tpu.memory_space<vmem>>, vector<16x1xf32>,
    return
  }
  func.func @transform_0(%arg0: i32) -> (i32, i32) {
    %c0_i32 = arith.constant 0 : i32
    %c0_i32_0 = arith.constant 0 : i32
    return %arg0, %c0_i32 : i32, i32
  }
  func.func @transform_1(%arg0: i32) -> (i32, i32) {
    %c0_i32 = arith.constant 0 : i32
    %c0_i32_0 = arith.constant 0 : i32
    %c0_i32_1 = arith.constant 0 : i32
    return %c0_i32, %c0_i32_0 : i32, i32
  }
  func.func @transform_2(%arg0: i32) -> (i32, i32) {
    %c0_i32 = arith.constant 0 : i32
    %c0_i32_0 = arith.constant 0 : i32
    %c0_i32_1 = arith.constant 0 : i32
    return %c0_i32, %c0_i32_0 : i32, i32
  }
  func.func @transform_3(%arg0: i32) -> (i32, i32) {
    %c0_i32 = arith.constant 0 : i32
    %c0_i32_0 = arith.constant 0 : i32
    %c0_i32_1 = arith.constant 0 : i32
    return %c0_i32, %c0_i32_0 : i32, i32
  }
  func.func @transform_4(%arg0: i32) -> (i32, i32) {
    %c0_i32 = arith.constant 0 : i32
    %c0_i32_0 = arith.constant 0 : i32
    %c0_i32_1 = arith.constant 0 : i32
    return %c0_i32, %c0_i32_0 : i32, i32
  }
  func.func @transform_5(%arg0: i32) -> (i32, i32) {
    %c0_i32 = arith.constant 0 : i32
    %c0_i32_0 = arith.constant 0 : i32
    %c0_i32_1 = arith.constant 0 : i32
    return %c0_i32, %c0_i32_0 : i32, i32
  }
  func.func @transform_6(%arg0: i32) -> (i32, i32) {
    %c0_i32 = arith.constant 0 : i32
    %c0_i32_0 = arith.constant 0 : i32
    %c0_i32_1 = arith.constant 0 : i32
    return %c0_i32, %c0_i32_0 : i32, i32
  }
  func.func @transform_7(%arg0: i32) -> (i32, i32) {
    %c0_i32 = arith.constant 0 : i32
    %c0_i32_0 = arith.constant 0 : i32
    %c0_i32_1 = arith.constant 0 : i32
    return %c0_i32, %c0_i32_0 : i32, i32
  }
  func.func @transform_8(%arg0: i32) -> (i32, i32) {
    %c0_i32 = arith.constant 0 : i32
    %c0_i32_0 = arith.constant 0 : i32
    %c0_i32_1 = arith.constant 0 : i32
    return %c0_i32, %c0_i32_0 : i32, i32
  }
  func.func @transform_9(%arg0: i32) -> (i32, i32) {
    %c0_i32 = arith.constant 0 : i32
    %c0_i32_0 = arith.constant 0 : i32
    return %arg0, %c0_i32 : i32, i32
  }
}

</mosaic_0001>

<llo_original>
// kernel: discriminator_forward.1
$region0: #{discriminator_forward.1}
  #allocation0 [shape = 'u32[]', space=smem, size = 0x4, offset = 0x4, fixed_abs, tag = 'smem constant byte address 0x4 - core index']
  #allocation1 [shape = 'u32[144,128]{1,0:T(1,128)}', space=vmem, size = 0x12000, scoped, tag = 'internal scratch']
  #allocation2 [shape = 'f32[1,1]{1,0:T(1,128)S(1)}', space=vmem, size = 0x200, scoped, tag = 'scoped memory for discriminator_forward.1']
  %s0 = inlined_call_operand.vmem [shape: bf16[16,896], index: 0, kind: input, shape index: {}]
  %s1 = inlined_call_operand.vmem [shape: bf16[896,1024], index: 1, kind: input, shape index: {}]
  %s2 = inlined_call_operand.vmem [shape: f32[1,1024], index: 2, kind: input, shape index: {}]
  %s3 = inlined_call_operand.vmem [shape: bf16[1024,512], index: 3, kind: input, shape index: {}]
  %s4 = inlined_call_operand.vmem [shape: f32[1,512], index: 4, kind: input, shape index: {}]
  %s5 = inlined_call_operand.vmem [shape: bf16[512,256], index: 5, kind: input, shape index: {}]
  %s6 = inlined_call_operand.vmem [shape: f32[1,256], index: 6, kind: input, shape index: {}]
  %s7 = inlined_call_operand.vmem [shape: f32[1,256], index: 7, kind: input, shape index: {}]
  %s8 = inlined_call_operand.<no memory space> [shape: f32[1,1], index: 8, kind: input, shape index: {}]
  %s9 = inlined_call_operand.vmem [shape: f32[16,1], index: 9, kind: output, shape index: {}]
  %s10 = sld [smem:[#allocation0]]
  $region46: #{discriminator_forward.1} parent=0
    _
  %s12 = ssub.s32 1, %s10
  %s13 = scalar_select 0, %s12, %s10
  %v14 = vstv %s8
  %15 = vst [vmem:[#allocation2] sm:$0x1] %v14
  // Predicated region
  $region2: #{discriminator_forward.1} parent=0 // pred_check
    _
  $region3: #{discriminator_forward.1} parent=0 // pred_check_branch
    %17 = sbr.rel (0) target = $region5
  $region4: #{discriminator_forward.1} parent=0 // pred_region
    _
  $region5: #{discriminator_forward.1} parent=0 // pred_fallthru
    _
  // Predicated region
  $region6: #{discriminator_forward.1} parent=0 // pred_check
    _
  $region7: #{discriminator_forward.1} parent=0 // pred_check_branch
    %19 = sbr.rel (0) target = $region9
  $region8: #{discriminator_forward.1} parent=0 // pred_region
    _
  $region9: #{discriminator_forward.1} parent=0 // pred_fallthru
    _
  // Predicated region
  $region10: #{discriminator_forward.1} parent=0 // pred_check
    _
  $region11: #{discriminator_forward.1} parent=0 // pred_check_branch
    %21 = sbr.rel (0) target = $region13
  $region12: #{discriminator_forward.1} parent=0 // pred_region
    _
  $region13: #{discriminator_forward.1} parent=0 // pred_fallthru
    _
  // Predicated region
  $region14: #{discriminator_forward.1} parent=0 // pred_check
    _
  $region15: #{discriminator_forward.1} parent=0 // pred_check_branch
    %23 = sbr.rel (0) target = $region17
  $region16: #{discriminator_forward.1} parent=0 // pred_region
    _
  $region17: #{discriminator_forward.1} parent=0 // pred_fallthru
    _
  // Predicated region
  $region18: #{discriminator_forward.1} parent=0 // pred_check
    _
  $region19: #{discriminator_forward.1} parent=0 // pred_check_branch
    %25 = sbr.rel (0) target = $region21
  $region20: #{discriminator_forward.1} parent=0 // pred_region
    _
  $region21: #{discriminator_forward.1} parent=0 // pred_fallthru
    _
  // Predicated region
  $region22: #{discriminator_forward.1} parent=0 // pred_check
    _
  $region23: #{discriminator_forward.1} parent=0 // pred_check_branch
    %27 = sbr.rel (0) target = $region25
  $region24: #{discriminator_forward.1} parent=0 // pred_region
    _
  $region25: #{discriminator_forward.1} parent=0 // pred_fallthru
    _
  // Predicated region
  $region26: #{discriminator_forward.1} parent=0 // pred_check
    _
  $region27: #{discriminator_forward.1} parent=0 // pred_check_branch
    %29 = sbr.rel (0) target = $region29
  $region28: #{discriminator_forward.1} parent=0 // pred_region
    _
  $region29: #{discriminator_forward.1} parent=0 // pred_fallthru
    _
  // Predicated region
  $region30: #{discriminator_forward.1} parent=0 // pred_check
    _
  $region31: #{discriminator_forward.1} parent=0 // pred_check_branch
    %31 = sbr.rel (0) target = $region33
  $region32: #{discriminator_forward.1} parent=0 // pred_region
    _
  $region33: #{discriminator_forward.1} parent=0 // pred_fallthru
    _
  // Predicated region
  $region34: #{discriminator_forward.1} parent=0 // pred_check
    _
  $region35: #{discriminator_forward.1} parent=0 // pred_check_branch
    %33 = sbr.rel (0) target = $region37
  $region36: #{discriminator_forward.1} parent=0 // pred_region
    _
  $region37: #{discriminator_forward.1} parent=0 // pred_fallthru
    _
  %v35 = vld [vmem:[%s0] sm:$0xff]
  %v36 = vld [vmem:[%s0 + $0x8] sm:$0xff]
  %v37 = vld [vmem:[%s0 + $0x10] sm:$0xff]
  %v38 = vld [vmem:[%s0 + $0x18] sm:$0xf]
  %v39 = vld [vmem:[%s0 + $0x1c] sm:$0xff]
  %v40 = vld [vmem:[%s0 + $0x24] sm:$0xff]
  %v41 = vld [vmem:[%s0 + $0x2c] sm:$0xff]
  %v42 = vld [vmem:[%s0 + $0x34] sm:$0xf]
  %v43 = vld [vmem:[%s1] sm:$0xff]
  %v44 = vld [vmem:[%s1 + $0x8] sm:$0xff]
  %v45 = vld [vmem:[%s1 + $0x10] sm:$0xff]
  %v46 = vld [vmem:[%s1 + $0x18] sm:$0xff]
  %v47 = vld [vmem:[%s1 + $0x20] sm:$0xff]
  %v48 = vld [vmem:[%s1 + $0x28] sm:$0xff]
  %v49 = vld [vmem:[%s1 + $0x30] sm:$0xff]
  %v50 = vld [vmem:[%s1 + $0x38] sm:$0xff]
  %v51 = vld [vmem:[%s1 + $0x40] sm:$0xff]
  %v52 = vld [vmem:[%s1 + $0x48] sm:$0xff]
  %v53 = vld [vmem:[%s1 + $0x50] sm:$0xff]
  %v54 = vld [vmem:[%s1 + $0x58] sm:$0xff]
  %v55 = vld [vmem:[%s1 + $0x60] sm:$0xff]
  %v56 = vld [vmem:[%s1 + $0x68] sm:$0xff]
  %v57 = vld [vmem:[%s1 + $0x70] sm:$0xff]
  %v58 = vld [vmem:[%s1 + $0x78] sm:$0xff]
  %v59 = vld [vmem:[%s1 + $0x80] sm:$0xff]
  %v60 = vld [vmem:[%s1 + $0x88] sm:$0xff]
  %v61 = vld [vmem:[%s1 + $0x90] sm:$0xff]
  %v62 = vld [vmem:[%s1 + $0x98] sm:$0xff]
  %v63 = vld [vmem:[%s1 + $0xa0] sm:$0xff]
  %v64 = vld [vmem:[%s1 + $0xa8] sm:$0xff]
  %v65 = vld [vmem:[%s1 + $0xb0] sm:$0xff]
  %v66 = vld [vmem:[%s1 + $0xb8] sm:$0xff]
  %v67 = vld [vmem:[%s1 + $0xc0] sm:$0xff]
  %v68 = vld [vmem:[%s1 + $0xc8] sm:$0xff]
  %v69 = vld [vmem:[%s1 + $0xd0] sm:$0xff]
  %v70 = vld [vmem:[%s1 + $0xd8] sm:$0xff]
  %v71 = vld [vmem:[%s1 + $0xe0] sm:$0xff]
  %v72 = vld [vmem:[%s1 + $0xe8] sm:$0xff]
  %v73 = vld [vmem:[%s1 + $0xf0] sm:$0xff]
  %v74 = vld [vmem:[%s1 + $0xf8] sm:$0xff]
  %v75 = vld [vmem:[%s1 + $0x100] sm:$0xff]
  %v76 = vld [vmem:[%s1 + $0x108] sm:$0xff]
  %v77 = vld [vmem:[%s1 + $0x110] sm:$0xff]
  %v78 = vld [vmem:[%s1 + $0x118] sm:$0xff]
  %v79 = vld [vmem:[%s1 + $0x120] sm:$0xff]
  %v80 = vld [vmem:[%s1 + $0x128] sm:$0xff]
  %v81 = vld [vmem:[%s1 + $0x130] sm:$0xff]
  %v82 = vld [vmem:[%s1 + $0x138] sm:$0xff]
  %v83 = vld [vmem:[%s1 + $0x140] sm:$0xff]
  %v84 = vld [vmem:[%s1 + $0x148] sm:$0xff]
  %v85 = vld [vmem:[%s1 + $0x150] sm:$0xff]
  %v86 = vld [vmem:[%s1 + $0x158] sm:$0xff]
  %v87 = vld [vmem:[%s1 + $0x160] sm:$0xff]
  %v88 = vld [vmem:[%s1 + $0x168] sm:$0xff]
  %v89 = vld [vmem:[%s1 + $0x170] sm:$0xff]
  %v90 = vld [vmem:[%s1 + $0x178] sm:$0xff]
  %v91 = vld [vmem:[%s1 + $0x180] sm:$0xff]
  %v92 = vld [vmem:[%s1 + $0x188] sm:$0xff]
  %v93 = vld [vmem:[%s1 + $0x190] sm:$0xff]
  %v94 = vld [vmem:[%s1 + $0x198] sm:$0xff]
  %v95 = vld [vmem:[%s1 + $0x1a0] sm:$0xff]
  %v96 = vld [vmem:[%s1 + $0x1a8] sm:$0xff]
  %v97 = vld [vmem:[%s1 + $0x1b0] sm:$0xff]
  %v98 = vld [vmem:[%s1 + $0x1b8] sm:$0xff]
  %v99 = vld [vmem:[%s1 + $0x1c0] sm:$0xff]
  %v100 = vld [vmem:[%s1 + $0x1c8] sm:$0xff]
  %v101 = vld [vmem:[%s1 + $0x1d0] sm:$0xff]
  %v102 = vld [vmem:[%s1 + $0x1d8] sm:$0xff]
  %v103 = vld [vmem:[%s1 + $0x1e0] sm:$0xff]
  %v104 = vld [vmem:[%s1 + $0x1e8] sm:$0xff]
  %v105 = vld [vmem:[%s1 + $0x1f0] sm:$0xff]
  %v106 = vld [vmem:[%s1 + $0x1f8] sm:$0xff]
  %v107 = vld [vmem:[%s1 + $0x200] sm:$0xff]
  %v108 = vld [vmem:[%s1 + $0x208] sm:$0xff]
  %v109 = vld [vmem:[%s1 + $0x210] sm:$0xff]
  %v110 = vld [vmem:[%s1 + $0x218] sm:$0xff]
  %v111 = vld [vmem:[%s1 + $0x220] sm:$0xff]
  %v112 = vld [vmem:[%s1 + $0x228] sm:$0xff]
  %v113 = vld [vmem:[%s1 + $0x230] sm:$0xff]
  %v114 = vld [vmem:[%s1 + $0x238] sm:$0xff]
  %v115 = vld [vmem:[%s1 + $0x240] sm:$0xff]
  %v116 = vld [vmem:[%s1 + $0x248] sm:$0xff]
  %v117 = vld [vmem:[%s1 + $0x250] sm:$0xff]
  %v118 = vld [vmem:[%s1 + $0x258] sm:$0xff]
  %v119 = vld [vmem:[%s1 + $0x260] sm:$0xff]
  %v120 = vld [vmem:[%s1 + $0x268] sm:$0xff]
  %v121 = vld [vmem:[%s1 + $0x270] sm:$0xff]
  %v122 = vld [vmem:[%s1 + $0x278] sm:$0xff]
  %v123 = vld [vmem:[%s1 + $0x280] sm:$0xff]
  %v124 = vld [vmem:[%s1 + $0x288] sm:$0xff]
  %v125 = vld [vmem:[%s1 + $0x290] sm:$0xff]
  %v126 = vld [vmem:[%s1 + $0x298] sm:$0xff]
  %v127 = vld [vmem:[%s1 + $0x2a0] sm:$0xff]
  %v128 = vld [vmem:[%s1 + $0x2a8] sm:$0xff]
  %v129 = vld [vmem:[%s1 + $0x2b0] sm:$0xff]
  %v130 = vld [vmem:[%s1 + $0x2b8] sm:$0xff]
  %v131 = vld [vmem:[%s1 + $0x2c0] sm:$0xff]
  %v132 = vld [vmem:[%s1 + $0x2c8] sm:$0xff]
  %v133 = vld [vmem:[%s1 + $0x2d0] sm:$0xff]
  %v134 = vld [vmem:[%s1 + $0x2d8] sm:$0xff]
  %v135 = vld [vmem:[%s1 + $0x2e0] sm:$0xff]
  %v136 = vld [vmem:[%s1 + $0x2e8] sm:$0xff]
  %v137 = vld [vmem:[%s1 + $0x2f0] sm:$0xff]
  %v138 = vld [vmem:[%s1 + $0x2f8] sm:$0xff]
  %v139 = vld [vmem:[%s1 + $0x300] sm:$0xff]
  %v140 = vld [vmem:[%s1 + $0x308] sm:$0xff]
  %v141 = vld [vmem:[%s1 + $0x310] sm:$0xff]
  %v142 = vld [vmem:[%s1 + $0x318] sm:$0xff]
  %v143 = vld [vmem:[%s1 + $0x320] sm:$0xff]
  %v144 = vld [vmem:[%s1 + $0x328] sm:$0xff]
  %v145 = vld [vmem:[%s1 + $0x330] sm:$0xff]
  %v146 = vld [vmem:[%s1 + $0x338] sm:$0xff]
  %v147 = vld [vmem:[%s1 + $0x340] sm:$0xff]
  %v148 = vld [vmem:[%s1 + $0x348] sm:$0xff]
  %v149 = vld [vmem:[%s1 + $0x350] sm:$0xff]
  %v150 = vld [vmem:[%s1 + $0x358] sm:$0xff]
  %v151 = vld [vmem:[%s1 + $0x360] sm:$0xff]
  %v152 = vld [vmem:[%s1 + $0x368] sm:$0xff]
  %v153 = vld [vmem:[%s1 + $0x370] sm:$0xff]
  %v154 = vld [vmem:[%s1 + $0x378] sm:$0xff]
  %v155 = vld [vmem:[%s1 + $0x380] sm:$0xff]
  %v156 = vld [vmem:[%s1 + $0x388] sm:$0xff]
  %v157 = vld [vmem:[%s1 + $0x390] sm:$0xff]
  %v158 = vld [vmem:[%s1 + $0x398] sm:$0xff]
  %v159 = vld [vmem:[%s1 + $0x3a0] sm:$0xff]
  %v160 = vld [vmem:[%s1 + $0x3a8] sm:$0xff]
  %v161 = vld [vmem:[%s1 + $0x3b0] sm:$0xff]
  %v162 = vld [vmem:[%s1 + $0x3b8] sm:$0xff]
  %v163 = vld [vmem:[%s1 + $0x3c0] sm:$0xff]
  %v164 = vld [vmem:[%s1 + $0x3c8] sm:$0xff]
  %v165 = vld [vmem:[%s1 + $0x3d0] sm:$0xff]
  %v166 = vld [vmem:[%s1 + $0x3d8] sm:$0xff]
  %v167 = vld [vmem:[%s1 + $0x3e0] sm:$0xff]
  %v168 = vld [vmem:[%s1 + $0x3e8] sm:$0xff]
  %v169 = vld [vmem:[%s1 + $0x3f0] sm:$0xff]
  %v170 = vld [vmem:[%s1 + $0x3f8] sm:$0xff]
  %v171 = vld [vmem:[%s1 + $0x400] sm:$0xff]
  %v172 = vld [vmem:[%s1 + $0x408] sm:$0xff]
  %v173 = vld [vmem:[%s1 + $0x410] sm:$0xff]
  %v174 = vld [vmem:[%s1 + $0x418] sm:$0xff]
  %v175 = vld [vmem:[%s1 + $0x420] sm:$0xff]
  %v176 = vld [vmem:[%s1 + $0x428] sm:$0xff]
  %v177 = vld [vmem:[%s1 + $0x430] sm:$0xff]
  %v178 = vld [vmem:[%s1 + $0x438] sm:$0xff]
  %v179 = vld [vmem:[%s1 + $0x440] sm:$0xff]
  %v180 = vld [vmem:[%s1 + $0x448] sm:$0xff]
  %v181 = vld [vmem:[%s1 + $0x450] sm:$0xff]
  %v182 = vld [vmem:[%s1 + $0x458] sm:$0xff]
  %v183 = vld [vmem:[%s1 + $0x460] sm:$0xff]
  %v184 = vld [vmem:[%s1 + $0x468] sm:$0xff]
  %v185 = vld [vmem:[%s1 + $0x470] sm:$0xff]
  %v186 = vld [vmem:[%s1 + $0x478] sm:$0xff]
  %v187 = vld [vmem:[%s1 + $0x480] sm:$0xff]
  %v188 = vld [vmem:[%s1 + $0x488] sm:$0xff]
  %v189 = vld [vmem:[%s1 + $0x490] sm:$0xff]
  %v190 = vld [vmem:[%s1 + $0x498] sm:$0xff]
  %v191 = vld [vmem:[%s1 + $0x4a0] sm:$0xff]
  %v192 = vld [vmem:[%s1 + $0x4a8] sm:$0xff]
  %v193 = vld [vmem:[%s1 + $0x4b0] sm:$0xff]
  %v194 = vld [vmem:[%s1 + $0x4b8] sm:$0xff]
  %v195 = vld [vmem:[%s1 + $0x4c0] sm:$0xff]
  %v196 = vld [vmem:[%s1 + $0x4c8] sm:$0xff]
  %v197 = vld [vmem:[%s1 + $0x4d0] sm:$0xff]
  %v198 = vld [vmem:[%s1 + $0x4d8] sm:$0xff]
  %v199 = vld [vmem:[%s1 + $0x4e0] sm:$0xff]
  %v200 = vld [vmem:[%s1 + $0x4e8] sm:$0xff]
  %v201 = vld [vmem:[%s1 + $0x4f0] sm:$0xff]
  %v202 = vld [vmem:[%s1 + $0x4f8] sm:$0xff]
  %v203 = vld [vmem:[%s1 + $0x500] sm:$0xff]
  %v204 = vld [vmem:[%s1 + $0x508] sm:$0xff]
  %v205 = vld [vmem:[%s1 + $0x510] sm:$0xff]
  %v206 = vld [vmem:[%s1 + $0x518] sm:$0xff]
  %v207 = vld [vmem:[%s1 + $0x520] sm:$0xff]
  %v208 = vld [vmem:[%s1 + $0x528] sm:$0xff]
  %v209 = vld [vmem:[%s1 + $0x530] sm:$0xff]
  %v210 = vld [vmem:[%s1 + $0x538] sm:$0xff]
  %v211 = vld [vmem:[%s1 + $0x540] sm:$0xff]
  %v212 = vld [vmem:[%s1 + $0x548] sm:$0xff]
  %v213 = vld [vmem:[%s1 + $0x550] sm:$0xff]
  %v214 = vld [vmem:[%s1 + $0x558] sm:$0xff]
  %v215 = vld [vmem:[%s1 + $0x560] sm:$0xff]
  %v216 = vld [vmem:[%s1 + $0x568] sm:$0xff]
  %v217 = vld [vmem:[%s1 + $0x570] sm:$0xff]
  %v218 = vld [vmem:[%s1 + $0x578] sm:$0xff]
  %v219 = vld [vmem:[%s1 + $0x580] sm:$0xff]
  %v220 = vld [vmem:[%s1 + $0x588] sm:$0xff]
  %v221 = vld [vmem:[%s1 + $0x590] sm:$0xff]
  %v222 = vld [vmem:[%s1 + $0x598] sm:$0xff]
  %v223 = vld [vmem:[%s1 + $0x5a0] sm:$0xff]
  %v224 = vld [vmem:[%s1 + $0x5a8] sm:$0xff]
  %v225 = vld [vmem:[%s1 + $0x5b0] sm:$0xff]
  %v226 = vld [vmem:[%s1 + $0x5b8] sm:$0xff]
  %v227 = vld [vmem:[%s1 + $0x5c0] sm:$0xff]
  %v228 = vld [vmem:[%s1 + $0x5c8] sm:$0xff]
  %v229 = vld [vmem:[%s1 + $0x5d0] sm:$0xff]
  %v230 = vld [vmem:[%s1 + $0x5d8] sm:$0xff]
  %v231 = vld [vmem:[%s1 + $0x5e0] sm:$0xff]
  %v232 = vld [vmem:[%s1 + $0x5e8] sm:$0xff]
  %v233 = vld [vmem:[%s1 + $0x5f0] sm:$0xff]
  %v234 = vld [vmem:[%s1 + $0x5f8] sm:$0xff]
  %v235 = vld [vmem:[%s1 + $0x600] sm:$0xff]
  %v236 = vld [vmem:[%s1 + $0x608] sm:$0xff]
  %v237 = vld [vmem:[%s1 + $0x610] sm:$0xff]
  %v238 = vld [vmem:[%s1 + $0x618] sm:$0xff]
  %v239 = vld [vmem:[%s1 + $0x620] sm:$0xff]
  %v240 = vld [vmem:[%s1 + $0x628] sm:$0xff]
  %v241 = vld [vmem:[%s1 + $0x630] sm:$0xff]
  %v242 = vld [vmem:[%s1 + $0x638] sm:$0xff]
  %v243 = vld [vmem:[%s1 + $0x640] sm:$0xff]
  %v244 = vld [vmem:[%s1 + $0x648] sm:$0xff]
  %v245 = vld [vmem:[%s1 + $0x650] sm:$0xff]
  %v246 = vld [vmem:[%s1 + $0x658] sm:$0xff]
  %v247 = vld [vmem:[%s1 + $0x660] sm:$0xff]
  %v248 = vld [vmem:[%s1 + $0x668] sm:$0xff]
  %v249 = vld [vmem:[%s1 + $0x670] sm:$0xff]
  %v250 = vld [vmem:[%s1 + $0x678] sm:$0xff]
  %v251 = vld [vmem:[%s1 + $0x680] sm:$0xff]
  %v252 = vld [vmem:[%s1 + $0x688] sm:$0xff]
  %v253 = vld [vmem:[%s1 + $0x690] sm:$0xff]
  %v254 = vld [vmem:[%s1 + $0x698] sm:$0xff]
  %v255 = vld [vmem:[%s1 + $0x6a0] sm:$0xff]
  %v256 = vld [vmem:[%s1 + $0x6a8] sm:$0xff]
  %v257 = vld [vmem:[%s1 + $0x6b0] sm:$0xff]
  %v258 = vld [vmem:[%s1 + $0x6b8] sm:$0xff]
  %v259 = vld [vmem:[%s1 + $0x6c0] sm:$0xff]
  %v260 = vld [vmem:[%s1 + $0x6c8] sm:$0xff]
  %v261 = vld [vmem:[%s1 + $0x6d0] sm:$0xff]
  %v262 = vld [vmem:[%s1 + $0x6d8] sm:$0xff]
  %v263 = vld [vmem:[%s1 + $0x6e0] sm:$0xff]
  %v264 = vld [vmem:[%s1 + $0x6e8] sm:$0xff]
  %v265 = vld [vmem:[%s1 + $0x6f0] sm:$0xff]
  %v266 = vld [vmem:[%s1 + $0x6f8] sm:$0xff]
  %v267 = vld [vmem:[%s1 + $0x700] sm:$0xff]
  %v268 = vld [vmem:[%s1 + $0x708] sm:$0xff]
  %v269 = vld [vmem:[%s1 + $0x710] sm:$0xff]
  %v270 = vld [vmem:[%s1 + $0x718] sm:$0xff]
  %v271 = vld [vmem:[%s1 + $0x720] sm:$0xff]
  %v272 = vld [vmem:[%s1 + $0x728] sm:$0xff]
  %v273 = vld [vmem:[%s1 + $0x730] sm:$0xff]
  %v274 = vld [vmem:[%s1 + $0x738] sm:$0xff]
  %v275 = vld [vmem:[%s1 + $0x740] sm:$0xff]
  %v276 = vld [vmem:[%s1 + $0x748] sm:$0xff]
  %v277 = vld [vmem:[%s1 + $0x750] sm:$0xff]
  %v278 = vld [vmem:[%s1 + $0x758] sm:$0xff]
  %v279 = vld [vmem:[%s1 + $0x760] sm:$0xff]
  %v280 = vld [vmem:[%s1 + $0x768] sm:$0xff]
  %v281 = vld [vmem:[%s1 + $0x770] sm:$0xff]
  %v282 = vld [vmem:[%s1 + $0x778] sm:$0xff]
  %v283 = vld [vmem:[%s1 + $0x780] sm:$0xff]
  %v284 = vld [vmem:[%s1 + $0x788] sm:$0xff]
  %v285 = vld [vmem:[%s1 + $0x790] sm:$0xff]
  %v286 = vld [vmem:[%s1 + $0x798] sm:$0xff]
  %v287 = vld [vmem:[%s1 + $0x7a0] sm:$0xff]
  %v288 = vld [vmem:[%s1 + $0x7a8] sm:$0xff]
  %v289 = vld [vmem:[%s1 + $0x7b0] sm:$0xff]
  %v290 = vld [vmem:[%s1 + $0x7b8] sm:$0xff]
  %v291 = vld [vmem:[%s1 + $0x7c0] sm:$0xff]
  %v292 = vld [vmem:[%s1 + $0x7c8] sm:$0xff]
  %v293 = vld [vmem:[%s1 + $0x7d0] sm:$0xff]
  %v294 = vld [vmem:[%s1 + $0x7d8] sm:$0xff]
  %v295 = vld [vmem:[%s1 + $0x7e0] sm:$0xff]
  %v296 = vld [vmem:[%s1 + $0x7e8] sm:$0xff]
  %v297 = vld [vmem:[%s1 + $0x7f0] sm:$0xff]
  %v298 = vld [vmem:[%s1 + $0x7f8] sm:$0xff]
  %v299 = vld [vmem:[%s1 + $0x800] sm:$0xff]
  %v300 = vld [vmem:[%s1 + $0x808] sm:$0xff]
  %v301 = vld [vmem:[%s1 + $0x810] sm:$0xff]
  %v302 = vld [vmem:[%s1 + $0x818] sm:$0xff]
  %v303 = vld [vmem:[%s1 + $0x820] sm:$0xff]
  %v304 = vld [vmem:[%s1 + $0x828] sm:$0xff]
  %v305 = vld [vmem:[%s1 + $0x830] sm:$0xff]
  %v306 = vld [vmem:[%s1 + $0x838] sm:$0xff]
  %v307 = vld [vmem:[%s1 + $0x840] sm:$0xff]
  %v308 = vld [vmem:[%s1 + $0x848] sm:$0xff]
  %v309 = vld [vmem:[%s1 + $0x850] sm:$0xff]
  %v310 = vld [vmem:[%s1 + $0x858] sm:$0xff]
  %v311 = vld [vmem:[%s1 + $0x860] sm:$0xff]
  %v312 = vld [vmem:[%s1 + $0x868] sm:$0xff]
  %v313 = vld [vmem:[%s1 + $0x870] sm:$0xff]
  %v314 = vld [vmem:[%s1 + $0x878] sm:$0xff]
  %v315 = vld [vmem:[%s1 + $0x880] sm:$0xff]
  %v316 = vld [vmem:[%s1 + $0x888] sm:$0xff]
  %v317 = vld [vmem:[%s1 + $0x890] sm:$0xff]
  %v318 = vld [vmem:[%s1 + $0x898] sm:$0xff]
  %v319 = vld [vmem:[%s1 + $0x8a0] sm:$0xff]
  %v320 = vld [vmem:[%s1 + $0x8a8] sm:$0xff]
  %v321 = vld [vmem:[%s1 + $0x8b0] sm:$0xff]
  %v322 = vld [vmem:[%s1 + $0x8b8] sm:$0xff]
  %v323 = vld [vmem:[%s1 + $0x8c0] sm:$0xff]
  %v324 = vld [vmem:[%s1 + $0x8c8] sm:$0xff]
  %v325 = vld [vmem:[%s1 + $0x8d0] sm:$0xff]
  %v326 = vld [vmem:[%s1 + $0x8d8] sm:$0xff]
  %v327 = vld [vmem:[%s1 + $0x8e0] sm:$0xff]
  %v328 = vld [vmem:[%s1 + $0x8e8] sm:$0xff]
  %v329 = vld [vmem:[%s1 + $0x8f0] sm:$0xff]
  %v330 = vld [vmem:[%s1 + $0x8f8] sm:$0xff]
  %v331 = vld [vmem:[%s1 + $0x900] sm:$0xff]
  %v332 = vld [vmem:[%s1 + $0x908] sm:$0xff]
  %v333 = vld [vmem:[%s1 + $0x910] sm:$0xff]
  %v334 = vld [vmem:[%s1 + $0x918] sm:$0xff]
  %v335 = vld [vmem:[%s1 + $0x920] sm:$0xff]
  %v336 = vld [vmem:[%s1 + $0x928] sm:$0xff]
  %v337 = vld [vmem:[%s1 + $0x930] sm:$0xff]
  %v338 = vld [vmem:[%s1 + $0x938] sm:$0xff]
  %v339 = vld [vmem:[%s1 + $0x940] sm:$0xff]
  %v340 = vld [vmem:[%s1 + $0x948] sm:$0xff]
  %v341 = vld [vmem:[%s1 + $0x950] sm:$0xff]
  %v342 = vld [vmem:[%s1 + $0x958] sm:$0xff]
  %v343 = vld [vmem:[%s1 + $0x960] sm:$0xff]
  %v344 = vld [vmem:[%s1 + $0x968] sm:$0xff]
  %v345 = vld [vmem:[%s1 + $0x970] sm:$0xff]
  %v346 = vld [vmem:[%s1 + $0x978] sm:$0xff]
  %v347 = vld [vmem:[%s1 + $0x980] sm:$0xff]
  %v348 = vld [vmem:[%s1 + $0x988] sm:$0xff]
  %v349 = vld [vmem:[%s1 + $0x990] sm:$0xff]
  %v350 = vld [vmem:[%s1 + $0x998] sm:$0xff]
  %v351 = vld [vmem:[%s1 + $0x9a0] sm:$0xff]
  %v352 = vld [vmem:[%s1 + $0x9a8] sm:$0xff]
  %v353 = vld [vmem:[%s1 + $0x9b0] sm:$0xff]
  %v354 = vld [vmem:[%s1 + $0x9b8] sm:$0xff]
  %v355 = vld [vmem:[%s1 + $0x9c0] sm:$0xff]
  %v356 = vld [vmem:[%s1 + $0x9c8] sm:$0xff]
  %v357 = vld [vmem:[%s1 + $0x9d0] sm:$0xff]
  %v358 = vld [vmem:[%s1 + $0x9d8] sm:$0xff]
  %v359 = vld [vmem:[%s1 + $0x9e0] sm:$0xff]
  %v360 = vld [vmem:[%s1 + $0x9e8] sm:$0xff]
  %v361 = vld [vmem:[%s1 + $0x9f0] sm:$0xff]
  %v362 = vld [vmem:[%s1 + $0x9f8] sm:$0xff]
  %v363 = vld [vmem:[%s1 + $0xa00] sm:$0xff]
  %v364 = vld [vmem:[%s1 + $0xa08] sm:$0xff]
  %v365 = vld [vmem:[%s1 + $0xa10] sm:$0xff]
  %v366 = vld [vmem:[%s1 + $0xa18] sm:$0xff]
  %v367 = vld [vmem:[%s1 + $0xa20] sm:$0xff]
  %v368 = vld [vmem:[%s1 + $0xa28] sm:$0xff]
  %v369 = vld [vmem:[%s1 + $0xa30] sm:$0xff]
  %v370 = vld [vmem:[%s1 + $0xa38] sm:$0xff]
  %v371 = vld [vmem:[%s1 + $0xa40] sm:$0xff]
  %v372 = vld [vmem:[%s1 + $0xa48] sm:$0xff]
  %v373 = vld [vmem:[%s1 + $0xa50] sm:$0xff]
  %v374 = vld [vmem:[%s1 + $0xa58] sm:$0xff]
  %v375 = vld [vmem:[%s1 + $0xa60] sm:$0xff]
  %v376 = vld [vmem:[%s1 + $0xa68] sm:$0xff]
  %v377 = vld [vmem:[%s1 + $0xa70] sm:$0xff]
  %v378 = vld [vmem:[%s1 + $0xa78] sm:$0xff]
  %v379 = vld [vmem:[%s1 + $0xa80] sm:$0xff]
  %v380 = vld [vmem:[%s1 + $0xa88] sm:$0xff]
  %v381 = vld [vmem:[%s1 + $0xa90] sm:$0xff]
  %v382 = vld [vmem:[%s1 + $0xa98] sm:$0xff]
  %v383 = vld [vmem:[%s1 + $0xaa0] sm:$0xff]
  %v384 = vld [vmem:[%s1 + $0xaa8] sm:$0xff]
  %v385 = vld [vmem:[%s1 + $0xab0] sm:$0xff]
  %v386 = vld [vmem:[%s1 + $0xab8] sm:$0xff]
  %v387 = vld [vmem:[%s1 + $0xac0] sm:$0xff]
  %v388 = vld [vmem:[%s1 + $0xac8] sm:$0xff]
  %v389 = vld [vmem:[%s1 + $0xad0] sm:$0xff]
  %v390 = vld [vmem:[%s1 + $0xad8] sm:$0xff]
  %v391 = vld [vmem:[%s1 + $0xae0] sm:$0xff]
  %v392 = vld [vmem:[%s1 + $0xae8] sm:$0xff]
  %v393 = vld [vmem:[%s1 + $0xaf0] sm:$0xff]
  %v394 = vld [vmem:[%s1 + $0xaf8] sm:$0xff]
  %v395 = vld [vmem:[%s1 + $0xb00] sm:$0xff]
  %v396 = vld [vmem:[%s1 + $0xb08] sm:$0xff]
  %v397 = vld [vmem:[%s1 + $0xb10] sm:$0xff]
  %v398 = vld [vmem:[%s1 + $0xb18] sm:$0xff]
  %v399 = vld [vmem:[%s1 + $0xb20] sm:$0xff]
  %v400 = vld [vmem:[%s1 + $0xb28] sm:$0xff]
  %v401 = vld [vmem:[%s1 + $0xb30] sm:$0xff]
  %v402 = vld [vmem:[%s1 + $0xb38] sm:$0xff]
  %v403 = vld [vmem:[%s1 + $0xb40] sm:$0xff]
  %v404 = vld [vmem:[%s1 + $0xb48] sm:$0xff]
  %v405 = vld [vmem:[%s1 + $0xb50] sm:$0xff]
  %v406 = vld [vmem:[%s1 + $0xb58] sm:$0xff]
  %v407 = vld [vmem:[%s1 + $0xb60] sm:$0xff]
  %v408 = vld [vmem:[%s1 + $0xb68] sm:$0xff]
  %v409 = vld [vmem:[%s1 + $0xb70] sm:$0xff]
  %v410 = vld [vmem:[%s1 + $0xb78] sm:$0xff]
  %v411 = vld [vmem:[%s1 + $0xb80] sm:$0xff]
  %v412 = vld [vmem:[%s1 + $0xb88] sm:$0xff]
  %v413 = vld [vmem:[%s1 + $0xb90] sm:$0xff]
  %v414 = vld [vmem:[%s1 + $0xb98] sm:$0xff]
  %v415 = vld [vmem:[%s1 + $0xba0] sm:$0xff]
  %v416 = vld [vmem:[%s1 + $0xba8] sm:$0xff]
  %v417 = vld [vmem:[%s1 + $0xbb0] sm:$0xff]
  %v418 = vld [vmem:[%s1 + $0xbb8] sm:$0xff]
  %v419 = vld [vmem:[%s1 + $0xbc0] sm:$0xff]
  %v420 = vld [vmem:[%s1 + $0xbc8] sm:$0xff]
  %v421 = vld [vmem:[%s1 + $0xbd0] sm:$0xff]
  %v422 = vld [vmem:[%s1 + $0xbd8] sm:$0xff]
  %v423 = vld [vmem:[%s1 + $0xbe0] sm:$0xff]
  %v424 = vld [vmem:[%s1 + $0xbe8] sm:$0xff]
  %v425 = vld [vmem:[%s1 + $0xbf0] sm:$0xff]
  %v426 = vld [vmem:[%s1 + $0xbf8] sm:$0xff]
  %v427 = vld [vmem:[%s1 + $0xc00] sm:$0xff]
  %v428 = vld [vmem:[%s1 + $0xc08] sm:$0xff]
  %v429 = vld [vmem:[%s1 + $0xc10] sm:$0xff]
  %v430 = vld [vmem:[%s1 + $0xc18] sm:$0xff]
  %v431 = vld [vmem:[%s1 + $0xc20] sm:$0xff]
  %v432 = vld [vmem:[%s1 + $0xc28] sm:$0xff]
  %v433 = vld [vmem:[%s1 + $0xc30] sm:$0xff]
  %v434 = vld [vmem:[%s1 + $0xc38] sm:$0xff]
  %v435 = vld [vmem:[%s1 + $0xc40] sm:$0xff]
  %v436 = vld [vmem:[%s1 + $0xc48] sm:$0xff]
  %v437 = vld [vmem:[%s1 + $0xc50] sm:$0xff]
  %v438 = vld [vmem:[%s1 + $0xc58] sm:$0xff]
  %v439 = vld [vmem:[%s1 + $0xc60] sm:$0xff]
  %v440 = vld [vmem:[%s1 + $0xc68] sm:$0xff]
  %v441 = vld [vmem:[%s1 + $0xc70] sm:$0xff]
  %v442 = vld [vmem:[%s1 + $0xc78] sm:$0xff]
  %v443 = vld [vmem:[%s1 + $0xc80] sm:$0xff]
  %v444 = vld [vmem:[%s1 + $0xc88] sm:$0xff]
  %v445 = vld [vmem:[%s1 + $0xc90] sm:$0xff]
  %v446 = vld [vmem:[%s1 + $0xc98] sm:$0xff]
  %v447 = vld [vmem:[%s1 + $0xca0] sm:$0xff]
  %v448 = vld [vmem:[%s1 + $0xca8] sm:$0xff]
  %v449 = vld [vmem:[%s1 + $0xcb0] sm:$0xff]
  %v450 = vld [vmem:[%s1 + $0xcb8] sm:$0xff]
  %v451 = vld [vmem:[%s1 + $0xcc0] sm:$0xff]
  %v452 = vld [vmem:[%s1 + $0xcc8] sm:$0xff]
  %v453 = vld [vmem:[%s1 + $0xcd0] sm:$0xff]
  %v454 = vld [vmem:[%s1 + $0xcd8] sm:$0xff]
  %v455 = vld [vmem:[%s1 + $0xce0] sm:$0xff]
  %v456 = vld [vmem:[%s1 + $0xce8] sm:$0xff]
  %v457 = vld [vmem:[%s1 + $0xcf0] sm:$0xff]
  %v458 = vld [vmem:[%s1 + $0xcf8] sm:$0xff]
  %v459 = vld [vmem:[%s1 + $0xd00] sm:$0xff]
  %v460 = vld [vmem:[%s1 + $0xd08] sm:$0xff]
  %v461 = vld [vmem:[%s1 + $0xd10] sm:$0xff]
  %v462 = vld [vmem:[%s1 + $0xd18] sm:$0xff]
  %v463 = vld [vmem:[%s1 + $0xd20] sm:$0xff]
  %v464 = vld [vmem:[%s1 + $0xd28] sm:$0xff]
  %v465 = vld [vmem:[%s1 + $0xd30] sm:$0xff]
  %v466 = vld [vmem:[%s1 + $0xd38] sm:$0xff]
  %v467 = vld [vmem:[%s1 + $0xd40] sm:$0xff]
  %v468 = vld [vmem:[%s1 + $0xd48] sm:$0xff]
  %v469 = vld [vmem:[%s1 + $0xd50] sm:$0xff]
  %v470 = vld [vmem:[%s1 + $0xd58] sm:$0xff]
  %v471 = vld [vmem:[%s1 + $0xd60] sm:$0xff]
  %v472 = vld [vmem:[%s1 + $0xd68] sm:$0xff]
  %v473 = vld [vmem:[%s1 + $0xd70] sm:$0xff]
  %v474 = vld [vmem:[%s1 + $0xd78] sm:$0xff]
  %v475 = vld [vmem:[%s1 + $0xd80] sm:$0xff]
  %v476 = vld [vmem:[%s1 + $0xd88] sm:$0xff]
  %v477 = vld [vmem:[%s1 + $0xd90] sm:$0xff]
  %v478 = vld [vmem:[%s1 + $0xd98] sm:$0xff]
  %v479 = vld [vmem:[%s1 + $0xda0] sm:$0xff]
  %v480 = vld [vmem:[%s1 + $0xda8] sm:$0xff]
  %v481 = vld [vmem:[%s1 + $0xdb0] sm:$0xff]
  %v482 = vld [vmem:[%s1 + $0xdb8] sm:$0xff]
  %v483 = vld [vmem:[%s1 + $0xdc0] sm:$0xff]
  %v484 = vld [vmem:[%s1 + $0xdc8] sm:$0xff]
  %v485 = vld [vmem:[%s1 + $0xdd0] sm:$0xff]
  %v486 = vld [vmem:[%s1 + $0xdd8] sm:$0xff]
  %v487 = vld [vmem:[%s1 + $0xde0] sm:$0xff]
  %v488 = vld [vmem:[%s1 + $0xde8] sm:$0xff]
  %v489 = vld [vmem:[%s1 + $0xdf0] sm:$0xff]
  %v490 = vld [vmem:[%s1 + $0xdf8] sm:$0xff]
  %v491 = vld [vmem:[%s2] sm:$0xff]
  %v493 = vlaneseq
  %v494 = vshrl.u32 %v493, 7
  %v495 = vsub.s32 0, %v494
  %v496 = vrot.slane %v491, %v495
  %v497 = vlaneseq
  %v498 = vshrl.u32 %v497, 7
  %v499 = vsub.s32 1, %v498
  %v500 = vrot.slane %v491, %v499
  %v501 = vlaneseq
  %v502 = vshrl.u32 %v501, 7
  %v503 = vsub.s32 2, %v502
  %v504 = vrot.slane %v491, %v503
  %v505 = vlaneseq
  %v506 = vshrl.u32 %v505, 7
  %v507 = vsub.s32 3, %v506
  %v508 = vrot.slane %v491, %v507
  %v509 = vlaneseq
  %v510 = vshrl.u32 %v509, 7
  %v511 = vsub.s32 4, %v510
  %v512 = vrot.slane %v491, %v511
  %v513 = vlaneseq
  %v514 = vshrl.u32 %v513, 7
  %v515 = vsub.s32 5, %v514
  %v516 = vrot.slane %v491, %v515
  %v517 = vlaneseq
  %v518 = vshrl.u32 %v517, 7
  %v519 = vsub.s32 6, %v518
  %v520 = vrot.slane %v491, %v519
  %v521 = vlaneseq
  %v522 = vshrl.u32 %v521, 7
  %v523 = vsub.s32 7, %v522
  %v524 = vrot.slane %v491, %v523
  %v541 = vunpack.c.l.b16 %v35
  %v542 = vunpack.c.h.b16 %v35
  %v543 = vunpack.c.l.b16 %v36
  %v544 = vunpack.c.h.b16 %v36
  %v545 = vunpack.c.l.b16 %v37
  %v546 = vunpack.c.h.b16 %v37
  %v547 = vunpack.c.l.b16 %v38
  %v548 = vunpack.c.l.b16 %v39
  %v549 = vunpack.c.h.b16 %v39
  %v550 = vunpack.c.l.b16 %v40
  %v551 = vunpack.c.h.b16 %v40
  %v552 = vunpack.c.l.b16 %v41
  %v553 = vunpack.c.h.b16 %v41
  %v554 = vunpack.c.l.b16 %v42
  %v555 = vpack.c.b16 %v548, %v541
  %v556 = vpack.c.b16 %v549, %v542
  %v557 = vpack.c.b16 %v550, %v543
  %v558 = vpack.c.b16 %v551, %v544
  %v559 = vpack.c.b16 %v552, %v545
  %v560 = vpack.c.b16 %v553, %v546
  %v561 = vpack.c.b16 %v554, %v547
  %v1017 = vunpack.c.l.b16 %v43
  %v1018 = vunpack.c.h.b16 %v43
  %v1019 = vunpack.c.l.b16 %v44
  %v1020 = vunpack.c.h.b16 %v44
  %v1021 = vunpack.c.l.b16 %v45
  %v1022 = vunpack.c.h.b16 %v45
  %v1023 = vunpack.c.l.b16 %v46
  %v1024 = vunpack.c.h.b16 %v46
  %v1025 = vunpack.c.l.b16 %v47
  %v1026 = vunpack.c.h.b16 %v47
  %v1027 = vunpack.c.l.b16 %v48
  %v1028 = vunpack.c.h.b16 %v48
  %v1029 = vunpack.c.l.b16 %v49
  %v1030 = vunpack.c.h.b16 %v49
  %v1031 = vunpack.c.l.b16 %v50
  %v1032 = vunpack.c.h.b16 %v50
  %v1033 = vunpack.c.l.b16 %v51
  %v1034 = vunpack.c.h.b16 %v51
  %v1035 = vunpack.c.l.b16 %v52
  %v1036 = vunpack.c.h.b16 %v52
  %v1037 = vunpack.c.l.b16 %v53
  %v1038 = vunpack.c.h.b16 %v53
  %v1039 = vunpack.c.l.b16 %v54
  %v1040 = vunpack.c.h.b16 %v54
  %v1041 = vunpack.c.l.b16 %v55
  %v1042 = vunpack.c.h.b16 %v55
  %v1043 = vunpack.c.l.b16 %v56
  %v1044 = vunpack.c.h.b16 %v56
  %v1045 = vunpack.c.l.b16 %v57
  %v1046 = vunpack.c.h.b16 %v57
  %v1047 = vunpack.c.l.b16 %v58
  %v1048 = vunpack.c.h.b16 %v58
  %v1049 = vunpack.c.l.b16 %v59
  %v1050 = vunpack.c.h.b16 %v59
  %v1051 = vunpack.c.l.b16 %v60
  %v1052 = vunpack.c.h.b16 %v60
  %v1053 = vunpack.c.l.b16 %v61
  %v1054 = vunpack.c.h.b16 %v61
  %v1055 = vunpack.c.l.b16 %v62
  %v1056 = vunpack.c.h.b16 %v62
  %v1057 = vunpack.c.l.b16 %v63
  %v1058 = vunpack.c.h.b16 %v63
  %v1059 = vunpack.c.l.b16 %v64
  %v1060 = vunpack.c.h.b16 %v64
  %v1061 = vunpack.c.l.b16 %v65
  %v1062 = vunpack.c.h.b16 %v65
  %v1063 = vunpack.c.l.b16 %v66
  %v1064 = vunpack.c.h.b16 %v66
  %v1065 = vunpack.c.l.b16 %v67
  %v1066 = vunpack.c.h.b16 %v67
  %v1067 = vunpack.c.l.b16 %v68
  %v1068 = vunpack.c.h.b16 %v68
  %v1069 = vunpack.c.l.b16 %v69
  %v1070 = vunpack.c.h.b16 %v69
  %v1071 = vunpack.c.l.b16 %v70
  %v1072 = vunpack.c.h.b16 %v70
  %v1073 = vunpack.c.l.b16 %v71
  %v1074 = vunpack.c.h.b16 %v71
  %v1075 = vunpack.c.l.b16 %v72
  %v1076 = vunpack.c.h.b16 %v72
  %v1077 = vunpack.c.l.b16 %v73
  %v1078 = vunpack.c.h.b16 %v73
  %v1079 = vunpack.c.l.b16 %v74
  %v1080 = vunpack.c.h.b16 %v74
  %v1081 = vunpack.c.l.b16 %v75
  %v1082 = vunpack.c.h.b16 %v75
  %v1083 = vunpack.c.l.b16 %v76
  %v1084 = vunpack.c.h.b16 %v76
  %v1085 = vunpack.c.l.b16 %v77
  %v1086 = vunpack.c.h.b16 %v77
  %v1087 = vunpack.c.l.b16 %v78
  %v1088 = vunpack.c.h.b16 %v78
  %v1089 = vunpack.c.l.b16 %v79
  %v1090 = vunpack.c.h.b16 %v79
  %v1091 = vunpack.c.l.b16 %v80
  %v1092 = vunpack.c.h.b16 %v80
  %v1093 = vunpack.c.l.b16 %v81
  %v1094 = vunpack.c.h.b16 %v81
  %v1095 = vunpack.c.l.b16 %v82
  %v1096 = vunpack.c.h.b16 %v82
  %v1097 = vunpack.c.l.b16 %v83
  %v1098 = vunpack.c.h.b16 %v83
  %v1099 = vunpack.c.l.b16 %v84
  %v1100 = vunpack.c.h.b16 %v84
  %v1101 = vunpack.c.l.b16 %v85
  %v1102 = vunpack.c.h.b16 %v85
  %v1103 = vunpack.c.l.b16 %v86
  %v1104 = vunpack.c.h.b16 %v86
  %v1105 = vunpack.c.l.b16 %v87
  %v1106 = vunpack.c.h.b16 %v87
  %v1107 = vunpack.c.l.b16 %v88
  %v1108 = vunpack.c.h.b16 %v88
  %v1109 = vunpack.c.l.b16 %v89
  %v1110 = vunpack.c.h.b16 %v89
  %v1111 = vunpack.c.l.b16 %v90
  %v1112 = vunpack.c.h.b16 %v90
  %v1113 = vunpack.c.l.b16 %v91
  %v1114 = vunpack.c.h.b16 %v91
  %v1115 = vunpack.c.l.b16 %v92
  %v1116 = vunpack.c.h.b16 %v92
  %v1117 = vunpack.c.l.b16 %v93
  %v1118 = vunpack.c.h.b16 %v93
  %v1119 = vunpack.c.l.b16 %v94
  %v1120 = vunpack.c.h.b16 %v94
  %v1121 = vunpack.c.l.b16 %v95
  %v1122 = vunpack.c.h.b16 %v95
  %v1123 = vunpack.c.l.b16 %v96
  %v1124 = vunpack.c.h.b16 %v96
  %v1125 = vunpack.c.l.b16 %v97
  %v1126 = vunpack.c.h.b16 %v97
  %v1127 = vunpack.c.l.b16 %v98
  %v1128 = vunpack.c.h.b16 %v98
  %v1129 = vunpack.c.l.b16 %v99
  %v1130 = vunpack.c.h.b16 %v99
  %v1131 = vunpack.c.l.b16 %v100
  %v1132 = vunpack.c.h.b16 %v100
  %v1133 = vunpack.c.l.b16 %v101
  %v1134 = vunpack.c.h.b16 %v101
  %v1135 = vunpack.c.l.b16 %v102
  %v1136 = vunpack.c.h.b16 %v102
  %v1137 = vunpack.c.l.b16 %v103
  %v1138 = vunpack.c.h.b16 %v103
  %v1139 = vunpack.c.l.b16 %v104
  %v1140 = vunpack.c.h.b16 %v104
  %v1141 = vunpack.c.l.b16 %v105
  %v1142 = vunpack.c.h.b16 %v105
  %v1143 = vunpack.c.l.b16 %v106
  %v1144 = vunpack.c.h.b16 %v106
  %v1145 = vunpack.c.l.b16 %v107
  %v1146 = vunpack.c.h.b16 %v107
  %v1147 = vunpack.c.l.b16 %v108
  %v1148 = vunpack.c.h.b16 %v108
  %v1149 = vunpack.c.l.b16 %v109
  %v1150 = vunpack.c.h.b16 %v109
  %v1151 = vunpack.c.l.b16 %v110
  %v1152 = vunpack.c.h.b16 %v110
  %v1153 = vunpack.c.l.b16 %v111
  %v1154 = vunpack.c.h.b16 %v111
  %v1155 = vunpack.c.l.b16 %v112
  %v1156 = vunpack.c.h.b16 %v112
  %v1157 = vunpack.c.l.b16 %v113
  %v1158 = vunpack.c.h.b16 %v113
  %v1159 = vunpack.c.l.b16 %v114
  %v1160 = vunpack.c.h.b16 %v114
  %v1161 = vunpack.c.l.b16 %v115
  %v1162 = vunpack.c.h.b16 %v115
  %v1163 = vunpack.c.l.b16 %v116
  %v1164 = vunpack.c.h.b16 %v116
  %v1165 = vunpack.c.l.b16 %v117
  %v1166 = vunpack.c.h.b16 %v117
  %v1167 = vunpack.c.l.b16 %v118
  %v1168 = vunpack.c.h.b16 %v118
  %v1169 = vunpack.c.l.b16 %v119
  %v1170 = vunpack.c.h.b16 %v119
  %v1171 = vunpack.c.l.b16 %v120
  %v1172 = vunpack.c.h.b16 %v120
  %v1173 = vunpack.c.l.b16 %v121
  %v1174 = vunpack.c.h.b16 %v121
  %v1175 = vunpack.c.l.b16 %v122
  %v1176 = vunpack.c.h.b16 %v122
  %v1177 = vunpack.c.l.b16 %v123
  %v1178 = vunpack.c.h.b16 %v123
  %v1179 = vunpack.c.l.b16 %v124
  %v1180 = vunpack.c.h.b16 %v124
  %v1181 = vunpack.c.l.b16 %v125
  %v1182 = vunpack.c.h.b16 %v125
  %v1183 = vunpack.c.l.b16 %v126
  %v1184 = vunpack.c.h.b16 %v126
  %v1185 = vunpack.c.l.b16 %v127
  %v1186 = vunpack.c.h.b16 %v127
  %v1187 = vunpack.c.l.b16 %v128
  %v1188 = vunpack.c.h.b16 %v128
  %v1189 = vunpack.c.l.b16 %v129
  %v1190 = vunpack.c.h.b16 %v129
  %v1191 = vunpack.c.l.b16 %v130
  %v1192 = vunpack.c.h.b16 %v130
  %v1193 = vunpack.c.l.b16 %v131
  %v1194 = vunpack.c.h.b16 %v131
  %v1195 = vunpack.c.l.b16 %v132
  %v1196 = vunpack.c.h.b16 %v132
  %v1197 = vunpack.c.l.b16 %v133
  %v1198 = vunpack.c.h.b16 %v133
  %v1199 = vunpack.c.l.b16 %v134
  %v1200 = vunpack.c.h.b16 %v134
  %v1201 = vunpack.c.l.b16 %v135
  %v1202 = vunpack.c.h.b16 %v135
  %v1203 = vunpack.c.l.b16 %v136
  %v1204 = vunpack.c.h.b16 %v136
  %v1205 = vunpack.c.l.b16 %v137
  %v1206 = vunpack.c.h.b16 %v137
  %v1207 = vunpack.c.l.b16 %v138
  %v1208 = vunpack.c.h.b16 %v138
  %v1209 = vunpack.c.l.b16 %v139
  %v1210 = vunpack.c.h.b16 %v139
  %v1211 = vunpack.c.l.b16 %v140
  %v1212 = vunpack.c.h.b16 %v140
  %v1213 = vunpack.c.l.b16 %v141
  %v1214 = vunpack.c.h.b16 %v141
  %v1215 = vunpack.c.l.b16 %v142
  %v1216 = vunpack.c.h.b16 %v142
  %v1217 = vunpack.c.l.b16 %v143
  %v1218 = vunpack.c.h.b16 %v143
  %v1219 = vunpack.c.l.b16 %v144
  %v1220 = vunpack.c.h.b16 %v144
  %v1221 = vunpack.c.l.b16 %v145
  %v1222 = vunpack.c.h.b16 %v145
  %v1223 = vunpack.c.l.b16 %v146
  %v1224 = vunpack.c.h.b16 %v146
  %v1225 = vunpack.c.l.b16 %v147
  %v1226 = vunpack.c.h.b16 %v147
  %v1227 = vunpack.c.l.b16 %v148
  %v1228 = vunpack.c.h.b16 %v148
  %v1229 = vunpack.c.l.b16 %v149
  %v1230 = vunpack.c.h.b16 %v149
  %v1231 = vunpack.c.l.b16 %v150
  %v1232 = vunpack.c.h.b16 %v150
  %v1233 = vunpack.c.l.b16 %v151
  %v1234 = vunpack.c.h.b16 %v151
  %v1235 = vunpack.c.l.b16 %v152
  %v1236 = vunpack.c.h.b16 %v152
  %v1237 = vunpack.c.l.b16 %v153
  %v1238 = vunpack.c.h.b16 %v153
  %v1239 = vunpack.c.l.b16 %v154
  %v1240 = vunpack.c.h.b16 %v154
  %v1241 = vunpack.c.l.b16 %v155
  %v1242 = vunpack.c.h.b16 %v155
  %v1243 = vunpack.c.l.b16 %v156
  %v1244 = vunpack.c.h.b16 %v156
  %v1245 = vunpack.c.l.b16 %v157
  %v1246 = vunpack.c.h.b16 %v157
  %v1247 = vunpack.c.l.b16 %v158
  %v1248 = vunpack.c.h.b16 %v158
  %v1249 = vunpack.c.l.b16 %v159
  %v1250 = vunpack.c.h.b16 %v159
  %v1251 = vunpack.c.l.b16 %v160
  %v1252 = vunpack.c.h.b16 %v160
  %v1253 = vunpack.c.l.b16 %v161
  %v1254 = vunpack.c.h.b16 %v161
  %v1255 = vunpack.c.l.b16 %v162
  %v1256 = vunpack.c.h.b16 %v162
  %v1257 = vunpack.c.l.b16 %v163
  %v1258 = vunpack.c.h.b16 %v163
  %v1259 = vunpack.c.l.b16 %v164
  %v1260 = vunpack.c.h.b16 %v164
  %v1261 = vunpack.c.l.b16 %v165
  %v1262 = vunpack.c.h.b16 %v165
  %v1263 = vunpack.c.l.b16 %v166
  %v1264 = vunpack.c.h.b16 %v166
  %v1265 = vunpack.c.l.b16 %v167
  %v1266 = vunpack.c.h.b16 %v167
  %v1267 = vunpack.c.l.b16 %v168
  %v1268 = vunpack.c.h.b16 %v168
  %v1269 = vunpack.c.l.b16 %v169
  %v1270 = vunpack.c.h.b16 %v169
  %v1271 = vunpack.c.l.b16 %v170
  %v1272 = vunpack.c.h.b16 %v170
  %v1273 = vunpack.c.l.b16 %v171
  %v1274 = vunpack.c.h.b16 %v171
  %v1275 = vunpack.c.l.b16 %v172
  %v1276 = vunpack.c.h.b16 %v172
  %v1277 = vunpack.c.l.b16 %v173
  %v1278 = vunpack.c.h.b16 %v173
  %v1279 = vunpack.c.l.b16 %v174
  %v1280 = vunpack.c.h.b16 %v174
  %v1281 = vunpack.c.l.b16 %v175
  %v1282 = vunpack.c.h.b16 %v175
  %v1283 = vunpack.c.l.b16 %v176
  %v1284 = vunpack.c.h.b16 %v176
  %v1285 = vunpack.c.l.b16 %v177
  %v1286 = vunpack.c.h.b16 %v177
  %v1287 = vunpack.c.l.b16 %v178
  %v1288 = vunpack.c.h.b16 %v178
  %v1289 = vunpack.c.l.b16 %v179
  %v1290 = vunpack.c.h.b16 %v179
  %v1291 = vunpack.c.l.b16 %v180
  %v1292 = vunpack.c.h.b16 %v180
  %v1293 = vunpack.c.l.b16 %v181
  %v1294 = vunpack.c.h.b16 %v181
  %v1295 = vunpack.c.l.b16 %v182
  %v1296 = vunpack.c.h.b16 %v182
  %v1297 = vunpack.c.l.b16 %v183
  %v1298 = vunpack.c.h.b16 %v183
  %v1299 = vunpack.c.l.b16 %v184
  %v1300 = vunpack.c.h.b16 %v184
  %v1301 = vunpack.c.l.b16 %v185
  %v1302 = vunpack.c.h.b16 %v185
  %v1303 = vunpack.c.l.b16 %v186
  %v1304 = vunpack.c.h.b16 %v186
  %v1305 = vunpack.c.l.b16 %v187
  %v1306 = vunpack.c.h.b16 %v187
  %v1307 = vunpack.c.l.b16 %v188
  %v1308 = vunpack.c.h.b16 %v188
  %v1309 = vunpack.c.l.b16 %v189
  %v1310 = vunpack.c.h.b16 %v189
  %v1311 = vunpack.c.l.b16 %v190
  %v1312 = vunpack.c.h.b16 %v190
  %v1313 = vunpack.c.l.b16 %v191
  %v1314 = vunpack.c.h.b16 %v191
  %v1315 = vunpack.c.l.b16 %v192
  %v1316 = vunpack.c.h.b16 %v192
  %v1317 = vunpack.c.l.b16 %v193
  %v1318 = vunpack.c.h.b16 %v193
  %v1319 = vunpack.c.l.b16 %v194
  %v1320 = vunpack.c.h.b16 %v194
  %v1321 = vunpack.c.l.b16 %v195
  %v1322 = vunpack.c.h.b16 %v195
  %v1323 = vunpack.c.l.b16 %v196
  %v1324 = vunpack.c.h.b16 %v196
  %v1325 = vunpack.c.l.b16 %v197
  %v1326 = vunpack.c.h.b16 %v197
  %v1327 = vunpack.c.l.b16 %v198
  %v1328 = vunpack.c.h.b16 %v198
  %v1329 = vunpack.c.l.b16 %v199
  %v1330 = vunpack.c.h.b16 %v199
  %v1331 = vunpack.c.l.b16 %v200
  %v1332 = vunpack.c.h.b16 %v200
  %v1333 = vunpack.c.l.b16 %v201
  %v1334 = vunpack.c.h.b16 %v201
  %v1335 = vunpack.c.l.b16 %v202
  %v1336 = vunpack.c.h.b16 %v202
  %v1337 = vunpack.c.l.b16 %v203
  %v1338 = vunpack.c.h.b16 %v203
  %v1339 = vunpack.c.l.b16 %v204
  %v1340 = vunpack.c.h.b16 %v204
  %v1341 = vunpack.c.l.b16 %v205
  %v1342 = vunpack.c.h.b16 %v205
  %v1343 = vunpack.c.l.b16 %v206
  %v1344 = vunpack.c.h.b16 %v206
  %v1345 = vunpack.c.l.b16 %v207
  %v1346 = vunpack.c.h.b16 %v207
  %v1347 = vunpack.c.l.b16 %v208
  %v1348 = vunpack.c.h.b16 %v208
  %v1349 = vunpack.c.l.b16 %v209
  %v1350 = vunpack.c.h.b16 %v209
  %v1351 = vunpack.c.l.b16 %v210
  %v1352 = vunpack.c.h.b16 %v210
  %v1353 = vunpack.c.l.b16 %v211
  %v1354 = vunpack.c.h.b16 %v211
  %v1355 = vunpack.c.l.b16 %v212
  %v1356 = vunpack.c.h.b16 %v212
  %v1357 = vunpack.c.l.b16 %v213
  %v1358 = vunpack.c.h.b16 %v213
  %v1359 = vunpack.c.l.b16 %v214
  %v1360 = vunpack.c.h.b16 %v214
  %v1361 = vunpack.c.l.b16 %v215
  %v1362 = vunpack.c.h.b16 %v215
  %v1363 = vunpack.c.l.b16 %v216
  %v1364 = vunpack.c.h.b16 %v216
  %v1365 = vunpack.c.l.b16 %v217
  %v1366 = vunpack.c.h.b16 %v217
  %v1367 = vunpack.c.l.b16 %v218
  %v1368 = vunpack.c.h.b16 %v218
  %v1369 = vunpack.c.l.b16 %v219
  %v1370 = vunpack.c.h.b16 %v219
  %v1371 = vunpack.c.l.b16 %v220
  %v1372 = vunpack.c.h.b16 %v220
  %v1373 = vunpack.c.l.b16 %v221
  %v1374 = vunpack.c.h.b16 %v221
  %v1375 = vunpack.c.l.b16 %v222
  %v1376 = vunpack.c.h.b16 %v222
  %v1377 = vunpack.c.l.b16 %v223
  %v1378 = vunpack.c.h.b16 %v223
  %v1379 = vunpack.c.l.b16 %v224
  %v1380 = vunpack.c.h.b16 %v224
  %v1381 = vunpack.c.l.b16 %v225
  %v1382 = vunpack.c.h.b16 %v225
  %v1383 = vunpack.c.l.b16 %v226
  %v1384 = vunpack.c.h.b16 %v226
  %v1385 = vunpack.c.l.b16 %v227
  %v1386 = vunpack.c.h.b16 %v227
  %v1387 = vunpack.c.l.b16 %v228
  %v1388 = vunpack.c.h.b16 %v228
  %v1389 = vunpack.c.l.b16 %v229
  %v1390 = vunpack.c.h.b16 %v229
  %v1391 = vunpack.c.l.b16 %v230
  %v1392 = vunpack.c.h.b16 %v230
  %v1393 = vunpack.c.l.b16 %v231
  %v1394 = vunpack.c.h.b16 %v231
  %v1395 = vunpack.c.l.b16 %v232
  %v1396 = vunpack.c.h.b16 %v232
  %v1397 = vunpack.c.l.b16 %v233
  %v1398 = vunpack.c.h.b16 %v233
  %v1399 = vunpack.c.l.b16 %v234
  %v1400 = vunpack.c.h.b16 %v234
  %v1401 = vunpack.c.l.b16 %v235
  %v1402 = vunpack.c.h.b16 %v235
  %v1403 = vunpack.c.l.b16 %v236
  %v1404 = vunpack.c.h.b16 %v236
  %v1405 = vunpack.c.l.b16 %v237
  %v1406 = vunpack.c.h.b16 %v237
  %v1407 = vunpack.c.l.b16 %v238
  %v1408 = vunpack.c.h.b16 %v238
  %v1409 = vunpack.c.l.b16 %v239
  %v1410 = vunpack.c.h.b16 %v239
  %v1411 = vunpack.c.l.b16 %v240
  %v1412 = vunpack.c.h.b16 %v240
  %v1413 = vunpack.c.l.b16 %v241
  %v1414 = vunpack.c.h.b16 %v241
  %v1415 = vunpack.c.l.b16 %v242
  %v1416 = vunpack.c.h.b16 %v242
  %v1417 = vunpack.c.l.b16 %v243
  %v1418 = vunpack.c.h.b16 %v243
  %v1419 = vunpack.c.l.b16 %v244
  %v1420 = vunpack.c.h.b16 %v244
  %v1421 = vunpack.c.l.b16 %v245
  %v1422 = vunpack.c.h.b16 %v245
  %v1423 = vunpack.c.l.b16 %v246
  %v1424 = vunpack.c.h.b16 %v246
  %v1425 = vunpack.c.l.b16 %v247
  %v1426 = vunpack.c.h.b16 %v247
  %v1427 = vunpack.c.l.b16 %v248
  %v1428 = vunpack.c.h.b16 %v248
  %v1429 = vunpack.c.l.b16 %v249
  %v1430 = vunpack.c.h.b16 %v249
  %v1431 = vunpack.c.l.b16 %v250
  %v1432 = vunpack.c.h.b16 %v250
  %v1433 = vunpack.c.l.b16 %v251
  %v1434 = vunpack.c.h.b16 %v251
  %v1435 = vunpack.c.l.b16 %v252
  %v1436 = vunpack.c.h.b16 %v252
  %v1437 = vunpack.c.l.b16 %v253
  %v1438 = vunpack.c.h.b16 %v253
  %v1439 = vunpack.c.l.b16 %v254
  %v1440 = vunpack.c.h.b16 %v254
  %v1441 = vunpack.c.l.b16 %v255
  %v1442 = vunpack.c.h.b16 %v255
  %v1443 = vunpack.c.l.b16 %v256
  %v1444 = vunpack.c.h.b16 %v256
  %v1445 = vunpack.c.l.b16 %v257
  %v1446 = vunpack.c.h.b16 %v257
  %v1447 = vunpack.c.l.b16 %v258
  %v1448 = vunpack.c.h.b16 %v258
  %v1449 = vunpack.c.l.b16 %v259
  %v1450 = vunpack.c.h.b16 %v259
  %v1451 = vunpack.c.l.b16 %v260
  %v1452 = vunpack.c.h.b16 %v260
  %v1453 = vunpack.c.l.b16 %v261
  %v1454 = vunpack.c.h.b16 %v261
  %v1455 = vunpack.c.l.b16 %v262
  %v1456 = vunpack.c.h.b16 %v262
  %v1457 = vunpack.c.l.b16 %v263
  %v1458 = vunpack.c.h.b16 %v263
  %v1459 = vunpack.c.l.b16 %v264
  %v1460 = vunpack.c.h.b16 %v264
  %v1461 = vunpack.c.l.b16 %v265
  %v1462 = vunpack.c.h.b16 %v265
  %v1463 = vunpack.c.l.b16 %v266
  %v1464 = vunpack.c.h.b16 %v266
  %v1465 = vunpack.c.l.b16 %v267
  %v1466 = vunpack.c.h.b16 %v267
  %v1467 = vunpack.c.l.b16 %v268
  %v1468 = vunpack.c.h.b16 %v268
  %v1469 = vunpack.c.l.b16 %v269
  %v1470 = vunpack.c.h.b16 %v269
  %v1471 = vunpack.c.l.b16 %v270
  %v1472 = vunpack.c.h.b16 %v270
  %v1473 = vunpack.c.l.b16 %v271
  %v1474 = vunpack.c.h.b16 %v271
  %v1475 = vunpack.c.l.b16 %v272
  %v1476 = vunpack.c.h.b16 %v272
  %v1477 = vunpack.c.l.b16 %v273
  %v1478 = vunpack.c.h.b16 %v273
  %v1479 = vunpack.c.l.b16 %v274
  %v1480 = vunpack.c.h.b16 %v274
  %v1481 = vunpack.c.l.b16 %v275
  %v1482 = vunpack.c.h.b16 %v275
  %v1483 = vunpack.c.l.b16 %v276
  %v1484 = vunpack.c.h.b16 %v276
  %v1485 = vunpack.c.l.b16 %v277
  %v1486 = vunpack.c.h.b16 %v277
  %v1487 = vunpack.c.l.b16 %v278
  %v1488 = vunpack.c.h.b16 %v278
  %v1489 = vunpack.c.l.b16 %v279
  %v1490 = vunpack.c.h.b16 %v279
  %v1491 = vunpack.c.l.b16 %v280
  %v1492 = vunpack.c.h.b16 %v280
  %v1493 = vunpack.c.l.b16 %v281
  %v1494 = vunpack.c.h.b16 %v281
  %v1495 = vunpack.c.l.b16 %v282
  %v1496 = vunpack.c.h.b16 %v282
  %v1497 = vunpack.c.l.b16 %v283
  %v1498 = vunpack.c.h.b16 %v283
  %v1499 = vunpack.c.l.b16 %v284
  %v1500 = vunpack.c.h.b16 %v284
  %v1501 = vunpack.c.l.b16 %v285
  %v1502 = vunpack.c.h.b16 %v285
  %v1503 = vunpack.c.l.b16 %v286
  %v1504 = vunpack.c.h.b16 %v286
  %v1505 = vunpack.c.l.b16 %v287
  %v1506 = vunpack.c.h.b16 %v287
  %v1507 = vunpack.c.l.b16 %v288
  %v1508 = vunpack.c.h.b16 %v288
  %v1509 = vunpack.c.l.b16 %v289
  %v1510 = vunpack.c.h.b16 %v289
  %v1511 = vunpack.c.l.b16 %v290
  %v1512 = vunpack.c.h.b16 %v290
  %v1513 = vunpack.c.l.b16 %v291
  %v1514 = vunpack.c.h.b16 %v291
  %v1515 = vunpack.c.l.b16 %v292
  %v1516 = vunpack.c.h.b16 %v292
  %v1517 = vunpack.c.l.b16 %v293
  %v1518 = vunpack.c.h.b16 %v293
  %v1519 = vunpack.c.l.b16 %v294
  %v1520 = vunpack.c.h.b16 %v294
  %v1521 = vunpack.c.l.b16 %v295
  %v1522 = vunpack.c.h.b16 %v295
  %v1523 = vunpack.c.l.b16 %v296
  %v1524 = vunpack.c.h.b16 %v296
  %v1525 = vunpack.c.l.b16 %v297
  %v1526 = vunpack.c.h.b16 %v297
  %v1527 = vunpack.c.l.b16 %v298
  %v1528 = vunpack.c.h.b16 %v298
  %v1529 = vunpack.c.l.b16 %v299
  %v1530 = vunpack.c.h.b16 %v299
  %v1531 = vunpack.c.l.b16 %v300
  %v1532 = vunpack.c.h.b16 %v300
  %v1533 = vunpack.c.l.b16 %v301
  %v1534 = vunpack.c.h.b16 %v301
  %v1535 = vunpack.c.l.b16 %v302
  %v1536 = vunpack.c.h.b16 %v302
  %v1537 = vunpack.c.l.b16 %v303
  %v1538 = vunpack.c.h.b16 %v303
  %v1539 = vunpack.c.l.b16 %v304
  %v1540 = vunpack.c.h.b16 %v304
  %v1541 = vunpack.c.l.b16 %v305
  %v1542 = vunpack.c.h.b16 %v305
  %v1543 = vunpack.c.l.b16 %v306
  %v1544 = vunpack.c.h.b16 %v306
  %v1545 = vunpack.c.l.b16 %v307
  %v1546 = vunpack.c.h.b16 %v307
  %v1547 = vunpack.c.l.b16 %v308
  %v1548 = vunpack.c.h.b16 %v308
  %v1549 = vunpack.c.l.b16 %v309
  %v1550 = vunpack.c.h.b16 %v309
  %v1551 = vunpack.c.l.b16 %v310
  %v1552 = vunpack.c.h.b16 %v310
  %v1553 = vunpack.c.l.b16 %v311
  %v1554 = vunpack.c.h.b16 %v311
  %v1555 = vunpack.c.l.b16 %v312
  %v1556 = vunpack.c.h.b16 %v312
  %v1557 = vunpack.c.l.b16 %v313
  %v1558 = vunpack.c.h.b16 %v313
  %v1559 = vunpack.c.l.b16 %v314
  %v1560 = vunpack.c.h.b16 %v314
  %v1561 = vunpack.c.l.b16 %v315
  %v1562 = vunpack.c.h.b16 %v315
  %v1563 = vunpack.c.l.b16 %v316
  %v1564 = vunpack.c.h.b16 %v316
  %v1565 = vunpack.c.l.b16 %v317
  %v1566 = vunpack.c.h.b16 %v317
  %v1567 = vunpack.c.l.b16 %v318
  %v1568 = vunpack.c.h.b16 %v318
  %v1569 = vunpack.c.l.b16 %v319
  %v1570 = vunpack.c.h.b16 %v319
  %v1571 = vunpack.c.l.b16 %v320
  %v1572 = vunpack.c.h.b16 %v320
  %v1573 = vunpack.c.l.b16 %v321
  %v1574 = vunpack.c.h.b16 %v321
  %v1575 = vunpack.c.l.b16 %v322
  %v1576 = vunpack.c.h.b16 %v322
  %v1577 = vunpack.c.l.b16 %v323
  %v1578 = vunpack.c.h.b16 %v323
  %v1579 = vunpack.c.l.b16 %v324
  %v1580 = vunpack.c.h.b16 %v324
  %v1581 = vunpack.c.l.b16 %v325
  %v1582 = vunpack.c.h.b16 %v325
  %v1583 = vunpack.c.l.b16 %v326
  %v1584 = vunpack.c.h.b16 %v326
  %v1585 = vunpack.c.l.b16 %v327
  %v1586 = vunpack.c.h.b16 %v327
  %v1587 = vunpack.c.l.b16 %v328
  %v1588 = vunpack.c.h.b16 %v328
  %v1589 = vunpack.c.l.b16 %v329
  %v1590 = vunpack.c.h.b16 %v329
  %v1591 = vunpack.c.l.b16 %v330
  %v1592 = vunpack.c.h.b16 %v330
  %v1593 = vunpack.c.l.b16 %v331
  %v1594 = vunpack.c.h.b16 %v331
  %v1595 = vunpack.c.l.b16 %v332
  %v1596 = vunpack.c.h.b16 %v332
  %v1597 = vunpack.c.l.b16 %v333
  %v1598 = vunpack.c.h.b16 %v333
  %v1599 = vunpack.c.l.b16 %v334
  %v1600 = vunpack.c.h.b16 %v334
  %v1601 = vunpack.c.l.b16 %v335
  %v1602 = vunpack.c.h.b16 %v335
  %v1603 = vunpack.c.l.b16 %v336
  %v1604 = vunpack.c.h.b16 %v336
  %v1605 = vunpack.c.l.b16 %v337
  %v1606 = vunpack.c.h.b16 %v337
  %v1607 = vunpack.c.l.b16 %v338
  %v1608 = vunpack.c.h.b16 %v338
  %v1609 = vunpack.c.l.b16 %v339
  %v1610 = vunpack.c.h.b16 %v339
  %v1611 = vunpack.c.l.b16 %v340
  %v1612 = vunpack.c.h.b16 %v340
  %v1613 = vunpack.c.l.b16 %v341
  %v1614 = vunpack.c.h.b16 %v341
  %v1615 = vunpack.c.l.b16 %v342
  %v1616 = vunpack.c.h.b16 %v342
  %v1617 = vunpack.c.l.b16 %v343
  %v1618 = vunpack.c.h.b16 %v343
  %v1619 = vunpack.c.l.b16 %v344
  %v1620 = vunpack.c.h.b16 %v344
  %v1621 = vunpack.c.l.b16 %v345
  %v1622 = vunpack.c.h.b16 %v345
  %v1623 = vunpack.c.l.b16 %v346
  %v1624 = vunpack.c.h.b16 %v346
  %v1625 = vunpack.c.l.b16 %v347
  %v1626 = vunpack.c.h.b16 %v347
  %v1627 = vunpack.c.l.b16 %v348
  %v1628 = vunpack.c.h.b16 %v348
  %v1629 = vunpack.c.l.b16 %v349
  %v1630 = vunpack.c.h.b16 %v349
  %v1631 = vunpack.c.l.b16 %v350
  %v1632 = vunpack.c.h.b16 %v350
  %v1633 = vunpack.c.l.b16 %v351
  %v1634 = vunpack.c.h.b16 %v351
  %v1635 = vunpack.c.l.b16 %v352
  %v1636 = vunpack.c.h.b16 %v352
  %v1637 = vunpack.c.l.b16 %v353
  %v1638 = vunpack.c.h.b16 %v353
  %v1639 = vunpack.c.l.b16 %v354
  %v1640 = vunpack.c.h.b16 %v354
  %v1641 = vunpack.c.l.b16 %v355
  %v1642 = vunpack.c.h.b16 %v355
  %v1643 = vunpack.c.l.b16 %v356
  %v1644 = vunpack.c.h.b16 %v356
  %v1645 = vunpack.c.l.b16 %v357
  %v1646 = vunpack.c.h.b16 %v357
  %v1647 = vunpack.c.l.b16 %v358
  %v1648 = vunpack.c.h.b16 %v358
  %v1649 = vunpack.c.l.b16 %v359
  %v1650 = vunpack.c.h.b16 %v359
  %v1651 = vunpack.c.l.b16 %v360
  %v1652 = vunpack.c.h.b16 %v360
  %v1653 = vunpack.c.l.b16 %v361
  %v1654 = vunpack.c.h.b16 %v361
  %v1655 = vunpack.c.l.b16 %v362
  %v1656 = vunpack.c.h.b16 %v362
  %v1657 = vunpack.c.l.b16 %v363
  %v1658 = vunpack.c.h.b16 %v363
  %v1659 = vunpack.c.l.b16 %v364
  %v1660 = vunpack.c.h.b16 %v364
  %v1661 = vunpack.c.l.b16 %v365
  %v1662 = vunpack.c.h.b16 %v365
  %v1663 = vunpack.c.l.b16 %v366
  %v1664 = vunpack.c.h.b16 %v366
  %v1665 = vunpack.c.l.b16 %v367
  %v1666 = vunpack.c.h.b16 %v367
  %v1667 = vunpack.c.l.b16 %v368
  %v1668 = vunpack.c.h.b16 %v368
  %v1669 = vunpack.c.l.b16 %v369
  %v1670 = vunpack.c.h.b16 %v369
  %v1671 = vunpack.c.l.b16 %v370
  %v1672 = vunpack.c.h.b16 %v370
  %v1673 = vunpack.c.l.b16 %v371
  %v1674 = vunpack.c.h.b16 %v371
  %v1675 = vunpack.c.l.b16 %v372
  %v1676 = vunpack.c.h.b16 %v372
  %v1677 = vunpack.c.l.b16 %v373
  %v1678 = vunpack.c.h.b16 %v373
  %v1679 = vunpack.c.l.b16 %v374
  %v1680 = vunpack.c.h.b16 %v374
  %v1681 = vunpack.c.l.b16 %v375
  %v1682 = vunpack.c.h.b16 %v375
  %v1683 = vunpack.c.l.b16 %v376
  %v1684 = vunpack.c.h.b16 %v376
  %v1685 = vunpack.c.l.b16 %v377
  %v1686 = vunpack.c.h.b16 %v377
  %v1687 = vunpack.c.l.b16 %v378
  %v1688 = vunpack.c.h.b16 %v378
  %v1689 = vunpack.c.l.b16 %v379
  %v1690 = vunpack.c.h.b16 %v379
  %v1691 = vunpack.c.l.b16 %v380
  %v1692 = vunpack.c.h.b16 %v380
  %v1693 = vunpack.c.l.b16 %v381
  %v1694 = vunpack.c.h.b16 %v381
  %v1695 = vunpack.c.l.b16 %v382
  %v1696 = vunpack.c.h.b16 %v382
  %v1697 = vunpack.c.l.b16 %v383
  %v1698 = vunpack.c.h.b16 %v383
  %v1699 = vunpack.c.l.b16 %v384
  %v1700 = vunpack.c.h.b16 %v384
  %v1701 = vunpack.c.l.b16 %v385
  %v1702 = vunpack.c.h.b16 %v385
  %v1703 = vunpack.c.l.b16 %v386
  %v1704 = vunpack.c.h.b16 %v386
  %v1705 = vunpack.c.l.b16 %v387
  %v1706 = vunpack.c.h.b16 %v387
  %v1707 = vunpack.c.l.b16 %v388
  %v1708 = vunpack.c.h.b16 %v388
  %v1709 = vunpack.c.l.b16 %v389
  %v1710 = vunpack.c.h.b16 %v389
  %v1711 = vunpack.c.l.b16 %v390
  %v1712 = vunpack.c.h.b16 %v390
  %v1713 = vunpack.c.l.b16 %v391
  %v1714 = vunpack.c.h.b16 %v391
  %v1715 = vunpack.c.l.b16 %v392
  %v1716 = vunpack.c.h.b16 %v392
  %v1717 = vunpack.c.l.b16 %v393
  %v1718 = vunpack.c.h.b16 %v393
  %v1719 = vunpack.c.l.b16 %v394
  %v1720 = vunpack.c.h.b16 %v394
  %v1721 = vunpack.c.l.b16 %v395
  %v1722 = vunpack.c.h.b16 %v395
  %v1723 = vunpack.c.l.b16 %v396
  %v1724 = vunpack.c.h.b16 %v396
  %v1725 = vunpack.c.l.b16 %v397
  %v1726 = vunpack.c.h.b16 %v397
  %v1727 = vunpack.c.l.b16 %v398
  %v1728 = vunpack.c.h.b16 %v398
  %v1729 = vunpack.c.l.b16 %v399
  %v1730 = vunpack.c.h.b16 %v399
  %v1731 = vunpack.c.l.b16 %v400
  %v1732 = vunpack.c.h.b16 %v400
  %v1733 = vunpack.c.l.b16 %v401
  %v1734 = vunpack.c.h.b16 %v401
  %v1735 = vunpack.c.l.b16 %v402
  %v1736 = vunpack.c.h.b16 %v402
  %v1737 = vunpack.c.l.b16 %v403
  %v1738 = vunpack.c.h.b16 %v403
  %v1739 = vunpack.c.l.b16 %v404
  %v1740 = vunpack.c.h.b16 %v404
  %v1741 = vunpack.c.l.b16 %v405
  %v1742 = vunpack.c.h.b16 %v405
  %v1743 = vunpack.c.l.b16 %v406
  %v1744 = vunpack.c.h.b16 %v406
  %v1745 = vunpack.c.l.b16 %v407
  %v1746 = vunpack.c.h.b16 %v407
  %v1747 = vunpack.c.l.b16 %v408
  %v1748 = vunpack.c.h.b16 %v408
  %v1749 = vunpack.c.l.b16 %v409
  %v1750 = vunpack.c.h.b16 %v409
  %v1751 = vunpack.c.l.b16 %v410
  %v1752 = vunpack.c.h.b16 %v410
  %v1753 = vunpack.c.l.b16 %v411
  %v1754 = vunpack.c.h.b16 %v411
  %v1755 = vunpack.c.l.b16 %v412
  %v1756 = vunpack.c.h.b16 %v412
  %v1757 = vunpack.c.l.b16 %v413
  %v1758 = vunpack.c.h.b16 %v413
  %v1759 = vunpack.c.l.b16 %v414
  %v1760 = vunpack.c.h.b16 %v414
  %v1761 = vunpack.c.l.b16 %v415
  %v1762 = vunpack.c.h.b16 %v415
  %v1763 = vunpack.c.l.b16 %v416
  %v1764 = vunpack.c.h.b16 %v416
  %v1765 = vunpack.c.l.b16 %v417
  %v1766 = vunpack.c.h.b16 %v417
  %v1767 = vunpack.c.l.b16 %v418
  %v1768 = vunpack.c.h.b16 %v418
  %v1769 = vunpack.c.l.b16 %v419
  %v1770 = vunpack.c.h.b16 %v419
  %v1771 = vunpack.c.l.b16 %v420
  %v1772 = vunpack.c.h.b16 %v420
  %v1773 = vunpack.c.l.b16 %v421
  %v1774 = vunpack.c.h.b16 %v421
  %v1775 = vunpack.c.l.b16 %v422
  %v1776 = vunpack.c.h.b16 %v422
  %v1777 = vunpack.c.l.b16 %v423
  %v1778 = vunpack.c.h.b16 %v423
  %v1779 = vunpack.c.l.b16 %v424
  %v1780 = vunpack.c.h.b16 %v424
  %v1781 = vunpack.c.l.b16 %v425
  %v1782 = vunpack.c.h.b16 %v425
  %v1783 = vunpack.c.l.b16 %v426
  %v1784 = vunpack.c.h.b16 %v426
  %v1785 = vunpack.c.l.b16 %v427
  %v1786 = vunpack.c.h.b16 %v427
  %v1787 = vunpack.c.l.b16 %v428
  %v1788 = vunpack.c.h.b16 %v428
  %v1789 = vunpack.c.l.b16 %v429
  %v1790 = vunpack.c.h.b16 %v429
  %v1791 = vunpack.c.l.b16 %v430
  %v1792 = vunpack.c.h.b16 %v430
  %v1793 = vunpack.c.l.b16 %v431
  %v1794 = vunpack.c.h.b16 %v431
  %v1795 = vunpack.c.l.b16 %v432
  %v1796 = vunpack.c.h.b16 %v432
  %v1797 = vunpack.c.l.b16 %v433
  %v1798 = vunpack.c.h.b16 %v433
  %v1799 = vunpack.c.l.b16 %v434
  %v1800 = vunpack.c.h.b16 %v434
  %v1801 = vunpack.c.l.b16 %v435
  %v1802 = vunpack.c.h.b16 %v435
  %v1803 = vunpack.c.l.b16 %v436
  %v1804 = vunpack.c.h.b16 %v436
  %v1805 = vunpack.c.l.b16 %v437
  %v1806 = vunpack.c.h.b16 %v437
  %v1807 = vunpack.c.l.b16 %v438
  %v1808 = vunpack.c.h.b16 %v438
  %v1809 = vunpack.c.l.b16 %v439
  %v1810 = vunpack.c.h.b16 %v439
  %v1811 = vunpack.c.l.b16 %v440
  %v1812 = vunpack.c.h.b16 %v440
  %v1813 = vunpack.c.l.b16 %v441
  %v1814 = vunpack.c.h.b16 %v441
  %v1815 = vunpack.c.l.b16 %v442
  %v1816 = vunpack.c.h.b16 %v442
  %v1817 = vunpack.c.l.b16 %v443
  %v1818 = vunpack.c.h.b16 %v443
  %v1819 = vunpack.c.l.b16 %v444
  %v1820 = vunpack.c.h.b16 %v444
  %v1821 = vunpack.c.l.b16 %v445
  %v1822 = vunpack.c.h.b16 %v445
  %v1823 = vunpack.c.l.b16 %v446
  %v1824 = vunpack.c.h.b16 %v446
  %v1825 = vunpack.c.l.b16 %v447
  %v1826 = vunpack.c.h.b16 %v447
  %v1827 = vunpack.c.l.b16 %v448
  %v1828 = vunpack.c.h.b16 %v448
  %v1829 = vunpack.c.l.b16 %v449
  %v1830 = vunpack.c.h.b16 %v449
  %v1831 = vunpack.c.l.b16 %v450
  %v1832 = vunpack.c.h.b16 %v450
  %v1833 = vunpack.c.l.b16 %v451
  %v1834 = vunpack.c.h.b16 %v451
  %v1835 = vunpack.c.l.b16 %v452
  %v1836 = vunpack.c.h.b16 %v452
  %v1837 = vunpack.c.l.b16 %v453
  %v1838 = vunpack.c.h.b16 %v453
  %v1839 = vunpack.c.l.b16 %v454
  %v1840 = vunpack.c.h.b16 %v454
  %v1841 = vunpack.c.l.b16 %v455
  %v1842 = vunpack.c.h.b16 %v455
  %v1843 = vunpack.c.l.b16 %v456
  %v1844 = vunpack.c.h.b16 %v456
  %v1845 = vunpack.c.l.b16 %v457
  %v1846 = vunpack.c.h.b16 %v457
  %v1847 = vunpack.c.l.b16 %v458
  %v1848 = vunpack.c.h.b16 %v458
  %v1849 = vunpack.c.l.b16 %v459
  %v1850 = vunpack.c.h.b16 %v459
  %v1851 = vunpack.c.l.b16 %v460
  %v1852 = vunpack.c.h.b16 %v460
  %v1853 = vunpack.c.l.b16 %v461
  %v1854 = vunpack.c.h.b16 %v461
  %v1855 = vunpack.c.l.b16 %v462
  %v1856 = vunpack.c.h.b16 %v462
  %v1857 = vunpack.c.l.b16 %v463
  %v1858 = vunpack.c.h.b16 %v463
  %v1859 = vunpack.c.l.b16 %v464
  %v1860 = vunpack.c.h.b16 %v464
  %v1861 = vunpack.c.l.b16 %v465
  %v1862 = vunpack.c.h.b16 %v465
  %v1863 = vunpack.c.l.b16 %v466
  %v1864 = vunpack.c.h.b16 %v466
  %v1865 = vunpack.c.l.b16 %v467
  %v1866 = vunpack.c.h.b16 %v467
  %v1867 = vunpack.c.l.b16 %v468
  %v1868 = vunpack.c.h.b16 %v468
  %v1869 = vunpack.c.l.b16 %v469
  %v1870 = vunpack.c.h.b16 %v469
  %v1871 = vunpack.c.l.b16 %v470
  %v1872 = vunpack.c.h.b16 %v470
  %v1873 = vunpack.c.l.b16 %v471
  %v1874 = vunpack.c.h.b16 %v471
  %v1875 = vunpack.c.l.b16 %v472
  %v1876 = vunpack.c.h.b16 %v472
  %v1877 = vunpack.c.l.b16 %v473
  %v1878 = vunpack.c.h.b16 %v473
  %v1879 = vunpack.c.l.b16 %v474
  %v1880 = vunpack.c.h.b16 %v474
  %v1881 = vunpack.c.l.b16 %v475
  %v1882 = vunpack.c.h.b16 %v475
  %v1883 = vunpack.c.l.b16 %v476
  %v1884 = vunpack.c.h.b16 %v476
  %v1885 = vunpack.c.l.b16 %v477
  %v1886 = vunpack.c.h.b16 %v477
  %v1887 = vunpack.c.l.b16 %v478
  %v1888 = vunpack.c.h.b16 %v478
  %v1889 = vunpack.c.l.b16 %v479
  %v1890 = vunpack.c.h.b16 %v479
  %v1891 = vunpack.c.l.b16 %v480
  %v1892 = vunpack.c.h.b16 %v480
  %v1893 = vunpack.c.l.b16 %v481
  %v1894 = vunpack.c.h.b16 %v481
  %v1895 = vunpack.c.l.b16 %v482
  %v1896 = vunpack.c.h.b16 %v482
  %v1897 = vunpack.c.l.b16 %v483
  %v1898 = vunpack.c.h.b16 %v483
  %v1899 = vunpack.c.l.b16 %v484
  %v1900 = vunpack.c.h.b16 %v484
  %v1901 = vunpack.c.l.b16 %v485
  %v1902 = vunpack.c.h.b16 %v485
  %v1903 = vunpack.c.l.b16 %v486
  %v1904 = vunpack.c.h.b16 %v486
  %v1905 = vunpack.c.l.b16 %v487
  %v1906 = vunpack.c.h.b16 %v487
  %v1907 = vunpack.c.l.b16 %v488
  %v1908 = vunpack.c.h.b16 %v488
  %v1909 = vunpack.c.l.b16 %v489
  %v1910 = vunpack.c.h.b16 %v489
  %v1911 = vunpack.c.l.b16 %v490
  %v1912 = vunpack.c.h.b16 %v490
  %v1913 = vpack.c.b16 %v1025, %v1017
  %v1914 = vpack.c.b16 %v1026, %v1018
  %v1915 = vpack.c.b16 %v1027, %v1019
  %v1916 = vpack.c.b16 %v1028, %v1020
  %v1917 = vpack.c.b16 %v1029, %v1021
  %v1918 = vpack.c.b16 %v1030, %v1022
  %v1919 = vpack.c.b16 %v1031, %v1023
  %v1920 = vpack.c.b16 %v1032, %v1024
  %v1921 = vpack.c.b16 %v1041, %v1033
  %v1922 = vpack.c.b16 %v1042, %v1034
  %v1923 = vpack.c.b16 %v1043, %v1035
  %v1924 = vpack.c.b16 %v1044, %v1036
  %v1925 = vpack.c.b16 %v1045, %v1037
  %v1926 = vpack.c.b16 %v1046, %v1038
  %v1927 = vpack.c.b16 %v1047, %v1039
  %v1928 = vpack.c.b16 %v1048, %v1040
  %v1929 = vpack.c.b16 %v1057, %v1049
  %v1930 = vpack.c.b16 %v1058, %v1050
  %v1931 = vpack.c.b16 %v1059, %v1051
  %v1932 = vpack.c.b16 %v1060, %v1052
  %v1933 = vpack.c.b16 %v1061, %v1053
  %v1934 = vpack.c.b16 %v1062, %v1054
  %v1935 = vpack.c.b16 %v1063, %v1055
  %v1936 = vpack.c.b16 %v1064, %v1056
  %v1937 = vpack.c.b16 %v1073, %v1065
  %v1938 = vpack.c.b16 %v1074, %v1066
  %v1939 = vpack.c.b16 %v1075, %v1067
  %v1940 = vpack.c.b16 %v1076, %v1068
  %v1941 = vpack.c.b16 %v1077, %v1069
  %v1942 = vpack.c.b16 %v1078, %v1070
  %v1943 = vpack.c.b16 %v1079, %v1071
  %v1944 = vpack.c.b16 %v1080, %v1072
  %v1945 = vpack.c.b16 %v1089, %v1081
  %v1946 = vpack.c.b16 %v1090, %v1082
  %v1947 = vpack.c.b16 %v1091, %v1083
  %v1948 = vpack.c.b16 %v1092, %v1084
  %v1949 = vpack.c.b16 %v1093, %v1085
  %v1950 = vpack.c.b16 %v1094, %v1086
  %v1951 = vpack.c.b16 %v1095, %v1087
  %v1952 = vpack.c.b16 %v1096, %v1088
  %v1953 = vpack.c.b16 %v1105, %v1097
  %v1954 = vpack.c.b16 %v1106, %v1098
  %v1955 = vpack.c.b16 %v1107, %v1099
  %v1956 = vpack.c.b16 %v1108, %v1100
  %v1957 = vpack.c.b16 %v1109, %v1101
  %v1958 = vpack.c.b16 %v1110, %v1102
  %v1959 = vpack.c.b16 %v1111, %v1103
  %v1960 = vpack.c.b16 %v1112, %v1104
  %v1961 = vpack.c.b16 %v1121, %v1113
  %v1962 = vpack.c.b16 %v1122, %v1114
  %v1963 = vpack.c.b16 %v1123, %v1115
  %v1964 = vpack.c.b16 %v1124, %v1116
  %v1965 = vpack.c.b16 %v1125, %v1117
  %v1966 = vpack.c.b16 %v1126, %v1118
  %v1967 = vpack.c.b16 %v1127, %v1119
  %v1968 = vpack.c.b16 %v1128, %v1120
  %v1969 = vpack.c.b16 %v1137, %v1129
  %v1970 = vpack.c.b16 %v1138, %v1130
  %v1971 = vpack.c.b16 %v1139, %v1131
  %v1972 = vpack.c.b16 %v1140, %v1132
  %v1973 = vpack.c.b16 %v1141, %v1133
  %v1974 = vpack.c.b16 %v1142, %v1134
  %v1975 = vpack.c.b16 %v1143, %v1135
  %v1976 = vpack.c.b16 %v1144, %v1136
  %v1977 = vpack.c.b16 %v1153, %v1145
  %v1978 = vpack.c.b16 %v1154, %v1146
  %v1979 = vpack.c.b16 %v1155, %v1147
  %v1980 = vpack.c.b16 %v1156, %v1148
  %v1981 = vpack.c.b16 %v1157, %v1149
  %v1982 = vpack.c.b16 %v1158, %v1150
  %v1983 = vpack.c.b16 %v1159, %v1151
  %v1984 = vpack.c.b16 %v1160, %v1152
  %v1985 = vpack.c.b16 %v1169, %v1161
  %v1986 = vpack.c.b16 %v1170, %v1162
  %v1987 = vpack.c.b16 %v1171, %v1163
  %v1988 = vpack.c.b16 %v1172, %v1164
  %v1989 = vpack.c.b16 %v1173, %v1165
  %v1990 = vpack.c.b16 %v1174, %v1166
  %v1991 = vpack.c.b16 %v1175, %v1167
  %v1992 = vpack.c.b16 %v1176, %v1168
  %v1993 = vpack.c.b16 %v1185, %v1177
  %v1994 = vpack.c.b16 %v1186, %v1178
  %v1995 = vpack.c.b16 %v1187, %v1179
  %v1996 = vpack.c.b16 %v1188, %v1180
  %v1997 = vpack.c.b16 %v1189, %v1181
  %v1998 = vpack.c.b16 %v1190, %v1182
  %v1999 = vpack.c.b16 %v1191, %v1183
  %v2000 = vpack.c.b16 %v1192, %v1184
  %v2001 = vpack.c.b16 %v1201, %v1193
  %v2002 = vpack.c.b16 %v1202, %v1194
  %v2003 = vpack.c.b16 %v1203, %v1195
  %v2004 = vpack.c.b16 %v1204, %v1196
  %v2005 = vpack.c.b16 %v1205, %v1197
  %v2006 = vpack.c.b16 %v1206, %v1198
  %v2007 = vpack.c.b16 %v1207, %v1199
  %v2008 = vpack.c.b16 %v1208, %v1200
  %v2009 = vpack.c.b16 %v1217, %v1209
  %v2010 = vpack.c.b16 %v1218, %v1210
  %v2011 = vpack.c.b16 %v1219, %v1211
  %v2012 = vpack.c.b16 %v1220, %v1212
  %v2013 = vpack.c.b16 %v1221, %v1213
  %v2014 = vpack.c.b16 %v1222, %v1214
  %v2015 = vpack.c.b16 %v1223, %v1215
  %v2016 = vpack.c.b16 %v1224, %v1216
  %v2017 = vpack.c.b16 %v1233, %v1225
  %v2018 = vpack.c.b16 %v1234, %v1226
  %v2019 = vpack.c.b16 %v1235, %v1227
  %v2020 = vpack.c.b16 %v1236, %v1228
  %v2021 = vpack.c.b16 %v1237, %v1229
  %v2022 = vpack.c.b16 %v1238, %v1230
  %v2023 = vpack.c.b16 %v1239, %v1231
  %v2024 = vpack.c.b16 %v1240, %v1232
  %v2025 = vpack.c.b16 %v1249, %v1241
  %v2026 = vpack.c.b16 %v1250, %v1242
  %v2027 = vpack.c.b16 %v1251, %v1243
  %v2028 = vpack.c.b16 %v1252, %v1244
  %v2029 = vpack.c.b16 %v1253, %v1245
  %v2030 = vpack.c.b16 %v1254, %v1246
  %v2031 = vpack.c.b16 %v1255, %v1247
  %v2032 = vpack.c.b16 %v1256, %v1248
  %v2033 = vpack.c.b16 %v1265, %v1257
  %v2034 = vpack.c.b16 %v1266, %v1258
  %v2035 = vpack.c.b16 %v1267, %v1259
  %v2036 = vpack.c.b16 %v1268, %v1260
  %v2037 = vpack.c.b16 %v1269, %v1261
  %v2038 = vpack.c.b16 %v1270, %v1262
  %v2039 = vpack.c.b16 %v1271, %v1263
  %v2040 = vpack.c.b16 %v1272, %v1264
  %v2041 = vpack.c.b16 %v1281, %v1273
  %v2042 = vpack.c.b16 %v1282, %v1274
  %v2043 = vpack.c.b16 %v1283, %v1275
  %v2044 = vpack.c.b16 %v1284, %v1276
  %v2045 = vpack.c.b16 %v1285, %v1277
  %v2046 = vpack.c.b16 %v1286, %v1278
  %v2047 = vpack.c.b16 %v1287, %v1279
  %v2048 = vpack.c.b16 %v1288, %v1280
  %v2049 = vpack.c.b16 %v1297, %v1289
  %v2050 = vpack.c.b16 %v1298, %v1290
  %v2051 = vpack.c.b16 %v1299, %v1291
  %v2052 = vpack.c.b16 %v1300, %v1292
  %v2053 = vpack.c.b16 %v1301, %v1293
  %v2054 = vpack.c.b16 %v1302, %v1294
  %v2055 = vpack.c.b16 %v1303, %v1295
  %v2056 = vpack.c.b16 %v1304, %v1296
  %v2057 = vpack.c.b16 %v1313, %v1305
  %v2058 = vpack.c.b16 %v1314, %v1306
  %v2059 = vpack.c.b16 %v1315, %v1307
  %v2060 = vpack.c.b16 %v1316, %v1308
  %v2061 = vpack.c.b16 %v1317, %v1309
  %v2062 = vpack.c.b16 %v1318, %v1310
  %v2063 = vpack.c.b16 %v1319, %v1311
  %v2064 = vpack.c.b16 %v1320, %v1312
  %v2065 = vpack.c.b16 %v1329, %v1321
  %v2066 = vpack.c.b16 %v1330, %v1322
  %v2067 = vpack.c.b16 %v1331, %v1323
  %v2068 = vpack.c.b16 %v1332, %v1324
  %v2069 = vpack.c.b16 %v1333, %v1325
  %v2070 = vpack.c.b16 %v1334, %v1326
  %v2071 = vpack.c.b16 %v1335, %v1327
  %v2072 = vpack.c.b16 %v1336, %v1328
  %v2073 = vpack.c.b16 %v1345, %v1337
  %v2074 = vpack.c.b16 %v1346, %v1338
  %v2075 = vpack.c.b16 %v1347, %v1339
  %v2076 = vpack.c.b16 %v1348, %v1340
  %v2077 = vpack.c.b16 %v1349, %v1341
  %v2078 = vpack.c.b16 %v1350, %v1342
  %v2079 = vpack.c.b16 %v1351, %v1343
  %v2080 = vpack.c.b16 %v1352, %v1344
  %v2081 = vpack.c.b16 %v1361, %v1353
  %v2082 = vpack.c.b16 %v1362, %v1354
  %v2083 = vpack.c.b16 %v1363, %v1355
  %v2084 = vpack.c.b16 %v1364, %v1356
  %v2085 = vpack.c.b16 %v1365, %v1357
  %v2086 = vpack.c.b16 %v1366, %v1358
  %v2087 = vpack.c.b16 %v1367, %v1359
  %v2088 = vpack.c.b16 %v1368, %v1360
  %v2089 = vpack.c.b16 %v1377, %v1369
  %v2090 = vpack.c.b16 %v1378, %v1370
  %v2091 = vpack.c.b16 %v1379, %v1371
  %v2092 = vpack.c.b16 %v1380, %v1372
  %v2093 = vpack.c.b16 %v1381, %v1373
  %v2094 = vpack.c.b16 %v1382, %v1374
  %v2095 = vpack.c.b16 %v1383, %v1375
  %v2096 = vpack.c.b16 %v1384, %v1376
  %v2097 = vpack.c.b16 %v1393, %v1385
  %v2098 = vpack.c.b16 %v1394, %v1386
  %v2099 = vpack.c.b16 %v1395, %v1387
  %v2100 = vpack.c.b16 %v1396, %v1388
  %v2101 = vpack.c.b16 %v1397, %v1389
  %v2102 = vpack.c.b16 %v1398, %v1390
  %v2103 = vpack.c.b16 %v1399, %v1391
  %v2104 = vpack.c.b16 %v1400, %v1392
  %v2105 = vpack.c.b16 %v1409, %v1401
  %v2106 = vpack.c.b16 %v1410, %v1402
  %v2107 = vpack.c.b16 %v1411, %v1403
  %v2108 = vpack.c.b16 %v1412, %v1404
  %v2109 = vpack.c.b16 %v1413, %v1405
  %v2110 = vpack.c.b16 %v1414, %v1406
  %v2111 = vpack.c.b16 %v1415, %v1407
  %v2112 = vpack.c.b16 %v1416, %v1408
  %v2113 = vpack.c.b16 %v1425, %v1417
  %v2114 = vpack.c.b16 %v1426, %v1418
  %v2115 = vpack.c.b16 %v1427, %v1419
  %v2116 = vpack.c.b16 %v1428, %v1420
  %v2117 = vpack.c.b16 %v1429, %v1421
  %v2118 = vpack.c.b16 %v1430, %v1422
  %v2119 = vpack.c.b16 %v1431, %v1423
  %v2120 = vpack.c.b16 %v1432, %v1424
  %v2121 = vpack.c.b16 %v1441, %v1433
  %v2122 = vpack.c.b16 %v1442, %v1434
  %v2123 = vpack.c.b16 %v1443, %v1435
  %v2124 = vpack.c.b16 %v1444, %v1436
  %v2125 = vpack.c.b16 %v1445, %v1437
  %v2126 = vpack.c.b16 %v1446, %v1438
  %v2127 = vpack.c.b16 %v1447, %v1439
  %v2128 = vpack.c.b16 %v1448, %v1440
  %v2129 = vpack.c.b16 %v1457, %v1449
  %v2130 = vpack.c.b16 %v1458, %v1450
  %v2131 = vpack.c.b16 %v1459, %v1451
  %v2132 = vpack.c.b16 %v1460, %v1452
  %v2133 = vpack.c.b16 %v1461, %v1453
  %v2134 = vpack.c.b16 %v1462, %v1454
  %v2135 = vpack.c.b16 %v1463, %v1455
  %v2136 = vpack.c.b16 %v1464, %v1456
  %v2137 = vpack.c.b16 %v1473, %v1465
  %v2138 = vpack.c.b16 %v1474, %v1466
  %v2139 = vpack.c.b16 %v1475, %v1467
  %v2140 = vpack.c.b16 %v1476, %v1468
  %v2141 = vpack.c.b16 %v1477, %v1469
  %v2142 = vpack.c.b16 %v1478, %v1470
  %v2143 = vpack.c.b16 %v1479, %v1471
  %v2144 = vpack.c.b16 %v1480, %v1472
  %v2145 = vpack.c.b16 %v1489, %v1481
  %v2146 = vpack.c.b16 %v1490, %v1482
  %v2147 = vpack.c.b16 %v1491, %v1483
  %v2148 = vpack.c.b16 %v1492, %v1484
  %v2149 = vpack.c.b16 %v1493, %v1485
  %v2150 = vpack.c.b16 %v1494, %v1486
  %v2151 = vpack.c.b16 %v1495, %v1487
  %v2152 = vpack.c.b16 %v1496, %v1488
  %v2153 = vpack.c.b16 %v1505, %v1497
  %v2154 = vpack.c.b16 %v1506, %v1498
  %v2155 = vpack.c.b16 %v1507, %v1499
  %v2156 = vpack.c.b16 %v1508, %v1500
  %v2157 = vpack.c.b16 %v1509, %v1501
  %v2158 = vpack.c.b16 %v1510, %v1502
  %v2159 = vpack.c.b16 %v1511, %v1503
  %v2160 = vpack.c.b16 %v1512, %v1504
  %v2161 = vpack.c.b16 %v1521, %v1513
  %v2162 = vpack.c.b16 %v1522, %v1514
  %v2163 = vpack.c.b16 %v1523, %v1515
  %v2164 = vpack.c.b16 %v1524, %v1516
  %v2165 = vpack.c.b16 %v1525, %v1517
  %v2166 = vpack.c.b16 %v1526, %v1518
  %v2167 = vpack.c.b16 %v1527, %v1519
  %v2168 = vpack.c.b16 %v1528, %v1520
  %v2169 = vpack.c.b16 %v1537, %v1529
  %v2170 = vpack.c.b16 %v1538, %v1530
  %v2171 = vpack.c.b16 %v1539, %v1531
  %v2172 = vpack.c.b16 %v1540, %v1532
  %v2173 = vpack.c.b16 %v1541, %v1533
  %v2174 = vpack.c.b16 %v1542, %v1534
  %v2175 = vpack.c.b16 %v1543, %v1535
  %v2176 = vpack.c.b16 %v1544, %v1536
  %v2177 = vpack.c.b16 %v1553, %v1545
  %v2178 = vpack.c.b16 %v1554, %v1546
  %v2179 = vpack.c.b16 %v1555, %v1547
  %v2180 = vpack.c.b16 %v1556, %v1548
  %v2181 = vpack.c.b16 %v1557, %v1549
  %v2182 = vpack.c.b16 %v1558, %v1550
  %v2183 = vpack.c.b16 %v1559, %v1551
  %v2184 = vpack.c.b16 %v1560, %v1552
  %v2185 = vpack.c.b16 %v1569, %v1561
  %v2186 = vpack.c.b16 %v1570, %v1562
  %v2187 = vpack.c.b16 %v1571, %v1563
  %v2188 = vpack.c.b16 %v1572, %v1564
  %v2189 = vpack.c.b16 %v1573, %v1565
  %v2190 = vpack.c.b16 %v1574, %v1566
  %v2191 = vpack.c.b16 %v1575, %v1567
  %v2192 = vpack.c.b16 %v1576, %v1568
  %v2193 = vpack.c.b16 %v1585, %v1577
  %v2194 = vpack.c.b16 %v1586, %v1578
  %v2195 = vpack.c.b16 %v1587, %v1579
  %v2196 = vpack.c.b16 %v1588, %v1580
  %v2197 = vpack.c.b16 %v1589, %v1581
  %v2198 = vpack.c.b16 %v1590, %v1582
  %v2199 = vpack.c.b16 %v1591, %v1583
  %v2200 = vpack.c.b16 %v1592, %v1584
  %v2201 = vpack.c.b16 %v1601, %v1593
  %v2202 = vpack.c.b16 %v1602, %v1594
  %v2203 = vpack.c.b16 %v1603, %v1595
  %v2204 = vpack.c.b16 %v1604, %v1596
  %v2205 = vpack.c.b16 %v1605, %v1597
  %v2206 = vpack.c.b16 %v1606, %v1598
  %v2207 = vpack.c.b16 %v1607, %v1599
  %v2208 = vpack.c.b16 %v1608, %v1600
  %v2209 = vpack.c.b16 %v1617, %v1609
  %v2210 = vpack.c.b16 %v1618, %v1610
  %v2211 = vpack.c.b16 %v1619, %v1611
  %v2212 = vpack.c.b16 %v1620, %v1612
  %v2213 = vpack.c.b16 %v1621, %v1613
  %v2214 = vpack.c.b16 %v1622, %v1614
  %v2215 = vpack.c.b16 %v1623, %v1615
  %v2216 = vpack.c.b16 %v1624, %v1616
  %v2217 = vpack.c.b16 %v1633, %v1625
  %v2218 = vpack.c.b16 %v1634, %v1626
  %v2219 = vpack.c.b16 %v1635, %v1627
  %v2220 = vpack.c.b16 %v1636, %v1628
  %v2221 = vpack.c.b16 %v1637, %v1629
  %v2222 = vpack.c.b16 %v1638, %v1630
  %v2223 = vpack.c.b16 %v1639, %v1631
  %v2224 = vpack.c.b16 %v1640, %v1632
  %v2225 = vpack.c.b16 %v1649, %v1641
  %v2226 = vpack.c.b16 %v1650, %v1642
  %v2227 = vpack.c.b16 %v1651, %v1643
  %v2228 = vpack.c.b16 %v1652, %v1644
  %v2229 = vpack.c.b16 %v1653, %v1645
  %v2230 = vpack.c.b16 %v1654, %v1646
  %v2231 = vpack.c.b16 %v1655, %v1647
  %v2232 = vpack.c.b16 %v1656, %v1648
  %v2233 = vpack.c.b16 %v1665, %v1657
  %v2234 = vpack.c.b16 %v1666, %v1658
  %v2235 = vpack.c.b16 %v1667, %v1659
  %v2236 = vpack.c.b16 %v1668, %v1660
  %v2237 = vpack.c.b16 %v1669, %v1661
  %v2238 = vpack.c.b16 %v1670, %v1662
  %v2239 = vpack.c.b16 %v1671, %v1663
  %v2240 = vpack.c.b16 %v1672, %v1664
  %v2241 = vpack.c.b16 %v1681, %v1673
  %v2242 = vpack.c.b16 %v1682, %v1674
  %v2243 = vpack.c.b16 %v1683, %v1675
  %v2244 = vpack.c.b16 %v1684, %v1676
  %v2245 = vpack.c.b16 %v1685, %v1677
  %v2246 = vpack.c.b16 %v1686, %v1678
  %v2247 = vpack.c.b16 %v1687, %v1679
  %v2248 = vpack.c.b16 %v1688, %v1680
  %v2249 = vpack.c.b16 %v1697, %v1689
  %v2250 = vpack.c.b16 %v1698, %v1690
  %v2251 = vpack.c.b16 %v1699, %v1691
  %v2252 = vpack.c.b16 %v1700, %v1692
  %v2253 = vpack.c.b16 %v1701, %v1693
  %v2254 = vpack.c.b16 %v1702, %v1694
  %v2255 = vpack.c.b16 %v1703, %v1695
  %v2256 = vpack.c.b16 %v1704, %v1696
  %v2257 = vpack.c.b16 %v1713, %v1705
  %v2258 = vpack.c.b16 %v1714, %v1706
  %v2259 = vpack.c.b16 %v1715, %v1707
  %v2260 = vpack.c.b16 %v1716, %v1708
  %v2261 = vpack.c.b16 %v1717, %v1709
  %v2262 = vpack.c.b16 %v1718, %v1710
  %v2263 = vpack.c.b16 %v1719, %v1711
  %v2264 = vpack.c.b16 %v1720, %v1712
  %v2265 = vpack.c.b16 %v1729, %v1721
  %v2266 = vpack.c.b16 %v1730, %v1722
  %v2267 = vpack.c.b16 %v1731, %v1723
  %v2268 = vpack.c.b16 %v1732, %v1724
  %v2269 = vpack.c.b16 %v1733, %v1725
  %v2270 = vpack.c.b16 %v1734, %v1726
  %v2271 = vpack.c.b16 %v1735, %v1727
  %v2272 = vpack.c.b16 %v1736, %v1728
  %v2273 = vpack.c.b16 %v1745, %v1737
  %v2274 = vpack.c.b16 %v1746, %v1738
  %v2275 = vpack.c.b16 %v1747, %v1739
  %v2276 = vpack.c.b16 %v1748, %v1740
  %v2277 = vpack.c.b16 %v1749, %v1741
  %v2278 = vpack.c.b16 %v1750, %v1742
  %v2279 = vpack.c.b16 %v1751, %v1743
  %v2280 = vpack.c.b16 %v1752, %v1744
  %v2281 = vpack.c.b16 %v1761, %v1753
  %v2282 = vpack.c.b16 %v1762, %v1754
  %v2283 = vpack.c.b16 %v1763, %v1755
  %v2284 = vpack.c.b16 %v1764, %v1756
  %v2285 = vpack.c.b16 %v1765, %v1757
  %v2286 = vpack.c.b16 %v1766, %v1758
  %v2287 = vpack.c.b16 %v1767, %v1759
  %v2288 = vpack.c.b16 %v1768, %v1760
  %v2289 = vpack.c.b16 %v1777, %v1769
  %v2290 = vpack.c.b16 %v1778, %v1770
  %v2291 = vpack.c.b16 %v1779, %v1771
  %v2292 = vpack.c.b16 %v1780, %v1772
  %v2293 = vpack.c.b16 %v1781, %v1773
  %v2294 = vpack.c.b16 %v1782, %v1774
  %v2295 = vpack.c.b16 %v1783, %v1775
  %v2296 = vpack.c.b16 %v1784, %v1776
  %v2297 = vpack.c.b16 %v1793, %v1785
  %v2298 = vpack.c.b16 %v1794, %v1786
  %v2299 = vpack.c.b16 %v1795, %v1787
  %v2300 = vpack.c.b16 %v1796, %v1788
  %v2301 = vpack.c.b16 %v1797, %v1789
  %v2302 = vpack.c.b16 %v1798, %v1790
  %v2303 = vpack.c.b16 %v1799, %v1791
  %v2304 = vpack.c.b16 %v1800, %v1792
  %v2305 = vpack.c.b16 %v1809, %v1801
  %v2306 = vpack.c.b16 %v1810, %v1802
  %v2307 = vpack.c.b16 %v1811, %v1803
  %v2308 = vpack.c.b16 %v1812, %v1804
  %v2309 = vpack.c.b16 %v1813, %v1805
  %v2310 = vpack.c.b16 %v1814, %v1806
  %v2311 = vpack.c.b16 %v1815, %v1807
  %v2312 = vpack.c.b16 %v1816, %v1808
  %v2313 = vpack.c.b16 %v1825, %v1817
  %v2314 = vpack.c.b16 %v1826, %v1818
  %v2315 = vpack.c.b16 %v1827, %v1819
  %v2316 = vpack.c.b16 %v1828, %v1820
  %v2317 = vpack.c.b16 %v1829, %v1821
  %v2318 = vpack.c.b16 %v1830, %v1822
  %v2319 = vpack.c.b16 %v1831, %v1823
  %v2320 = vpack.c.b16 %v1832, %v1824
  %v2321 = vpack.c.b16 %v1841, %v1833
  %v2322 = vpack.c.b16 %v1842, %v1834
  %v2323 = vpack.c.b16 %v1843, %v1835
  %v2324 = vpack.c.b16 %v1844, %v1836
  %v2325 = vpack.c.b16 %v1845, %v1837
  %v2326 = vpack.c.b16 %v1846, %v1838
  %v2327 = vpack.c.b16 %v1847, %v1839
  %v2328 = vpack.c.b16 %v1848, %v1840
  %v2329 = vpack.c.b16 %v1857, %v1849
  %v2330 = vpack.c.b16 %v1858, %v1850
  %v2331 = vpack.c.b16 %v1859, %v1851
  %v2332 = vpack.c.b16 %v1860, %v1852
  %v2333 = vpack.c.b16 %v1861, %v1853
  %v2334 = vpack.c.b16 %v1862, %v1854
  %v2335 = vpack.c.b16 %v1863, %v1855
  %v2336 = vpack.c.b16 %v1864, %v1856
  %v2337 = vpack.c.b16 %v1873, %v1865
  %v2338 = vpack.c.b16 %v1874, %v1866
  %v2339 = vpack.c.b16 %v1875, %v1867
  %v2340 = vpack.c.b16 %v1876, %v1868
  %v2341 = vpack.c.b16 %v1877, %v1869
  %v2342 = vpack.c.b16 %v1878, %v1870
  %v2343 = vpack.c.b16 %v1879, %v1871
  %v2344 = vpack.c.b16 %v1880, %v1872
  %v2345 = vpack.c.b16 %v1889, %v1881
  %v2346 = vpack.c.b16 %v1890, %v1882
  %v2347 = vpack.c.b16 %v1891, %v1883
  %v2348 = vpack.c.b16 %v1892, %v1884
  %v2349 = vpack.c.b16 %v1893, %v1885
  %v2350 = vpack.c.b16 %v1894, %v1886
  %v2351 = vpack.c.b16 %v1895, %v1887
  %v2352 = vpack.c.b16 %v1896, %v1888
  %v2353 = vpack.c.b16 %v1905, %v1897
  %v2354 = vpack.c.b16 %v1906, %v1898
  %v2355 = vpack.c.b16 %v1907, %v1899
  %v2356 = vpack.c.b16 %v1908, %v1900
  %v2357 = vpack.c.b16 %v1909, %v1901
  %v2358 = vpack.c.b16 %v1910, %v1902
  %v2359 = vpack.c.b16 %v1911, %v1903
  %v2360 = vpack.c.b16 %v1912, %v1904
  %2809 = vmatprep.subr.bf16.mxu0 %v1914
  %2810 = vmatpush1.bf16.msra.mxu0 %v1913
  %2811 = vmatprep.subr.bf16.mxu0 %v1922
  %2812 = vmatpush1.bf16.msra.mxu0 %v1921
  %2813 = vmatprep.subr.bf16.mxu0 %v1930
  %2814 = vmatpush1.bf16.msra.mxu0 %v1929
  %2815 = vmatprep.subr.bf16.mxu0 %v1938
  %2816 = vmatpush1.bf16.msra.mxu0 %v1937
  %2817 = vmatprep.subr.bf16.mxu0 %v1946
  %2818 = vmatpush1.bf16.msra.mxu0 %v1945
  %2819 = vmatprep.subr.bf16.mxu0 %v1954
  %2820 = vmatpush1.bf16.msra.mxu0 %v1953
  %2821 = vmatprep.subr.bf16.mxu0 %v1962
  %2822 = vmatpush1.bf16.msra.mxu0 %v1961
  %2823 = vmatprep.subr.bf16.mxu0 %v1970
  %2824 = vmatpush1.bf16.msra.mxu0 %v1969
  %2825 = vmatprep.subr.bf16.mxu0 %v1978
  %2826 = vmatpush1.bf16.msra.mxu0 %v1977
  %2827 = vmatprep.subr.bf16.mxu0 %v1986
  %2828 = vmatpush1.bf16.msra.mxu0 %v1985
  %2829 = vmatprep.subr.bf16.mxu0 %v1994
  %2830 = vmatpush1.bf16.msra.mxu0 %v1993
  %2831 = vmatprep.subr.bf16.mxu0 %v2002
  %2832 = vmatpush1.bf16.msra.mxu0 %v2001
  %2833 = vmatprep.subr.bf16.mxu0 %v2010
  %2834 = vmatpush1.bf16.msra.mxu0 %v2009
  %2835 = vmatprep.subr.bf16.mxu0 %v2018
  %2836 = vmatpush1.bf16.msra.mxu0 %v2017
  %2837 = vmatprep.subr.bf16.mxu0 %v2026
  %2838 = vmatpush1.bf16.msra.mxu0 %v2025
  %2839 = vmatprep.subr.bf16.mxu0 %v2034
  %2840 = vmatpush1.bf16.msra.mxu0 %v2033
  %2841 = vmatprep.mubr.bf16.mxu0 %v556
  %2842 = vmatmul.mubr.bf16.gmra.mrb[0].mxu0 %v555
  %v2843 = vpop.f32.mrb[0].mxu0
  %v2844 = vadd.f32 %v496, %v2843
  %v2845 = vpop.f32.mrb[0].mxu0
  %v2846 = vadd.f32 %v500, %v2845
  %v2847 = vpop.f32.mrb[0].mxu0
  %v2848 = vadd.f32 %v496, %v2847
  %v2849 = vpop.f32.mrb[0].mxu0
  %v2850 = vadd.f32 %v500, %v2849
  %2851 = vdwg.mxu0
  %2852 = vmatprep.subr.bf16.mxu0 %v2042
  %2853 = vmatpush1.bf16.msra.mxu0 %v2041
  %2854 = vmatprep.subr.bf16.mxu0 %v2050
  %2855 = vmatpush1.bf16.msra.mxu0 %v2049
  %2856 = vmatprep.subr.bf16.mxu0 %v2058
  %2857 = vmatpush1.bf16.msra.mxu0 %v2057
  %2858 = vmatprep.subr.bf16.mxu0 %v2066
  %2859 = vmatpush1.bf16.msra.mxu0 %v2065
  %2860 = vmatprep.subr.bf16.mxu0 %v2074
  %2861 = vmatpush1.bf16.msra.mxu0 %v2073
  %2862 = vmatprep.subr.bf16.mxu0 %v2082
  %2863 = vmatpush1.bf16.msra.mxu0 %v2081
  %2864 = vmatprep.subr.bf16.mxu0 %v2090
  %2865 = vmatpush1.bf16.msra.mxu0 %v2089
  %2866 = vmatprep.subr.bf16.mxu0 %v2098
  %2867 = vmatpush1.bf16.msra.mxu0 %v2097
  %2868 = vmatprep.subr.bf16.mxu0 %v2106
  %2869 = vmatpush1.bf16.msra.mxu0 %v2105
  %2870 = vmatprep.subr.bf16.mxu0 %v2114
  %2871 = vmatpush1.bf16.msra.mxu0 %v2113
  %2872 = vmatprep.subr.bf16.mxu0 %v2122
  %2873 = vmatpush1.bf16.msra.mxu0 %v2121
  %2874 = vmatprep.subr.bf16.mxu0 %v2130
  %2875 = vmatpush1.bf16.msra.mxu0 %v2129
  %2876 = vmatprep.subr.bf16.mxu0 %v2138
  %2877 = vmatpush1.bf16.msra.mxu0 %v2137
  %2878 = vmatprep.subr.bf16.mxu0 %v2146
  %2879 = vmatpush1.bf16.msra.mxu0 %v2145
  %2880 = vmatprep.subr.bf16.mxu0 %v2154
  %2881 = vmatpush1.bf16.msra.mxu0 %v2153
  %2882 = vmatprep.subr.bf16.mxu0 %v2162
  %2883 = vmatpush1.bf16.msra.mxu0 %v2161
  %2884 = vmatprep.mubr.bf16.mxu0 %v558
  %2885 = vmatmul.mubr.bf16.gmra.mrb[0].mxu0 %v557
  %v2886 = vpop.f32.mrb[0].mxu0
  %v2887 = vadd.f32 %v2844, %v2886
  %v2888 = vpop.f32.mrb[0].mxu0
  %v2889 = vadd.f32 %v2846, %v2888
  %v2890 = vpop.f32.mrb[0].mxu0
  %v2891 = vadd.f32 %v2848, %v2890
  %v2892 = vpop.f32.mrb[0].mxu0
  %v2893 = vadd.f32 %v2850, %v2892
  %2894 = vdwg.mxu0
  %2895 = vmatprep.subr.bf16.mxu0 %v2170
  %2896 = vmatpush1.bf16.msra.mxu0 %v2169
  %2897 = vmatprep.subr.bf16.mxu0 %v2178
  %2898 = vmatpush1.bf16.msra.mxu0 %v2177
  %2899 = vmatprep.subr.bf16.mxu0 %v2186
  %2900 = vmatpush1.bf16.msra.mxu0 %v2185
  %2901 = vmatprep.subr.bf16.mxu0 %v2194
  %2902 = vmatpush1.bf16.msra.mxu0 %v2193
  %2903 = vmatprep.subr.bf16.mxu0 %v2202
  %2904 = vmatpush1.bf16.msra.mxu0 %v2201
  %2905 = vmatprep.subr.bf16.mxu0 %v2210
  %2906 = vmatpush1.bf16.msra.mxu0 %v2209
  %2907 = vmatprep.subr.bf16.mxu0 %v2218
  %2908 = vmatpush1.bf16.msra.mxu0 %v2217
  %2909 = vmatprep.subr.bf16.mxu0 %v2226
  %2910 = vmatpush1.bf16.msra.mxu0 %v2225
  %2911 = vmatprep.subr.bf16.mxu0 %v2234
  %2912 = vmatpush1.bf16.msra.mxu0 %v2233
  %2913 = vmatprep.subr.bf16.mxu0 %v2242
  %2914 = vmatpush1.bf16.msra.mxu0 %v2241
  %2915 = vmatprep.subr.bf16.mxu0 %v2250
  %2916 = vmatpush1.bf16.msra.mxu0 %v2249
  %2917 = vmatprep.subr.bf16.mxu0 %v2258
  %2918 = vmatpush1.bf16.msra.mxu0 %v2257
  %2919 = vmatprep.subr.bf16.mxu0 %v2266
  %2920 = vmatpush1.bf16.msra.mxu0 %v2265
  %2921 = vmatprep.subr.bf16.mxu0 %v2274
  %2922 = vmatpush1.bf16.msra.mxu0 %v2273
  %2923 = vmatprep.subr.bf16.mxu0 %v2282
  %2924 = vmatpush1.bf16.msra.mxu0 %v2281
  %2925 = vmatprep.subr.bf16.mxu0 %v2290
  %2926 = vmatpush1.bf16.msra.mxu0 %v2289
  %2927 = vmatprep.mubr.bf16.mxu0 %v560
  %2928 = vmatmul.mubr.bf16.gmra.mrb[0].mxu0 %v559
  %v2929 = vpop.f32.mrb[0].mxu0
  %v2930 = vadd.f32 %v2887, %v2929
  %v2931 = vpop.f32.mrb[0].mxu0
  %v2932 = vadd.f32 %v2889, %v2931
  %v2933 = vpop.f32.mrb[0].mxu0
  %v2934 = vadd.f32 %v2891, %v2933
  %v2935 = vpop.f32.mrb[0].mxu0
  %v2936 = vadd.f32 %v2893, %v2935
  %2937 = vdwg.mxu0
  %2938 = vmatprep.subr.bf16.mxu0 %v2298
  %2939 = vmatpush1.bf16.msra.mxu0 %v2297
  %2940 = vmatprep.subr.bf16.mxu0 %v2306
  %2941 = vmatpush1.bf16.msra.mxu0 %v2305
  %2942 = vmatprep.subr.bf16.mxu0 %v2314
  %2943 = vmatpush1.bf16.msra.mxu0 %v2313
  %2944 = vmatprep.subr.bf16.mxu0 %v2322
  %2945 = vmatpush1.bf16.msra.mxu0 %v2321
  %2946 = vmatprep.subr.bf16.mxu0 %v2330
  %2947 = vmatpush1.bf16.msra.mxu0 %v2329
  %2948 = vmatprep.subr.bf16.mxu0 %v2338
  %2949 = vmatpush1.bf16.msra.mxu0 %v2337
  %2950 = vmatprep.subr.bf16.mxu0 %v2346
  %2951 = vmatpush1.bf16.msra.mxu0 %v2345
  %2952 = vmatprep.subr.bf16.mxu0 %v2354
  %2953 = vmatpush1.bf16.msra.mxu0 %v2353
  %2954 = vmatprep.subr.bf16.mxu0 0
  %2955 = vmatpush1.bf16.msra.mxu0 0
  %2956 = vmatprep.subr.bf16.mxu0 0
  %2957 = vmatpush1.bf16.msra.mxu0 0
  %2958 = vmatprep.subr.bf16.mxu0 0
  %2959 = vmatpush1.bf16.msra.mxu0 0
  %2960 = vmatprep.subr.bf16.mxu0 0
  %2961 = vmatpush1.bf16.msra.mxu0 0
  %2962 = vmatprep.subr.bf16.mxu0 0
  %2963 = vmatpush1.bf16.msra.mxu0 0
  %2964 = vmatprep.subr.bf16.mxu0 0
  %2965 = vmatpush1.bf16.msra.mxu0 0
  %2966 = vmatprep.subr.bf16.mxu0 0
  %2967 = vmatpush1.bf16.msra.mxu0 0
  %2968 = vmatprep.subr.bf16.mxu0 0
  %2969 = vmatpush1.bf16.msra.mxu0 0
  %2970 = vmatprep.mubr.bf16.mxu0 0
  %2971 = vmatmul.mubr.bf16.gmra.mrb[0].mxu0 %v561
  %v2972 = vpop.f32.mrb[0].mxu0
  %v2973 = vadd.f32 %v2930, %v2972
  %v2974 = vpop.f32.mrb[0].mxu0
  %v2975 = vadd.f32 %v2932, %v2974
  %v2976 = vpop.f32.mrb[0].mxu0
  %v2977 = vadd.f32 %v2934, %v2976
  %v2978 = vpop.f32.mrb[0].mxu0
  %v2979 = vadd.f32 %v2936, %v2978
  %2980 = vdwg.mxu0
  %2981 = vmatprep.subr.bf16.mxu0 %v1916
  %2982 = vmatpush1.bf16.msra.mxu0 %v1915
  %2983 = vmatprep.subr.bf16.mxu0 %v1924
  %2984 = vmatpush1.bf16.msra.mxu0 %v1923
  %2985 = vmatprep.subr.bf16.mxu0 %v1932
  %2986 = vmatpush1.bf16.msra.mxu0 %v1931
  %2987 = vmatprep.subr.bf16.mxu0 %v1940
  %2988 = vmatpush1.bf16.msra.mxu0 %v1939
  %2989 = vmatprep.subr.bf16.mxu0 %v1948
  %2990 = vmatpush1.bf16.msra.mxu0 %v1947
  %2991 = vmatprep.subr.bf16.mxu0 %v1956
  %2992 = vmatpush1.bf16.msra.mxu0 %v1955
  %2993 = vmatprep.subr.bf16.mxu0 %v1964
  %2994 = vmatpush1.bf16.msra.mxu0 %v1963
  %2995 = vmatprep.subr.bf16.mxu0 %v1972
  %2996 = vmatpush1.bf16.msra.mxu0 %v1971
  %2997 = vmatprep.subr.bf16.mxu0 %v1980
  %2998 = vmatpush1.bf16.msra.mxu0 %v1979
  %2999 = vmatprep.subr.bf16.mxu0 %v1988
  %3000 = vmatpush1.bf16.msra.mxu0 %v1987
  %3001 = vmatprep.subr.bf16.mxu0 %v1996
  %3002 = vmatpush1.bf16.msra.mxu0 %v1995
  %3003 = vmatprep.subr.bf16.mxu0 %v2004
  %3004 = vmatpush1.bf16.msra.mxu0 %v2003
  %3005 = vmatprep.subr.bf16.mxu0 %v2012
  %3006 = vmatpush1.bf16.msra.mxu0 %v2011
  %3007 = vmatprep.subr.bf16.mxu0 %v2020
  %3008 = vmatpush1.bf16.msra.mxu0 %v2019
  %3009 = vmatprep.subr.bf16.mxu0 %v2028
  %3010 = vmatpush1.bf16.msra.mxu0 %v2027
  %3011 = vmatprep.subr.bf16.mxu0 %v2036
  %3012 = vmatpush1.bf16.msra.mxu0 %v2035
  %3013 = vmatprep.mubr.bf16.mxu0 %v556
  %3014 = vmatmul.mubr.bf16.gmra.mrb[0].mxu0 %v555
  %v3015 = vpop.f32.mrb[0].mxu0
  %v3016 = vadd.f32 %v504, %v3015
  %v3017 = vpop.f32.mrb[0].mxu0
  %v3018 = vadd.f32 %v508, %v3017
  %v3019 = vpop.f32.mrb[0].mxu0
  %v3020 = vadd.f32 %v504, %v3019
  %v3021 = vpop.f32.mrb[0].mxu0
  %v3022 = vadd.f32 %v508, %v3021
  %3023 = vdwg.mxu0
  %3024 = vmatprep.subr.bf16.mxu0 %v2044
  %3025 = vmatpush1.bf16.msra.mxu0 %v2043
  %3026 = vmatprep.subr.bf16.mxu0 %v2052
  %3027 = vmatpush1.bf16.msra.mxu0 %v2051
  %3028 = vmatprep.subr.bf16.mxu0 %v2060
  %3029 = vmatpush1.bf16.msra.mxu0 %v2059
  %3030 = vmatprep.subr.bf16.mxu0 %v2068
  %3031 = vmatpush1.bf16.msra.mxu0 %v2067
  %3032 = vmatprep.subr.bf16.mxu0 %v2076
  %3033 = vmatpush1.bf16.msra.mxu0 %v2075
  %3034 = vmatprep.subr.bf16.mxu0 %v2084
  %3035 = vmatpush1.bf16.msra.mxu0 %v2083
  %3036 = vmatprep.subr.bf16.mxu0 %v2092
  %3037 = vmatpush1.bf16.msra.mxu0 %v2091
  %3038 = vmatprep.subr.bf16.mxu0 %v2100
  %3039 = vmatpush1.bf16.msra.mxu0 %v2099
  %3040 = vmatprep.subr.bf16.mxu0 %v2108
  %3041 = vmatpush1.bf16.msra.mxu0 %v2107
  %3042 = vmatprep.subr.bf16.mxu0 %v2116
  %3043 = vmatpush1.bf16.msra.mxu0 %v2115
  %3044 = vmatprep.subr.bf16.mxu0 %v2124
  %3045 = vmatpush1.bf16.msra.mxu0 %v2123
  %3046 = vmatprep.subr.bf16.mxu0 %v2132
  %3047 = vmatpush1.bf16.msra.mxu0 %v2131
  %3048 = vmatprep.subr.bf16.mxu0 %v2140
  %3049 = vmatpush1.bf16.msra.mxu0 %v2139
  %3050 = vmatprep.subr.bf16.mxu0 %v2148
  %3051 = vmatpush1.bf16.msra.mxu0 %v2147
  %3052 = vmatprep.subr.bf16.mxu0 %v2156
  %3053 = vmatpush1.bf16.msra.mxu0 %v2155
  %3054 = vmatprep.subr.bf16.mxu0 %v2164
  %3055 = vmatpush1.bf16.msra.mxu0 %v2163
  %3056 = vmatprep.mubr.bf16.mxu0 %v558
  %3057 = vmatmul.mubr.bf16.gmra.mrb[0].mxu0 %v557
  %v3058 = vpop.f32.mrb[0].mxu0
  %v3059 = vadd.f32 %v3016, %v3058
  %v3060 = vpop.f32.mrb[0].mxu0
  %v3061 = vadd.f32 %v3018, %v3060
  %v3062 = vpop.f32.mrb[0].mxu0
  %v3063 = vadd.f32 %v3020, %v3062
  %v3064 = vpop.f32.mrb[0].mxu0
  %v3065 = vadd.f32 %v3022, %v3064
  %3066 = vdwg.mxu0
  %3067 = vmatprep.subr.bf16.mxu0 %v2172
  %3068 = vmatpush1.bf16.msra.mxu0 %v2171
  %3069 = vmatprep.subr.bf16.mxu0 %v2180
  %3070 = vmatpush1.bf16.msra.mxu0 %v2179
  %3071 = vmatprep.subr.bf16.mxu0 %v2188
  %3072 = vmatpush1.bf16.msra.mxu0 %v2187
  %3073 = vmatprep.subr.bf16.mxu0 %v2196
  %3074 = vmatpush1.bf16.msra.mxu0 %v2195
  %3075 = vmatprep.subr.bf16.mxu0 %v2204
  %3076 = vmatpush1.bf16.msra.mxu0 %v2203
  %3077 = vmatprep.subr.bf16.mxu0 %v2212
  %3078 = vmatpush1.bf16.msra.mxu0 %v2211
  %3079 = vmatprep.subr.bf16.mxu0 %v2220
  %3080 = vmatpush1.bf16.msra.mxu0 %v2219
  %3081 = vmatprep.subr.bf16.mxu0 %v2228
  %3082 = vmatpush1.bf16.msra.mxu0 %v2227
  %3083 = vmatprep.subr.bf16.mxu0 %v2236
  %3084 = vmatpush1.bf16.msra.mxu0 %v2235
  %3085 = vmatprep.subr.bf16.mxu0 %v2244
  %3086 = vmatpush1.bf16.msra.mxu0 %v2243
  %3087 = vmatprep.subr.bf16.mxu0 %v2252
  %3088 = vmatpush1.bf16.msra.mxu0 %v2251
  %3089 = vmatprep.subr.bf16.mxu0 %v2260
  %3090 = vmatpush1.bf16.msra.mxu0 %v2259
  %3091 = vmatprep.subr.bf16.mxu0 %v2268
  %3092 = vmatpush1.bf16.msra.mxu0 %v2267
  %3093 = vmatprep.subr.bf16.mxu0 %v2276
  %3094 = vmatpush1.bf16.msra.mxu0 %v2275
  %3095 = vmatprep.subr.bf16.mxu0 %v2284
  %3096 = vmatpush1.bf16.msra.mxu0 %v2283
  %3097 = vmatprep.subr.bf16.mxu0 %v2292
  %3098 = vmatpush1.bf16.msra.mxu0 %v2291
  %3099 = vmatprep.mubr.bf16.mxu0 %v560
  %3100 = vmatmul.mubr.bf16.gmra.mrb[0].mxu0 %v559
  %v3101 = vpop.f32.mrb[0].mxu0
  %v3102 = vadd.f32 %v3059, %v3101
  %v3103 = vpop.f32.mrb[0].mxu0
  %v3104 = vadd.f32 %v3061, %v3103
  %v3105 = vpop.f32.mrb[0].mxu0
  %v3106 = vadd.f32 %v3063, %v3105
  %v3107 = vpop.f32.mrb[0].mxu0
  %v3108 = vadd.f32 %v3065, %v3107
  %3109 = vdwg.mxu0
  %3110 = vmatprep.subr.bf16.mxu0 %v2300
  %3111 = vmatpush1.bf16.msra.mxu0 %v2299
  %3112 = vmatprep.subr.bf16.mxu0 %v2308
  %3113 = vmatpush1.bf16.msra.mxu0 %v2307
  %3114 = vmatprep.subr.bf16.mxu0 %v2316
  %3115 = vmatpush1.bf16.msra.mxu0 %v2315
  %3116 = vmatprep.subr.bf16.mxu0 %v2324
  %3117 = vmatpush1.bf16.msra.mxu0 %v2323
  %3118 = vmatprep.subr.bf16.mxu0 %v2332
  %3119 = vmatpush1.bf16.msra.mxu0 %v2331
  %3120 = vmatprep.subr.bf16.mxu0 %v2340
  %3121 = vmatpush1.bf16.msra.mxu0 %v2339
  %3122 = vmatprep.subr.bf16.mxu0 %v2348
  %3123 = vmatpush1.bf16.msra.mxu0 %v2347
  %3124 = vmatprep.subr.bf16.mxu0 %v2356
  %3125 = vmatpush1.bf16.msra.mxu0 %v2355
  %3126 = vmatprep.subr.bf16.mxu0 0
  %3127 = vmatpush1.bf16.msra.mxu0 0
  %3128 = vmatprep.subr.bf16.mxu0 0
  %3129 = vmatpush1.bf16.msra.mxu0 0
  %3130 = vmatprep.subr.bf16.mxu0 0
  %3131 = vmatpush1.bf16.msra.mxu0 0
  %3132 = vmatprep.subr.bf16.mxu0 0
  %3133 = vmatpush1.bf16.msra.mxu0 0
  %3134 = vmatprep.subr.bf16.mxu0 0
  %3135 = vmatpush1.bf16.msra.mxu0 0
  %3136 = vmatprep.subr.bf16.mxu0 0
  %3137 = vmatpush1.bf16.msra.mxu0 0
  %3138 = vmatprep.subr.bf16.mxu0 0
  %3139 = vmatpush1.bf16.msra.mxu0 0
  %3140 = vmatprep.subr.bf16.mxu0 0
  %3141 = vmatpush1.bf16.msra.mxu0 0
  %3142 = vmatprep.mubr.bf16.mxu0 0
  %3143 = vmatmul.mubr.bf16.gmra.mrb[0].mxu0 %v561
  %v3144 = vpop.f32.mrb[0].mxu0
  %v3145 = vadd.f32 %v3102, %v3144
  %v3146 = vpop.f32.mrb[0].mxu0
  %v3147 = vadd.f32 %v3104, %v3146
  %v3148 = vpop.f32.mrb[0].mxu0
  %v3149 = vadd.f32 %v3106, %v3148
  %v3150 = vpop.f32.mrb[0].mxu0
  %v3151 = vadd.f32 %v3108, %v3150
  %3152 = vdwg.mxu0
  %3153 = vmatprep.subr.bf16.mxu0 %v1918
  %3154 = vmatpush1.bf16.msra.mxu0 %v1917
  %3155 = vmatprep.subr.bf16.mxu0 %v1926
  %3156 = vmatpush1.bf16.msra.mxu0 %v1925
  %3157 = vmatprep.subr.bf16.mxu0 %v1934
  %3158 = vmatpush1.bf16.msra.mxu0 %v1933
  %3159 = vmatprep.subr.bf16.mxu0 %v1942
  %3160 = vmatpush1.bf16.msra.mxu0 %v1941
  %3161 = vmatprep.subr.bf16.mxu0 %v1950
  %3162 = vmatpush1.bf16.msra.mxu0 %v1949
  %3163 = vmatprep.subr.bf16.mxu0 %v1958
  %3164 = vmatpush1.bf16.msra.mxu0 %v1957
  %3165 = vmatprep.subr.bf16.mxu0 %v1966
  %3166 = vmatpush1.bf16.msra.mxu0 %v1965
  %3167 = vmatprep.subr.bf16.mxu0 %v1974
  %3168 = vmatpush1.bf16.msra.mxu0 %v1973
  %3169 = vmatprep.subr.bf16.mxu0 %v1982
  %3170 = vmatpush1.bf16.msra.mxu0 %v1981
  %3171 = vmatprep.subr.bf16.mxu0 %v1990
  %3172 = vmatpush1.bf16.msra.mxu0 %v1989
  %3173 = vmatprep.subr.bf16.mxu0 %v1998
  %3174 = vmatpush1.bf16.msra.mxu0 %v1997
  %3175 = vmatprep.subr.bf16.mxu0 %v2006
  %3176 = vmatpush1.bf16.msra.mxu0 %v2005
  %3177 = vmatprep.subr.bf16.mxu0 %v2014
  %3178 = vmatpush1.bf16.msra.mxu0 %v2013
  %3179 = vmatprep.subr.bf16.mxu0 %v2022
  %3180 = vmatpush1.bf16.msra.mxu0 %v2021
  %3181 = vmatprep.subr.bf16.mxu0 %v2030
  %3182 = vmatpush1.bf16.msra.mxu0 %v2029
  %3183 = vmatprep.subr.bf16.mxu0 %v2038
  %3184 = vmatpush1.bf16.msra.mxu0 %v2037
  %3185 = vmatprep.mubr.bf16.mxu0 %v556
  %3186 = vmatmul.mubr.bf16.gmra.mrb[0].mxu0 %v555
  %v3187 = vpop.f32.mrb[0].mxu0
  %v3188 = vadd.f32 %v512, %v3187
  %v3189 = vpop.f32.mrb[0].mxu0
  %v3190 = vadd.f32 %v516, %v3189
  %v3191 = vpop.f32.mrb[0].mxu0
  %v3192 = vadd.f32 %v512, %v3191
  %v3193 = vpop.f32.mrb[0].mxu0
  %v3194 = vadd.f32 %v516, %v3193
  %3195 = vdwg.mxu0
  %3196 = vmatprep.subr.bf16.mxu0 %v2046
  %3197 = vmatpush1.bf16.msra.mxu0 %v2045
  %3198 = vmatprep.subr.bf16.mxu0 %v2054
  %3199 = vmatpush1.bf16.msra.mxu0 %v2053
  %3200 = vmatprep.subr.bf16.mxu0 %v2062
  %3201 = vmatpush1.bf16.msra.mxu0 %v2061
  %3202 = vmatprep.subr.bf16.mxu0 %v2070
  %3203 = vmatpush1.bf16.msra.mxu0 %v2069
  %3204 = vmatprep.subr.bf16.mxu0 %v2078
  %3205 = vmatpush1.bf16.msra.mxu0 %v2077
  %3206 = vmatprep.subr.bf16.mxu0 %v2086
  %3207 = vmatpush1.bf16.msra.mxu0 %v2085
  %3208 = vmatprep.subr.bf16.mxu0 %v2094
  %3209 = vmatpush1.bf16.msra.mxu0 %v2093
  %3210 = vmatprep.subr.bf16.mxu0 %v2102
  %3211 = vmatpush1.bf16.msra.mxu0 %v2101
  %3212 = vmatprep.subr.bf16.mxu0 %v2110
  %3213 = vmatpush1.bf16.msra.mxu0 %v2109
  %3214 = vmatprep.subr.bf16.mxu0 %v2118
  %3215 = vmatpush1.bf16.msra.mxu0 %v2117
  %3216 = vmatprep.subr.bf16.mxu0 %v2126
  %3217 = vmatpush1.bf16.msra.mxu0 %v2125
  %3218 = vmatprep.subr.bf16.mxu0 %v2134
  %3219 = vmatpush1.bf16.msra.mxu0 %v2133
  %3220 = vmatprep.subr.bf16.mxu0 %v2142
  %3221 = vmatpush1.bf16.msra.mxu0 %v2141
  %3222 = vmatprep.subr.bf16.mxu0 %v2150
  %3223 = vmatpush1.bf16.msra.mxu0 %v2149
  %3224 = vmatprep.subr.bf16.mxu0 %v2158
  %3225 = vmatpush1.bf16.msra.mxu0 %v2157
  %3226 = vmatprep.subr.bf16.mxu0 %v2166
  %3227 = vmatpush1.bf16.msra.mxu0 %v2165
  %3228 = vmatprep.mubr.bf16.mxu0 %v558
  %3229 = vmatmul.mubr.bf16.gmra.mrb[0].mxu0 %v557
  %v3230 = vpop.f32.mrb[0].mxu0
  %v3231 = vadd.f32 %v3188, %v3230
  %v3232 = vpop.f32.mrb[0].mxu0
  %v3233 = vadd.f32 %v3190, %v3232
  %v3234 = vpop.f32.mrb[0].mxu0
  %v3235 = vadd.f32 %v3192, %v3234
  %v3236 = vpop.f32.mrb[0].mxu0
  %v3237 = vadd.f32 %v3194, %v3236
  %3238 = vdwg.mxu0
  %3239 = vmatprep.subr.bf16.mxu0 %v2174
  %3240 = vmatpush1.bf16.msra.mxu0 %v2173
  %3241 = vmatprep.subr.bf16.mxu0 %v2182
  %3242 = vmatpush1.bf16.msra.mxu0 %v2181
  %3243 = vmatprep.subr.bf16.mxu0 %v2190
  %3244 = vmatpush1.bf16.msra.mxu0 %v2189
  %3245 = vmatprep.subr.bf16.mxu0 %v2198
  %3246 = vmatpush1.bf16.msra.mxu0 %v2197
  %3247 = vmatprep.subr.bf16.mxu0 %v2206
  %3248 = vmatpush1.bf16.msra.mxu0 %v2205
  %3249 = vmatprep.subr.bf16.mxu0 %v2214
  %3250 = vmatpush1.bf16.msra.mxu0 %v2213
  %3251 = vmatprep.subr.bf16.mxu0 %v2222
  %3252 = vmatpush1.bf16.msra.mxu0 %v2221
  %3253 = vmatprep.subr.bf16.mxu0 %v2230
  %3254 = vmatpush1.bf16.msra.mxu0 %v2229
  %3255 = vmatprep.subr.bf16.mxu0 %v2238
  %3256 = vmatpush1.bf16.msra.mxu0 %v2237
  %3257 = vmatprep.subr.bf16.mxu0 %v2246
  %3258 = vmatpush1.bf16.msra.mxu0 %v2245
  %3259 = vmatprep.subr.bf16.mxu0 %v2254
  %3260 = vmatpush1.bf16.msra.mxu0 %v2253
  %3261 = vmatprep.subr.bf16.mxu0 %v2262
  %3262 = vmatpush1.bf16.msra.mxu0 %v2261
  %3263 = vmatprep.subr.bf16.mxu0 %v2270
  %3264 = vmatpush1.bf16.msra.mxu0 %v2269
  %3265 = vmatprep.subr.bf16.mxu0 %v2278
  %3266 = vmatpush1.bf16.msra.mxu0 %v2277
  %3267 = vmatprep.subr.bf16.mxu0 %v2286
  %3268 = vmatpush1.bf16.msra.mxu0 %v2285
  %3269 = vmatprep.subr.bf16.mxu0 %v2294
  %3270 = vmatpush1.bf16.msra.mxu0 %v2293
  %3271 = vmatprep.mubr.bf16.mxu0 %v560
  %3272 = vmatmul.mubr.bf16.gmra.mrb[0].mxu0 %v559
  %v3273 = vpop.f32.mrb[0].mxu0
  %v3274 = vadd.f32 %v3231, %v3273
  %v3275 = vpop.f32.mrb[0].mxu0
  %v3276 = vadd.f32 %v3233, %v3275
  %v3277 = vpop.f32.mrb[0].mxu0
  %v3278 = vadd.f32 %v3235, %v3277
  %v3279 = vpop.f32.mrb[0].mxu0
  %v3280 = vadd.f32 %v3237, %v3279
  %3281 = vdwg.mxu0
  %3282 = vmatprep.subr.bf16.mxu0 %v2302
  %3283 = vmatpush1.bf16.msra.mxu0 %v2301
  %3284 = vmatprep.subr.bf16.mxu0 %v2310
  %3285 = vmatpush1.bf16.msra.mxu0 %v2309
  %3286 = vmatprep.subr.bf16.mxu0 %v2318
  %3287 = vmatpush1.bf16.msra.mxu0 %v2317
  %3288 = vmatprep.subr.bf16.mxu0 %v2326
  %3289 = vmatpush1.bf16.msra.mxu0 %v2325
  %3290 = vmatprep.subr.bf16.mxu0 %v2334
  %3291 = vmatpush1.bf16.msra.mxu0 %v2333
  %3292 = vmatprep.subr.bf16.mxu0 %v2342
  %3293 = vmatpush1.bf16.msra.mxu0 %v2341
  %3294 = vmatprep.subr.bf16.mxu0 %v2350
  %3295 = vmatpush1.bf16.msra.mxu0 %v2349
  %3296 = vmatprep.subr.bf16.mxu0 %v2358
  %3297 = vmatpush1.bf16.msra.mxu0 %v2357
  %3298 = vmatprep.subr.bf16.mxu0 0
  %3299 = vmatpush1.bf16.msra.mxu0 0
  %3300 = vmatprep.subr.bf16.mxu0 0
  %3301 = vmatpush1.bf16.msra.mxu0 0
  %3302 = vmatprep.subr.bf16.mxu0 0
  %3303 = vmatpush1.bf16.msra.mxu0 0
  %3304 = vmatprep.subr.bf16.mxu0 0
  %3305 = vmatpush1.bf16.msra.mxu0 0
  %3306 = vmatprep.subr.bf16.mxu0 0
  %3307 = vmatpush1.bf16.msra.mxu0 0
  %3308 = vmatprep.subr.bf16.mxu0 0
  %3309 = vmatpush1.bf16.msra.mxu0 0
  %3310 = vmatprep.subr.bf16.mxu0 0
  %3311 = vmatpush1.bf16.msra.mxu0 0
  %3312 = vmatprep.subr.bf16.mxu0 0
  %3313 = vmatpush1.bf16.msra.mxu0 0
  %3314 = vmatprep.mubr.bf16.mxu0 0
  %3315 = vmatmul.mubr.bf16.gmra.mrb[0].mxu0 %v561
  %v3316 = vpop.f32.mrb[0].mxu0
  %v3317 = vadd.f32 %v3274, %v3316
  %v3318 = vpop.f32.mrb[0].mxu0
  %v3319 = vadd.f32 %v3276, %v3318
  %v3320 = vpop.f32.mrb[0].mxu0
  %v3321 = vadd.f32 %v3278, %v3320
  %v3322 = vpop.f32.mrb[0].mxu0
  %v3323 = vadd.f32 %v3280, %v3322
  %3324 = vdwg.mxu0
  %3325 = vmatprep.subr.bf16.mxu0 %v1920
  %3326 = vmatpush1.bf16.msra.mxu0 %v1919
  %3327 = vmatprep.subr.bf16.mxu0 %v1928
  %3328 = vmatpush1.bf16.msra.mxu0 %v1927
  %3329 = vmatprep.subr.bf16.mxu0 %v1936
  %3330 = vmatpush1.bf16.msra.mxu0 %v1935
  %3331 = vmatprep.subr.bf16.mxu0 %v1944
  %3332 = vmatpush1.bf16.msra.mxu0 %v1943
  %3333 = vmatprep.subr.bf16.mxu0 %v1952
  %3334 = vmatpush1.bf16.msra.mxu0 %v1951
  %3335 = vmatprep.subr.bf16.mxu0 %v1960
  %3336 = vmatpush1.bf16.msra.mxu0 %v1959
  %3337 = vmatprep.subr.bf16.mxu0 %v1968
  %3338 = vmatpush1.bf16.msra.mxu0 %v1967
  %3339 = vmatprep.subr.bf16.mxu0 %v1976
  %3340 = vmatpush1.bf16.msra.mxu0 %v1975
  %3341 = vmatprep.subr.bf16.mxu0 %v1984
  %3342 = vmatpush1.bf16.msra.mxu0 %v1983
  %3343 = vmatprep.subr.bf16.mxu0 %v1992
  %3344 = vmatpush1.bf16.msra.mxu0 %v1991
  %3345 = vmatprep.subr.bf16.mxu0 %v2000
  %3346 = vmatpush1.bf16.msra.mxu0 %v1999
  %3347 = vmatprep.subr.bf16.mxu0 %v2008
  %3348 = vmatpush1.bf16.msra.mxu0 %v2007
  %3349 = vmatprep.subr.bf16.mxu0 %v2016
  %3350 = vmatpush1.bf16.msra.mxu0 %v2015
  %3351 = vmatprep.subr.bf16.mxu0 %v2024
  %3352 = vmatpush1.bf16.msra.mxu0 %v2023
  %3353 = vmatprep.subr.bf16.mxu0 %v2032
  %3354 = vmatpush1.bf16.msra.mxu0 %v2031
  %3355 = vmatprep.subr.bf16.mxu0 %v2040
  %3356 = vmatpush1.bf16.msra.mxu0 %v2039
  %3357 = vmatprep.mubr.bf16.mxu0 %v556
  %3358 = vmatmul.mubr.bf16.gmra.mrb[0].mxu0 %v555
  %v3359 = vpop.f32.mrb[0].mxu0
  %v3360 = vadd.f32 %v520, %v3359
  %v3361 = vpop.f32.mrb[0].mxu0
  %v3362 = vadd.f32 %v524, %v3361
  %v3363 = vpop.f32.mrb[0].mxu0
  %v3364 = vadd.f32 %v520, %v3363
  %v3365 = vpop.f32.mrb[0].mxu0
  %v3366 = vadd.f32 %v524, %v3365
  %3367 = vdwg.mxu0
  %3368 = vmatprep.subr.bf16.mxu0 %v2048
  %3369 = vmatpush1.bf16.msra.mxu0 %v2047
  %3370 = vmatprep.subr.bf16.mxu0 %v2056
  %3371 = vmatpush1.bf16.msra.mxu0 %v2055
  %3372 = vmatprep.subr.bf16.mxu0 %v2064
  %3373 = vmatpush1.bf16.msra.mxu0 %v2063
  %3374 = vmatprep.subr.bf16.mxu0 %v2072
  %3375 = vmatpush1.bf16.msra.mxu0 %v2071
  %3376 = vmatprep.subr.bf16.mxu0 %v2080
  %3377 = vmatpush1.bf16.msra.mxu0 %v2079
  %3378 = vmatprep.subr.bf16.mxu0 %v2088
  %3379 = vmatpush1.bf16.msra.mxu0 %v2087
  %3380 = vmatprep.subr.bf16.mxu0 %v2096
  %3381 = vmatpush1.bf16.msra.mxu0 %v2095
  %3382 = vmatprep.subr.bf16.mxu0 %v2104
  %3383 = vmatpush1.bf16.msra.mxu0 %v2103
  %3384 = vmatprep.subr.bf16.mxu0 %v2112
  %3385 = vmatpush1.bf16.msra.mxu0 %v2111
  %3386 = vmatprep.subr.bf16.mxu0 %v2120
  %3387 = vmatpush1.bf16.msra.mxu0 %v2119
  %3388 = vmatprep.subr.bf16.mxu0 %v2128
  %3389 = vmatpush1.bf16.msra.mxu0 %v2127
  %3390 = vmatprep.subr.bf16.mxu0 %v2136
  %3391 = vmatpush1.bf16.msra.mxu0 %v2135
  %3392 = vmatprep.subr.bf16.mxu0 %v2144
  %3393 = vmatpush1.bf16.msra.mxu0 %v2143
  %3394 = vmatprep.subr.bf16.mxu0 %v2152
  %3395 = vmatpush1.bf16.msra.mxu0 %v2151
  %3396 = vmatprep.subr.bf16.mxu0 %v2160
  %3397 = vmatpush1.bf16.msra.mxu0 %v2159
  %3398 = vmatprep.subr.bf16.mxu0 %v2168
  %3399 = vmatpush1.bf16.msra.mxu0 %v2167
  %3400 = vmatprep.mubr.bf16.mxu0 %v558
  %3401 = vmatmul.mubr.bf16.gmra.mrb[0].mxu0 %v557
  %v3402 = vpop.f32.mrb[0].mxu0
  %v3403 = vadd.f32 %v3360, %v3402
  %v3404 = vpop.f32.mrb[0].mxu0
  %v3405 = vadd.f32 %v3362, %v3404
  %v3406 = vpop.f32.mrb[0].mxu0
  %v3407 = vadd.f32 %v3364, %v3406
  %v3408 = vpop.f32.mrb[0].mxu0
  %v3409 = vadd.f32 %v3366, %v3408
  %3410 = vdwg.mxu0
  %3411 = vmatprep.subr.bf16.mxu0 %v2176
  %3412 = vmatpush1.bf16.msra.mxu0 %v2175
  %3413 = vmatprep.subr.bf16.mxu0 %v2184
  %3414 = vmatpush1.bf16.msra.mxu0 %v2183
  %3415 = vmatprep.subr.bf16.mxu0 %v2192
  %3416 = vmatpush1.bf16.msra.mxu0 %v2191
  %3417 = vmatprep.subr.bf16.mxu0 %v2200
  %3418 = vmatpush1.bf16.msra.mxu0 %v2199
  %3419 = vmatprep.subr.bf16.mxu0 %v2208
  %3420 = vmatpush1.bf16.msra.mxu0 %v2207
  %3421 = vmatprep.subr.bf16.mxu0 %v2216
  %3422 = vmatpush1.bf16.msra.mxu0 %v2215
  %3423 = vmatprep.subr.bf16.mxu0 %v2224
  %3424 = vmatpush1.bf16.msra.mxu0 %v2223
  %3425 = vmatprep.subr.bf16.mxu0 %v2232
  %3426 = vmatpush1.bf16.msra.mxu0 %v2231
  %3427 = vmatprep.subr.bf16.mxu0 %v2240
  %3428 = vmatpush1.bf16.msra.mxu0 %v2239
  %3429 = vmatprep.subr.bf16.mxu0 %v2248
  %3430 = vmatpush1.bf16.msra.mxu0 %v2247
  %3431 = vmatprep.subr.bf16.mxu0 %v2256
  %3432 = vmatpush1.bf16.msra.mxu0 %v2255
  %3433 = vmatprep.subr.bf16.mxu0 %v2264
  %3434 = vmatpush1.bf16.msra.mxu0 %v2263
  %3435 = vmatprep.subr.bf16.mxu0 %v2272
  %3436 = vmatpush1.bf16.msra.mxu0 %v2271
  %3437 = vmatprep.subr.bf16.mxu0 %v2280
  %3438 = vmatpush1.bf16.msra.mxu0 %v2279
  %3439 = vmatprep.subr.bf16.mxu0 %v2288
  %3440 = vmatpush1.bf16.msra.mxu0 %v2287
  %3441 = vmatprep.subr.bf16.mxu0 %v2296
  %3442 = vmatpush1.bf16.msra.mxu0 %v2295
  %3443 = vmatprep.mubr.bf16.mxu0 %v560
  %3444 = vmatmul.mubr.bf16.gmra.mrb[0].mxu0 %v559
  %v3445 = vpop.f32.mrb[0].mxu0
  %v3446 = vadd.f32 %v3403, %v3445
  %v3447 = vpop.f32.mrb[0].mxu0
  %v3448 = vadd.f32 %v3405, %v3447
  %v3449 = vpop.f32.mrb[0].mxu0
  %v3450 = vadd.f32 %v3407, %v3449
  %v3451 = vpop.f32.mrb[0].mxu0
  %v3452 = vadd.f32 %v3409, %v3451
  %3453 = vdwg.mxu0
  %3454 = vmatprep.subr.bf16.mxu0 %v2304
  %3455 = vmatpush1.bf16.msra.mxu0 %v2303
  %3456 = vmatprep.subr.bf16.mxu0 %v2312
  %3457 = vmatpush1.bf16.msra.mxu0 %v2311
  %3458 = vmatprep.subr.bf16.mxu0 %v2320
  %3459 = vmatpush1.bf16.msra.mxu0 %v2319
  %3460 = vmatprep.subr.bf16.mxu0 %v2328
  %3461 = vmatpush1.bf16.msra.mxu0 %v2327
  %3462 = vmatprep.subr.bf16.mxu0 %v2336
  %3463 = vmatpush1.bf16.msra.mxu0 %v2335
  %3464 = vmatprep.subr.bf16.mxu0 %v2344
  %3465 = vmatpush1.bf16.msra.mxu0 %v2343
  %3466 = vmatprep.subr.bf16.mxu0 %v2352
  %3467 = vmatpush1.bf16.msra.mxu0 %v2351
  %3468 = vmatprep.subr.bf16.mxu0 %v2360
  %3469 = vmatpush1.bf16.msra.mxu0 %v2359
  %3470 = vmatprep.subr.bf16.mxu0 0
  %3471 = vmatpush1.bf16.msra.mxu0 0
  %3472 = vmatprep.subr.bf16.mxu0 0
  %3473 = vmatpush1.bf16.msra.mxu0 0
  %3474 = vmatprep.subr.bf16.mxu0 0
  %3475 = vmatpush1.bf16.msra.mxu0 0
  %3476 = vmatprep.subr.bf16.mxu0 0
  %3477 = vmatpush1.bf16.msra.mxu0 0
  %3478 = vmatprep.subr.bf16.mxu0 0
  %3479 = vmatpush1.bf16.msra.mxu0 0
  %3480 = vmatprep.subr.bf16.mxu0 0
  %3481 = vmatpush1.bf16.msra.mxu0 0
  %3482 = vmatprep.subr.bf16.mxu0 0
  %3483 = vmatpush1.bf16.msra.mxu0 0
  %3484 = vmatprep.subr.bf16.mxu0 0
  %3485 = vmatpush1.bf16.msra.mxu0 0
  %3486 = vmatprep.mubr.bf16.mxu0 0
  %3487 = vmatmul.mubr.bf16.gmra.mrb[0].mxu0 %v561
  %v3488 = vpop.f32.mrb[0].mxu0
  %v3489 = vadd.f32 %v3446, %v3488
  %v3490 = vpop.f32.mrb[0].mxu0
  %v3491 = vadd.f32 %v3448, %v3490
  %v3492 = vpop.f32.mrb[0].mxu0
  %v3493 = vadd.f32 %v3450, %v3492
  %v3494 = vpop.f32.mrb[0].mxu0
  %v3495 = vadd.f32 %v3452, %v3494
  %3496 = vdwg.mxu0
  %vm3497 = vcmp.gt.f32.partialorder %v2973, 0.0
  %vm3498 = vcmp.gt.f32.partialorder %v2975, 0.0
  %vm3499 = vcmp.gt.f32.partialorder %v3145, 0.0
  %vm3500 = vcmp.gt.f32.partialorder %v3147, 0.0
  %vm3501 = vcmp.gt.f32.partialorder %v3317, 0.0
  %vm3502 = vcmp.gt.f32.partialorder %v3319, 0.0
  %vm3503 = vcmp.gt.f32.partialorder %v3489, 0.0
  %vm3504 = vcmp.gt.f32.partialorder %v3491, 0.0
  %vm3505 = vcmp.gt.f32.partialorder %v2977, 0.0
  %vm3506 = vcmp.gt.f32.partialorder %v2979, 0.0
  %vm3507 = vcmp.gt.f32.partialorder %v3149, 0.0
  %vm3508 = vcmp.gt.f32.partialorder %v3151, 0.0
  %vm3509 = vcmp.gt.f32.partialorder %v3321, 0.0
  %vm3510 = vcmp.gt.f32.partialorder %v3323, 0.0
  %vm3511 = vcmp.gt.f32.partialorder %v3493, 0.0
  %vm3512 = vcmp.gt.f32.partialorder %v3495, 0.0
  %v3513 = vmul.f32 %v2973, 0.2
  %v3514 = vmul.f32 %v2975, 0.2
  %v3515 = vmul.f32 %v3145, 0.2
  %v3516 = vmul.f32 %v3147, 0.2
  %v3517 = vmul.f32 %v3317, 0.2
  %v3518 = vmul.f32 %v3319, 0.2
  %v3519 = vmul.f32 %v3489, 0.2
  %v3520 = vmul.f32 %v3491, 0.2
  %v3521 = vmul.f32 %v2977, 0.2
  %v3522 = vmul.f32 %v2979, 0.2
  %v3523 = vmul.f32 %v3149, 0.2
  %v3524 = vmul.f32 %v3151, 0.2
  %v3525 = vmul.f32 %v3321, 0.2
  %v3526 = vmul.f32 %v3323, 0.2
  %v3527 = vmul.f32 %v3493, 0.2
  %v3528 = vmul.f32 %v3495, 0.2
  %v3529 = vsel %vm3497, %v2973, %v3513
  %v3530 = vsel %vm3498, %v2975, %v3514
  %v3531 = vsel %vm3499, %v3145, %v3515
  %v3532 = vsel %vm3500, %v3147, %v3516
  %v3533 = vsel %vm3501, %v3317, %v3517
  %v3534 = vsel %vm3502, %v3319, %v3518
  %v3535 = vsel %vm3503, %v3489, %v3519
  %v3536 = vsel %vm3504, %v3491, %v3520
  %v3537 = vsel %vm3505, %v2977, %v3521
  %v3538 = vsel %vm3506, %v2979, %v3522
  %v3539 = vsel %vm3507, %v3149, %v3523
  %v3540 = vsel %vm3508, %v3151, %v3524
  %v3541 = vsel %vm3509, %v3321, %v3525
  %v3542 = vsel %vm3510, %v3323, %v3526
  %v3543 = vsel %vm3511, %v3493, %v3527
  %v3544 = vsel %vm3512, %v3495, %v3528
  %v3545 = vpack.c.bf16 %v3537, %v3529
  %v3546 = vpack.c.bf16 %v3538, %v3530
  %v3547 = vpack.c.bf16 %v3539, %v3531
  %v3548 = vpack.c.bf16 %v3540, %v3532
  %v3549 = vpack.c.bf16 %v3541, %v3533
  %v3550 = vpack.c.bf16 %v3542, %v3534
  %v3551 = vpack.c.bf16 %v3543, %v3535
  %v3552 = vpack.c.bf16 %v3544, %v3536
  %v3553 = vld [vmem:[%s3] sm:$0xff]
  %v3554 = vld [vmem:[%s3 + $0x8] sm:$0xff]
  %v3555 = vld [vmem:[%s3 + $0x10] sm:$0xff]
  %v3556 = vld [vmem:[%s3 + $0x18] sm:$0xff]
  %v3557 = vld [vmem:[%s3 + $0x20] sm:$0xff]
  %v3558 = vld [vmem:[%s3 + $0x28] sm:$0xff]
  %v3559 = vld [vmem:[%s3 + $0x30] sm:$0xff]
  %v3560 = vld [vmem:[%s3 + $0x38] sm:$0xff]
  %v3561 = vld [vmem:[%s3 + $0x40] sm:$0xff]
  %v3562 = vld [vmem:[%s3 + $0x48] sm:$0xff]
  %v3563 = vld [vmem:[%s3 + $0x50] sm:$0xff]
  %v3564 = vld [vmem:[%s3 + $0x58] sm:$0xff]
  %v3565 = vld [vmem:[%s3 + $0x60] sm:$0xff]
  %v3566 = vld [vmem:[%s3 + $0x68] sm:$0xff]
  %v3567 = vld [vmem:[%s3 + $0x70] sm:$0xff]
  %v3568 = vld [vmem:[%s3 + $0x78] sm:$0xff]
  %v3569 = vld [vmem:[%s3 + $0x80] sm:$0xff]
  %v3570 = vld [vmem:[%s3 + $0x88] sm:$0xff]
  %v3571 = vld [vmem:[%s3 + $0x90] sm:$0xff]
  %v3572 = vld [vmem:[%s3 + $0x98] sm:$0xff]
  %v3573 = vld [vmem:[%s3 + $0xa0] sm:$0xff]
  %v3574 = vld [vmem:[%s3 + $0xa8] sm:$0xff]
  %v3575 = vld [vmem:[%s3 + $0xb0] sm:$0xff]
  %v3576 = vld [vmem:[%s3 + $0xb8] sm:$0xff]
  %v3577 = vld [vmem:[%s3 + $0xc0] sm:$0xff]
  %v3578 = vld [vmem:[%s3 + $0xc8] sm:$0xff]
  %v3579 = vld [vmem:[%s3 + $0xd0] sm:$0xff]
  %v3580 = vld [vmem:[%s3 + $0xd8] sm:$0xff]
  %v3581 = vld [vmem:[%s3 + $0xe0] sm:$0xff]
  %v3582 = vld [vmem:[%s3 + $0xe8] sm:$0xff]
  %v3583 = vld [vmem:[%s3 + $0xf0] sm:$0xff]
  %v3584 = vld [vmem:[%s3 + $0xf8] sm:$0xff]
  %v3585 = vld [vmem:[%s3 + $0x100] sm:$0xff]
  %v3586 = vld [vmem:[%s3 + $0x108] sm:$0xff]
  %v3587 = vld [vmem:[%s3 + $0x110] sm:$0xff]
  %v3588 = vld [vmem:[%s3 + $0x118] sm:$0xff]
  %v3589 = vld [vmem:[%s3 + $0x120] sm:$0xff]
  %v3590 = vld [vmem:[%s3 + $0x128] sm:$0xff]
  %v3591 = vld [vmem:[%s3 + $0x130] sm:$0xff]
  %v3592 = vld [vmem:[%s3 + $0x138] sm:$0xff]
  %v3593 = vld [vmem:[%s3 + $0x140] sm:$0xff]
  %v3594 = vld [vmem:[%s3 + $0x148] sm:$0xff]
  %v3595 = vld [vmem:[%s3 + $0x150] sm:$0xff]
  %v3596 = vld [vmem:[%s3 + $0x158] sm:$0xff]
  %v3597 = vld [vmem:[%s3 + $0x160] sm:$0xff]
  %v3598 = vld [vmem:[%s3 + $0x168] sm:$0xff]
  %v3599 = vld [vmem:[%s3 + $0x170] sm:$0xff]
  %v3600 = vld [vmem:[%s3 + $0x178] sm:$0xff]
  %v3601 = vld [vmem:[%s3 + $0x180] sm:$0xff]
  %v3602 = vld [vmem:[%s3 + $0x188] sm:$0xff]
  %v3603 = vld [vmem:[%s3 + $0x190] sm:$0xff]
  %v3604 = vld [vmem:[%s3 + $0x198] sm:$0xff]
  %v3605 = vld [vmem:[%s3 + $0x1a0] sm:$0xff]
  %v3606 = vld [vmem:[%s3 + $0x1a8] sm:$0xff]
  %v3607 = vld [vmem:[%s3 + $0x1b0] sm:$0xff]
  %v3608 = vld [vmem:[%s3 + $0x1b8] sm:$0xff]
  %v3609 = vld [vmem:[%s3 + $0x1c0] sm:$0xff]
  %v3610 = vld [vmem:[%s3 + $0x1c8] sm:$0xff]
  %v3611 = vld [vmem:[%s3 + $0x1d0] sm:$0xff]
  %v3612 = vld [vmem:[%s3 + $0x1d8] sm:$0xff]
  %v3613 = vld [vmem:[%s3 + $0x1e0] sm:$0xff]
  %v3614 = vld [vmem:[%s3 + $0x1e8] sm:$0xff]
  %v3615 = vld [vmem:[%s3 + $0x1f0] sm:$0xff]
  %v3616 = vld [vmem:[%s3 + $0x1f8] sm:$0xff]
  %v3617 = vld [vmem:[%s3 + $0x200] sm:$0xff]
  %v3618 = vld [vmem:[%s3 + $0x208] sm:$0xff]
  %v3619 = vld [vmem:[%s3 + $0x210] sm:$0xff]
  %v3620 = vld [vmem:[%s3 + $0x218] sm:$0xff]
  %v3621 = vld [vmem:[%s3 + $0x220] sm:$0xff]
  %v3622 = vld [vmem:[%s3 + $0x228] sm:$0xff]
  %v3623 = vld [vmem:[%s3 + $0x230] sm:$0xff]
  %v3624 = vld [vmem:[%s3 + $0x238] sm:$0xff]
  %v3625 = vld [vmem:[%s3 + $0x240] sm:$0xff]
  %v3626 = vld [vmem:[%s3 + $0x248] sm:$0xff]
  %v3627 = vld [vmem:[%s3 + $0x250] sm:$0xff]
  %v3628 = vld [vmem:[%s3 + $0x258] sm:$0xff]
  %v3629 = vld [vmem:[%s3 + $0x260] sm:$0xff]
  %v3630 = vld [vmem:[%s3 + $0x268] sm:$0xff]
  %v3631 = vld [vmem:[%s3 + $0x270] sm:$0xff]
  %v3632 = vld [vmem:[%s3 + $0x278] sm:$0xff]
  %v3633 = vld [vmem:[%s3 + $0x280] sm:$0xff]
  %v3634 = vld [vmem:[%s3 + $0x288] sm:$0xff]
  %v3635 = vld [vmem:[%s3 + $0x290] sm:$0xff]
  %v3636 = vld [vmem:[%s3 + $0x298] sm:$0xff]
  %v3637 = vld [vmem:[%s3 + $0x2a0] sm:$0xff]
  %v3638 = vld [vmem:[%s3 + $0x2a8] sm:$0xff]
  %v3639 = vld [vmem:[%s3 + $0x2b0] sm:$0xff]
  %v3640 = vld [vmem:[%s3 + $0x2b8] sm:$0xff]
  %v3641 = vld [vmem:[%s3 + $0x2c0] sm:$0xff]
  %v3642 = vld [vmem:[%s3 + $0x2c8] sm:$0xff]
  %v3643 = vld [vmem:[%s3 + $0x2d0] sm:$0xff]
  %v3644 = vld [vmem:[%s3 + $0x2d8] sm:$0xff]
  %v3645 = vld [vmem:[%s3 + $0x2e0] sm:$0xff]
  %v3646 = vld [vmem:[%s3 + $0x2e8] sm:$0xff]
  %v3647 = vld [vmem:[%s3 + $0x2f0] sm:$0xff]
  %v3648 = vld [vmem:[%s3 + $0x2f8] sm:$0xff]
  %v3649 = vld [vmem:[%s3 + $0x300] sm:$0xff]
  %v3650 = vld [vmem:[%s3 + $0x308] sm:$0xff]
  %v3651 = vld [vmem:[%s3 + $0x310] sm:$0xff]
  %v3652 = vld [vmem:[%s3 + $0x318] sm:$0xff]
  %v3653 = vld [vmem:[%s3 + $0x320] sm:$0xff]
  %v3654 = vld [vmem:[%s3 + $0x328] sm:$0xff]
  %v3655 = vld [vmem:[%s3 + $0x330] sm:$0xff]
  %v3656 = vld [vmem:[%s3 + $0x338] sm:$0xff]
  %v3657 = vld [vmem:[%s3 + $0x340] sm:$0xff]
  %v3658 = vld [vmem:[%s3 + $0x348] sm:$0xff]
  %v3659 = vld [vmem:[%s3 + $0x350] sm:$0xff]
  %v3660 = vld [vmem:[%s3 + $0x358] sm:$0xff]
  %v3661 = vld [vmem:[%s3 + $0x360] sm:$0xff]
  %v3662 = vld [vmem:[%s3 + $0x368] sm:$0xff]
  %v3663 = vld [vmem:[%s3 + $0x370] sm:$0xff]
  %v3664 = vld [vmem:[%s3 + $0x378] sm:$0xff]
  %v3665 = vld [vmem:[%s3 + $0x380] sm:$0xff]
  %v3666 = vld [vmem:[%s3 + $0x388] sm:$0xff]
  %v3667 = vld [vmem:[%s3 + $0x390] sm:$0xff]
  %v3668 = vld [vmem:[%s3 + $0x398] sm:$0xff]
  %v3669 = vld [vmem:[%s3 + $0x3a0] sm:$0xff]
  %v3670 = vld [vmem:[%s3 + $0x3a8] sm:$0xff]
  %v3671 = vld [vmem:[%s3 + $0x3b0] sm:$0xff]
  %v3672 = vld [vmem:[%s3 + $0x3b8] sm:$0xff]
  %v3673 = vld [vmem:[%s3 + $0x3c0] sm:$0xff]
  %v3674 = vld [vmem:[%s3 + $0x3c8] sm:$0xff]
  %v3675 = vld [vmem:[%s3 + $0x3d0] sm:$0xff]
  %v3676 = vld [vmem:[%s3 + $0x3d8] sm:$0xff]
  %v3677 = vld [vmem:[%s3 + $0x3e0] sm:$0xff]
  %v3678 = vld [vmem:[%s3 + $0x3e8] sm:$0xff]
  %v3679 = vld [vmem:[%s3 + $0x3f0] sm:$0xff]
  %v3680 = vld [vmem:[%s3 + $0x3f8] sm:$0xff]
  %v3681 = vld [vmem:[%s3 + $0x400] sm:$0xff]
  %v3682 = vld [vmem:[%s3 + $0x408] sm:$0xff]
  %v3683 = vld [vmem:[%s3 + $0x410] sm:$0xff]
  %v3684 = vld [vmem:[%s3 + $0x418] sm:$0xff]
  %v3685 = vld [vmem:[%s3 + $0x420] sm:$0xff]
  %v3686 = vld [vmem:[%s3 + $0x428] sm:$0xff]
  %v3687 = vld [vmem:[%s3 + $0x430] sm:$0xff]
  %v3688 = vld [vmem:[%s3 + $0x438] sm:$0xff]
  %v3689 = vld [vmem:[%s3 + $0x440] sm:$0xff]
  %v3690 = vld [vmem:[%s3 + $0x448] sm:$0xff]
  %v3691 = vld [vmem:[%s3 + $0x450] sm:$0xff]
  %v3692 = vld [vmem:[%s3 + $0x458] sm:$0xff]
  %v3693 = vld [vmem:[%s3 + $0x460] sm:$0xff]
  %v3694 = vld [vmem:[%s3 + $0x468] sm:$0xff]
  %v3695 = vld [vmem:[%s3 + $0x470] sm:$0xff]
  %v3696 = vld [vmem:[%s3 + $0x478] sm:$0xff]
  %v3697 = vld [vmem:[%s3 + $0x480] sm:$0xff]
  %v3698 = vld [vmem:[%s3 + $0x488] sm:$0xff]
  %v3699 = vld [vmem:[%s3 + $0x490] sm:$0xff]
  %v3700 = vld [vmem:[%s3 + $0x498] sm:$0xff]
  %v3701 = vld [vmem:[%s3 + $0x4a0] sm:$0xff]
  %v3702 = vld [vmem:[%s3 + $0x4a8] sm:$0xff]
  %v3703 = vld [vmem:[%s3 + $0x4b0] sm:$0xff]
  %v3704 = vld [vmem:[%s3 + $0x4b8] sm:$0xff]
  %v3705 = vld [vmem:[%s3 + $0x4c0] sm:$0xff]
  %v3706 = vld [vmem:[%s3 + $0x4c8] sm:$0xff]
  %v3707 = vld [vmem:[%s3 + $0x4d0] sm:$0xff]
  %v3708 = vld [vmem:[%s3 + $0x4d8] sm:$0xff]
  %v3709 = vld [vmem:[%s3 + $0x4e0] sm:$0xff]
  %v3710 = vld [vmem:[%s3 + $0x4e8] sm:$0xff]
  %v3711 = vld [vmem:[%s3 + $0x4f0] sm:$0xff]
  %v3712 = vld [vmem:[%s3 + $0x4f8] sm:$0xff]
  %v3713 = vld [vmem:[%s3 + $0x500] sm:$0xff]
  %v3714 = vld [vmem:[%s3 + $0x508] sm:$0xff]
  %v3715 = vld [vmem:[%s3 + $0x510] sm:$0xff]
  %v3716 = vld [vmem:[%s3 + $0x518] sm:$0xff]
  %v3717 = vld [vmem:[%s3 + $0x520] sm:$0xff]
  %v3718 = vld [vmem:[%s3 + $0x528] sm:$0xff]
  %v3719 = vld [vmem:[%s3 + $0x530] sm:$0xff]
  %v3720 = vld [vmem:[%s3 + $0x538] sm:$0xff]
  %v3721 = vld [vmem:[%s3 + $0x540] sm:$0xff]
  %v3722 = vld [vmem:[%s3 + $0x548] sm:$0xff]
  %v3723 = vld [vmem:[%s3 + $0x550] sm:$0xff]
  %v3724 = vld [vmem:[%s3 + $0x558] sm:$0xff]
  %v3725 = vld [vmem:[%s3 + $0x560] sm:$0xff]
  %v3726 = vld [vmem:[%s3 + $0x568] sm:$0xff]
  %v3727 = vld [vmem:[%s3 + $0x570] sm:$0xff]
  %v3728 = vld [vmem:[%s3 + $0x578] sm:$0xff]
  %v3729 = vld [vmem:[%s3 + $0x580] sm:$0xff]
  %v3730 = vld [vmem:[%s3 + $0x588] sm:$0xff]
  %v3731 = vld [vmem:[%s3 + $0x590] sm:$0xff]
  %v3732 = vld [vmem:[%s3 + $0x598] sm:$0xff]
  %v3733 = vld [vmem:[%s3 + $0x5a0] sm:$0xff]
  %v3734 = vld [vmem:[%s3 + $0x5a8] sm:$0xff]
  %v3735 = vld [vmem:[%s3 + $0x5b0] sm:$0xff]
  %v3736 = vld [vmem:[%s3 + $0x5b8] sm:$0xff]
  %v3737 = vld [vmem:[%s3 + $0x5c0] sm:$0xff]
  %v3738 = vld [vmem:[%s3 + $0x5c8] sm:$0xff]
  %v3739 = vld [vmem:[%s3 + $0x5d0] sm:$0xff]
  %v3740 = vld [vmem:[%s3 + $0x5d8] sm:$0xff]
  %v3741 = vld [vmem:[%s3 + $0x5e0] sm:$0xff]
  %v3742 = vld [vmem:[%s3 + $0x5e8] sm:$0xff]
  %v3743 = vld [vmem:[%s3 + $0x5f0] sm:$0xff]
  %v3744 = vld [vmem:[%s3 + $0x5f8] sm:$0xff]
  %v3745 = vld [vmem:[%s3 + $0x600] sm:$0xff]
  %v3746 = vld [vmem:[%s3 + $0x608] sm:$0xff]
  %v3747 = vld [vmem:[%s3 + $0x610] sm:$0xff]
  %v3748 = vld [vmem:[%s3 + $0x618] sm:$0xff]
  %v3749 = vld [vmem:[%s3 + $0x620] sm:$0xff]
  %v3750 = vld [vmem:[%s3 + $0x628] sm:$0xff]
  %v3751 = vld [vmem:[%s3 + $0x630] sm:$0xff]
  %v3752 = vld [vmem:[%s3 + $0x638] sm:$0xff]
  %v3753 = vld [vmem:[%s3 + $0x640] sm:$0xff]
  %v3754 = vld [vmem:[%s3 + $0x648] sm:$0xff]
  %v3755 = vld [vmem:[%s3 + $0x650] sm:$0xff]
  %v3756 = vld [vmem:[%s3 + $0x658] sm:$0xff]
  %v3757 = vld [vmem:[%s3 + $0x660] sm:$0xff]
  %v3758 = vld [vmem:[%s3 + $0x668] sm:$0xff]
  %v3759 = vld [vmem:[%s3 + $0x670] sm:$0xff]
  %v3760 = vld [vmem:[%s3 + $0x678] sm:$0xff]
  %v3761 = vld [vmem:[%s3 + $0x680] sm:$0xff]
  %v3762 = vld [vmem:[%s3 + $0x688] sm:$0xff]
  %v3763 = vld [vmem:[%s3 + $0x690] sm:$0xff]
  %v3764 = vld [vmem:[%s3 + $0x698] sm:$0xff]
  %v3765 = vld [vmem:[%s3 + $0x6a0] sm:$0xff]
  %v3766 = vld [vmem:[%s3 + $0x6a8] sm:$0xff]
  %v3767 = vld [vmem:[%s3 + $0x6b0] sm:$0xff]
  %v3768 = vld [vmem:[%s3 + $0x6b8] sm:$0xff]
  %v3769 = vld [vmem:[%s3 + $0x6c0] sm:$0xff]
  %v3770 = vld [vmem:[%s3 + $0x6c8] sm:$0xff]
  %v3771 = vld [vmem:[%s3 + $0x6d0] sm:$0xff]
  %v3772 = vld [vmem:[%s3 + $0x6d8] sm:$0xff]
  %v3773 = vld [vmem:[%s3 + $0x6e0] sm:$0xff]
  %v3774 = vld [vmem:[%s3 + $0x6e8] sm:$0xff]
  %v3775 = vld [vmem:[%s3 + $0x6f0] sm:$0xff]
  %v3776 = vld [vmem:[%s3 + $0x6f8] sm:$0xff]
  %v3777 = vld [vmem:[%s3 + $0x700] sm:$0xff]
  %v3778 = vld [vmem:[%s3 + $0x708] sm:$0xff]
  %v3779 = vld [vmem:[%s3 + $0x710] sm:$0xff]
  %v3780 = vld [vmem:[%s3 + $0x718] sm:$0xff]
  %v3781 = vld [vmem:[%s3 + $0x720] sm:$0xff]
  %v3782 = vld [vmem:[%s3 + $0x728] sm:$0xff]
  %v3783 = vld [vmem:[%s3 + $0x730] sm:$0xff]
  %v3784 = vld [vmem:[%s3 + $0x738] sm:$0xff]
  %v3785 = vld [vmem:[%s3 + $0x740] sm:$0xff]
  %v3786 = vld [vmem:[%s3 + $0x748] sm:$0xff]
  %v3787 = vld [vmem:[%s3 + $0x750] sm:$0xff]
  %v3788 = vld [vmem:[%s3 + $0x758] sm:$0xff]
  %v3789 = vld [vmem:[%s3 + $0x760] sm:$0xff]
  %v3790 = vld [vmem:[%s3 + $0x768] sm:$0xff]
  %v3791 = vld [vmem:[%s3 + $0x770] sm:$0xff]
  %v3792 = vld [vmem:[%s3 + $0x778] sm:$0xff]
  %v3793 = vld [vmem:[%s3 + $0x780] sm:$0xff]
  %v3794 = vld [vmem:[%s3 + $0x788] sm:$0xff]
  %v3795 = vld [vmem:[%s3 + $0x790] sm:$0xff]
  %v3796 = vld [vmem:[%s3 + $0x798] sm:$0xff]
  %v3797 = vld [vmem:[%s3 + $0x7a0] sm:$0xff]
  %v3798 = vld [vmem:[%s3 + $0x7a8] sm:$0xff]
  %v3799 = vld [vmem:[%s3 + $0x7b0] sm:$0xff]
  %v3800 = vld [vmem:[%s3 + $0x7b8] sm:$0xff]
  %v3801 = vld [vmem:[%s3 + $0x7c0] sm:$0xff]
  %v3802 = vld [vmem:[%s3 + $0x7c8] sm:$0xff]
  %v3803 = vld [vmem:[%s3 + $0x7d0] sm:$0xff]
  %v3804 = vld [vmem:[%s3 + $0x7d8] sm:$0xff]
  %v3805 = vld [vmem:[%s3 + $0x7e0] sm:$0xff]
  %v3806 = vld [vmem:[%s3 + $0x7e8] sm:$0xff]
  %v3807 = vld [vmem:[%s3 + $0x7f0] sm:$0xff]
  %v3808 = vld [vmem:[%s3 + $0x7f8] sm:$0xff]
  %v3809 = vld [vmem:[%s4] sm:$0xf]
  %v3811 = vlaneseq
  %v3812 = vshrl.u32 %v3811, 7
  %v3813 = vsub.s32 0, %v3812
  %v3814 = vrot.slane %v3809, %v3813
  %v3815 = vlaneseq
  %v3816 = vshrl.u32 %v3815, 7
  %v3817 = vsub.s32 1, %v3816
  %v3818 = vrot.slane %v3809, %v3817
  %v3819 = vlaneseq
  %v3820 = vshrl.u32 %v3819, 7
  %v3821 = vsub.s32 2, %v3820
  %v3822 = vrot.slane %v3809, %v3821
  %v3823 = vlaneseq
  %v3824 = vshrl.u32 %v3823, 7
  %v3825 = vsub.s32 3, %v3824
  %v3826 = vrot.slane %v3809, %v3825
  %v4087 = vunpack.c.l.b16 %v3553
  %v4088 = vunpack.c.h.b16 %v3553
  %v4089 = vunpack.c.l.b16 %v3554
  %v4090 = vunpack.c.h.b16 %v3554
  %v4091 = vunpack.c.l.b16 %v3555
  %v4092 = vunpack.c.h.b16 %v3555
  %v4093 = vunpack.c.l.b16 %v3556
  %v4094 = vunpack.c.h.b16 %v3556
  %v4095 = vunpack.c.l.b16 %v3557
  %v4096 = vunpack.c.h.b16 %v3557
  %v4097 = vunpack.c.l.b16 %v3558
  %v4098 = vunpack.c.h.b16 %v3558
  %v4099 = vunpack.c.l.b16 %v3559
  %v4100 = vunpack.c.h.b16 %v3559
  %v4101 = vunpack.c.l.b16 %v3560
  %v4102 = vunpack.c.h.b16 %v3560
  %v4103 = vunpack.c.l.b16 %v3561
  %v4104 = vunpack.c.h.b16 %v3561
  %v4105 = vunpack.c.l.b16 %v3562
  %v4106 = vunpack.c.h.b16 %v3562
  %v4107 = vunpack.c.l.b16 %v3563
  %v4108 = vunpack.c.h.b16 %v3563
  %v4109 = vunpack.c.l.b16 %v3564
  %v4110 = vunpack.c.h.b16 %v3564
  %v4111 = vunpack.c.l.b16 %v3565
  %v4112 = vunpack.c.h.b16 %v3565
  %v4113 = vunpack.c.l.b16 %v3566
  %v4114 = vunpack.c.h.b16 %v3566
  %v4115 = vunpack.c.l.b16 %v3567
  %v4116 = vunpack.c.h.b16 %v3567
  %v4117 = vunpack.c.l.b16 %v3568
  %v4118 = vunpack.c.h.b16 %v3568
  %v4119 = vunpack.c.l.b16 %v3569
  %v4120 = vunpack.c.h.b16 %v3569
  %v4121 = vunpack.c.l.b16 %v3570
  %v4122 = vunpack.c.h.b16 %v3570
  %v4123 = vunpack.c.l.b16 %v3571
  %v4124 = vunpack.c.h.b16 %v3571
  %v4125 = vunpack.c.l.b16 %v3572
  %v4126 = vunpack.c.h.b16 %v3572
  %v4127 = vunpack.c.l.b16 %v3573
  %v4128 = vunpack.c.h.b16 %v3573
  %v4129 = vunpack.c.l.b16 %v3574
  %v4130 = vunpack.c.h.b16 %v3574
  %v4131 = vunpack.c.l.b16 %v3575
  %v4132 = vunpack.c.h.b16 %v3575
  %v4133 = vunpack.c.l.b16 %v3576
  %v4134 = vunpack.c.h.b16 %v3576
  %v4135 = vunpack.c.l.b16 %v3577
  %v4136 = vunpack.c.h.b16 %v3577
  %v4137 = vunpack.c.l.b16 %v3578
  %v4138 = vunpack.c.h.b16 %v3578
  %v4139 = vunpack.c.l.b16 %v3579
  %v4140 = vunpack.c.h.b16 %v3579
  %v4141 = vunpack.c.l.b16 %v3580
  %v4142 = vunpack.c.h.b16 %v3580
  %v4143 = vunpack.c.l.b16 %v3581
  %v4144 = vunpack.c.h.b16 %v3581
  %v4145 = vunpack.c.l.b16 %v3582
  %v4146 = vunpack.c.h.b16 %v3582
  %v4147 = vunpack.c.l.b16 %v3583
  %v4148 = vunpack.c.h.b16 %v3583
  %v4149 = vunpack.c.l.b16 %v3584
  %v4150 = vunpack.c.h.b16 %v3584
  %v4151 = vunpack.c.l.b16 %v3585
  %v4152 = vunpack.c.h.b16 %v3585
  %v4153 = vunpack.c.l.b16 %v3586
  %v4154 = vunpack.c.h.b16 %v3586
  %v4155 = vunpack.c.l.b16 %v3587
  %v4156 = vunpack.c.h.b16 %v3587
  %v4157 = vunpack.c.l.b16 %v3588
  %v4158 = vunpack.c.h.b16 %v3588
  %v4159 = vunpack.c.l.b16 %v3589
  %v4160 = vunpack.c.h.b16 %v3589
  %v4161 = vunpack.c.l.b16 %v3590
  %v4162 = vunpack.c.h.b16 %v3590
  %v4163 = vunpack.c.l.b16 %v3591
  %v4164 = vunpack.c.h.b16 %v3591
  %v4165 = vunpack.c.l.b16 %v3592
  %v4166 = vunpack.c.h.b16 %v3592
  %v4167 = vunpack.c.l.b16 %v3593
  %v4168 = vunpack.c.h.b16 %v3593
  %v4169 = vunpack.c.l.b16 %v3594
  %v4170 = vunpack.c.h.b16 %v3594
  %v4171 = vunpack.c.l.b16 %v3595
  %v4172 = vunpack.c.h.b16 %v3595
  %v4173 = vunpack.c.l.b16 %v3596
  %v4174 = vunpack.c.h.b16 %v3596
  %v4175 = vunpack.c.l.b16 %v3597
  %v4176 = vunpack.c.h.b16 %v3597
  %v4177 = vunpack.c.l.b16 %v3598
  %v4178 = vunpack.c.h.b16 %v3598
  %v4179 = vunpack.c.l.b16 %v3599
  %v4180 = vunpack.c.h.b16 %v3599
  %v4181 = vunpack.c.l.b16 %v3600
  %v4182 = vunpack.c.h.b16 %v3600
  %v4183 = vunpack.c.l.b16 %v3601
  %v4184 = vunpack.c.h.b16 %v3601
  %v4185 = vunpack.c.l.b16 %v3602
  %v4186 = vunpack.c.h.b16 %v3602
  %v4187 = vunpack.c.l.b16 %v3603
  %v4188 = vunpack.c.h.b16 %v3603
  %v4189 = vunpack.c.l.b16 %v3604
  %v4190 = vunpack.c.h.b16 %v3604
  %v4191 = vunpack.c.l.b16 %v3605
  %v4192 = vunpack.c.h.b16 %v3605
  %v4193 = vunpack.c.l.b16 %v3606
  %v4194 = vunpack.c.h.b16 %v3606
  %v4195 = vunpack.c.l.b16 %v3607
  %v4196 = vunpack.c.h.b16 %v3607
  %v4197 = vunpack.c.l.b16 %v3608
  %v4198 = vunpack.c.h.b16 %v3608
  %v4199 = vunpack.c.l.b16 %v3609
  %v4200 = vunpack.c.h.b16 %v3609
  %v4201 = vunpack.c.l.b16 %v3610
  %v4202 = vunpack.c.h.b16 %v3610
  %v4203 = vunpack.c.l.b16 %v3611
  %v4204 = vunpack.c.h.b16 %v3611
  %v4205 = vunpack.c.l.b16 %v3612
  %v4206 = vunpack.c.h.b16 %v3612
  %v4207 = vunpack.c.l.b16 %v3613
  %v4208 = vunpack.c.h.b16 %v3613
  %v4209 = vunpack.c.l.b16 %v3614
  %v4210 = vunpack.c.h.b16 %v3614
  %v4211 = vunpack.c.l.b16 %v3615
  %v4212 = vunpack.c.h.b16 %v3615
  %v4213 = vunpack.c.l.b16 %v3616
  %v4214 = vunpack.c.h.b16 %v3616
  %v4215 = vunpack.c.l.b16 %v3617
  %v4216 = vunpack.c.h.b16 %v3617
  %v4217 = vunpack.c.l.b16 %v3618
  %v4218 = vunpack.c.h.b16 %v3618
  %v4219 = vunpack.c.l.b16 %v3619
  %v4220 = vunpack.c.h.b16 %v3619
  %v4221 = vunpack.c.l.b16 %v3620
  %v4222 = vunpack.c.h.b16 %v3620
  %v4223 = vunpack.c.l.b16 %v3621
  %v4224 = vunpack.c.h.b16 %v3621
  %v4225 = vunpack.c.l.b16 %v3622
  %v4226 = vunpack.c.h.b16 %v3622
  %v4227 = vunpack.c.l.b16 %v3623
  %v4228 = vunpack.c.h.b16 %v3623
  %v4229 = vunpack.c.l.b16 %v3624
  %v4230 = vunpack.c.h.b16 %v3624
  %v4231 = vunpack.c.l.b16 %v3625
  %v4232 = vunpack.c.h.b16 %v3625
  %v4233 = vunpack.c.l.b16 %v3626
  %v4234 = vunpack.c.h.b16 %v3626
  %v4235 = vunpack.c.l.b16 %v3627
  %v4236 = vunpack.c.h.b16 %v3627
  %v4237 = vunpack.c.l.b16 %v3628
  %v4238 = vunpack.c.h.b16 %v3628
  %v4239 = vunpack.c.l.b16 %v3629
  %v4240 = vunpack.c.h.b16 %v3629
  %v4241 = vunpack.c.l.b16 %v3630
  %v4242 = vunpack.c.h.b16 %v3630
  %v4243 = vunpack.c.l.b16 %v3631
  %v4244 = vunpack.c.h.b16 %v3631
  %v4245 = vunpack.c.l.b16 %v3632
  %v4246 = vunpack.c.h.b16 %v3632
  %v4247 = vunpack.c.l.b16 %v3633
  %v4248 = vunpack.c.h.b16 %v3633
  %v4249 = vunpack.c.l.b16 %v3634
  %v4250 = vunpack.c.h.b16 %v3634
  %v4251 = vunpack.c.l.b16 %v3635
  %v4252 = vunpack.c.h.b16 %v3635
  %v4253 = vunpack.c.l.b16 %v3636
  %v4254 = vunpack.c.h.b16 %v3636
  %v4255 = vunpack.c.l.b16 %v3637
  %v4256 = vunpack.c.h.b16 %v3637
  %v4257 = vunpack.c.l.b16 %v3638
  %v4258 = vunpack.c.h.b16 %v3638
  %v4259 = vunpack.c.l.b16 %v3639
  %v4260 = vunpack.c.h.b16 %v3639
  %v4261 = vunpack.c.l.b16 %v3640
  %v4262 = vunpack.c.h.b16 %v3640
  %v4263 = vunpack.c.l.b16 %v3641
  %v4264 = vunpack.c.h.b16 %v3641
  %v4265 = vunpack.c.l.b16 %v3642
  %v4266 = vunpack.c.h.b16 %v3642
  %v4267 = vunpack.c.l.b16 %v3643
  %v4268 = vunpack.c.h.b16 %v3643
  %v4269 = vunpack.c.l.b16 %v3644
  %v4270 = vunpack.c.h.b16 %v3644
  %v4271 = vunpack.c.l.b16 %v3645
  %v4272 = vunpack.c.h.b16 %v3645
  %v4273 = vunpack.c.l.b16 %v3646
  %v4274 = vunpack.c.h.b16 %v3646
  %v4275 = vunpack.c.l.b16 %v3647
  %v4276 = vunpack.c.h.b16 %v3647
  %v4277 = vunpack.c.l.b16 %v3648
  %v4278 = vunpack.c.h.b16 %v3648
  %v4279 = vunpack.c.l.b16 %v3649
  %v4280 = vunpack.c.h.b16 %v3649
  %v4281 = vunpack.c.l.b16 %v3650
  %v4282 = vunpack.c.h.b16 %v3650
  %v4283 = vunpack.c.l.b16 %v3651
  %v4284 = vunpack.c.h.b16 %v3651
  %v4285 = vunpack.c.l.b16 %v3652
  %v4286 = vunpack.c.h.b16 %v3652
  %v4287 = vunpack.c.l.b16 %v3653
  %v4288 = vunpack.c.h.b16 %v3653
  %v4289 = vunpack.c.l.b16 %v3654
  %v4290 = vunpack.c.h.b16 %v3654
  %v4291 = vunpack.c.l.b16 %v3655
  %v4292 = vunpack.c.h.b16 %v3655
  %v4293 = vunpack.c.l.b16 %v3656
  %v4294 = vunpack.c.h.b16 %v3656
  %v4295 = vunpack.c.l.b16 %v3657
  %v4296 = vunpack.c.h.b16 %v3657
  %v4297 = vunpack.c.l.b16 %v3658
  %v4298 = vunpack.c.h.b16 %v3658
  %v4299 = vunpack.c.l.b16 %v3659
  %v4300 = vunpack.c.h.b16 %v3659
  %v4301 = vunpack.c.l.b16 %v3660
  %v4302 = vunpack.c.h.b16 %v3660
  %v4303 = vunpack.c.l.b16 %v3661
  %v4304 = vunpack.c.h.b16 %v3661
  %v4305 = vunpack.c.l.b16 %v3662
  %v4306 = vunpack.c.h.b16 %v3662
  %v4307 = vunpack.c.l.b16 %v3663
  %v4308 = vunpack.c.h.b16 %v3663
  %v4309 = vunpack.c.l.b16 %v3664
  %v4310 = vunpack.c.h.b16 %v3664
  %v4311 = vunpack.c.l.b16 %v3665
  %v4312 = vunpack.c.h.b16 %v3665
  %v4313 = vunpack.c.l.b16 %v3666
  %v4314 = vunpack.c.h.b16 %v3666
  %v4315 = vunpack.c.l.b16 %v3667
  %v4316 = vunpack.c.h.b16 %v3667
  %v4317 = vunpack.c.l.b16 %v3668
  %v4318 = vunpack.c.h.b16 %v3668
  %v4319 = vunpack.c.l.b16 %v3669
  %v4320 = vunpack.c.h.b16 %v3669
  %v4321 = vunpack.c.l.b16 %v3670
  %v4322 = vunpack.c.h.b16 %v3670
  %v4323 = vunpack.c.l.b16 %v3671
  %v4324 = vunpack.c.h.b16 %v3671
  %v4325 = vunpack.c.l.b16 %v3672
  %v4326 = vunpack.c.h.b16 %v3672
  %v4327 = vunpack.c.l.b16 %v3673
  %v4328 = vunpack.c.h.b16 %v3673
  %v4329 = vunpack.c.l.b16 %v3674
  %v4330 = vunpack.c.h.b16 %v3674
  %v4331 = vunpack.c.l.b16 %v3675
  %v4332 = vunpack.c.h.b16 %v3675
  %v4333 = vunpack.c.l.b16 %v3676
  %v4334 = vunpack.c.h.b16 %v3676
  %v4335 = vunpack.c.l.b16 %v3677
  %v4336 = vunpack.c.h.b16 %v3677
  %v4337 = vunpack.c.l.b16 %v3678
  %v4338 = vunpack.c.h.b16 %v3678
  %v4339 = vunpack.c.l.b16 %v3679
  %v4340 = vunpack.c.h.b16 %v3679
  %v4341 = vunpack.c.l.b16 %v3680
  %v4342 = vunpack.c.h.b16 %v3680
  %v4343 = vunpack.c.l.b16 %v3681
  %v4344 = vunpack.c.h.b16 %v3681
  %v4345 = vunpack.c.l.b16 %v3682
  %v4346 = vunpack.c.h.b16 %v3682
  %v4347 = vunpack.c.l.b16 %v3683
  %v4348 = vunpack.c.h.b16 %v3683
  %v4349 = vunpack.c.l.b16 %v3684
  %v4350 = vunpack.c.h.b16 %v3684
  %v4351 = vunpack.c.l.b16 %v3685
  %v4352 = vunpack.c.h.b16 %v3685
  %v4353 = vunpack.c.l.b16 %v3686
  %v4354 = vunpack.c.h.b16 %v3686
  %v4355 = vunpack.c.l.b16 %v3687
  %v4356 = vunpack.c.h.b16 %v3687
  %v4357 = vunpack.c.l.b16 %v3688
  %v4358 = vunpack.c.h.b16 %v3688
  %v4359 = vunpack.c.l.b16 %v3689
  %v4360 = vunpack.c.h.b16 %v3689
  %v4361 = vunpack.c.l.b16 %v3690
  %v4362 = vunpack.c.h.b16 %v3690
  %v4363 = vunpack.c.l.b16 %v3691
  %v4364 = vunpack.c.h.b16 %v3691
  %v4365 = vunpack.c.l.b16 %v3692
  %v4366 = vunpack.c.h.b16 %v3692
  %v4367 = vunpack.c.l.b16 %v3693
  %v4368 = vunpack.c.h.b16 %v3693
  %v4369 = vunpack.c.l.b16 %v3694
  %v4370 = vunpack.c.h.b16 %v3694
  %v4371 = vunpack.c.l.b16 %v3695
  %v4372 = vunpack.c.h.b16 %v3695
  %v4373 = vunpack.c.l.b16 %v3696
  %v4374 = vunpack.c.h.b16 %v3696
  %v4375 = vunpack.c.l.b16 %v3697
  %v4376 = vunpack.c.h.b16 %v3697
  %v4377 = vunpack.c.l.b16 %v3698
  %v4378 = vunpack.c.h.b16 %v3698
  %v4379 = vunpack.c.l.b16 %v3699
  %v4380 = vunpack.c.h.b16 %v3699
  %v4381 = vunpack.c.l.b16 %v3700
  %v4382 = vunpack.c.h.b16 %v3700
  %v4383 = vunpack.c.l.b16 %v3701
  %v4384 = vunpack.c.h.b16 %v3701
  %v4385 = vunpack.c.l.b16 %v3702
  %v4386 = vunpack.c.h.b16 %v3702
  %v4387 = vunpack.c.l.b16 %v3703
  %v4388 = vunpack.c.h.b16 %v3703
  %v4389 = vunpack.c.l.b16 %v3704
  %v4390 = vunpack.c.h.b16 %v3704
  %v4391 = vunpack.c.l.b16 %v3705
  %v4392 = vunpack.c.h.b16 %v3705
  %v4393 = vunpack.c.l.b16 %v3706
  %v4394 = vunpack.c.h.b16 %v3706
  %v4395 = vunpack.c.l.b16 %v3707
  %v4396 = vunpack.c.h.b16 %v3707
  %v4397 = vunpack.c.l.b16 %v3708
  %v4398 = vunpack.c.h.b16 %v3708
  %v4399 = vunpack.c.l.b16 %v3709
  %v4400 = vunpack.c.h.b16 %v3709
  %v4401 = vunpack.c.l.b16 %v3710
  %v4402 = vunpack.c.h.b16 %v3710
  %v4403 = vunpack.c.l.b16 %v3711
  %v4404 = vunpack.c.h.b16 %v3711
  %v4405 = vunpack.c.l.b16 %v3712
  %v4406 = vunpack.c.h.b16 %v3712
  %v4407 = vunpack.c.l.b16 %v3713
  %v4408 = vunpack.c.h.b16 %v3713
  %v4409 = vunpack.c.l.b16 %v3714
  %v4410 = vunpack.c.h.b16 %v3714
  %v4411 = vunpack.c.l.b16 %v3715
  %v4412 = vunpack.c.h.b16 %v3715
  %v4413 = vunpack.c.l.b16 %v3716
  %v4414 = vunpack.c.h.b16 %v3716
  %v4415 = vunpack.c.l.b16 %v3717
  %v4416 = vunpack.c.h.b16 %v3717
  %v4417 = vunpack.c.l.b16 %v3718
  %v4418 = vunpack.c.h.b16 %v3718
  %v4419 = vunpack.c.l.b16 %v3719
  %v4420 = vunpack.c.h.b16 %v3719
  %v4421 = vunpack.c.l.b16 %v3720
  %v4422 = vunpack.c.h.b16 %v3720
  %v4423 = vunpack.c.l.b16 %v3721
  %v4424 = vunpack.c.h.b16 %v3721
  %v4425 = vunpack.c.l.b16 %v3722
  %v4426 = vunpack.c.h.b16 %v3722
  %v4427 = vunpack.c.l.b16 %v3723
  %v4428 = vunpack.c.h.b16 %v3723
  %v4429 = vunpack.c.l.b16 %v3724
  %v4430 = vunpack.c.h.b16 %v3724
  %v4431 = vunpack.c.l.b16 %v3725
  %v4432 = vunpack.c.h.b16 %v3725
  %v4433 = vunpack.c.l.b16 %v3726
  %v4434 = vunpack.c.h.b16 %v3726
  %v4435 = vunpack.c.l.b16 %v3727
  %v4436 = vunpack.c.h.b16 %v3727
  %v4437 = vunpack.c.l.b16 %v3728
  %v4438 = vunpack.c.h.b16 %v3728
  %v4439 = vunpack.c.l.b16 %v3729
  %v4440 = vunpack.c.h.b16 %v3729
  %v4441 = vunpack.c.l.b16 %v3730
  %v4442 = vunpack.c.h.b16 %v3730
  %v4443 = vunpack.c.l.b16 %v3731
  %v4444 = vunpack.c.h.b16 %v3731
  %v4445 = vunpack.c.l.b16 %v3732
  %v4446 = vunpack.c.h.b16 %v3732
  %v4447 = vunpack.c.l.b16 %v3733
  %v4448 = vunpack.c.h.b16 %v3733
  %v4449 = vunpack.c.l.b16 %v3734
  %v4450 = vunpack.c.h.b16 %v3734
  %v4451 = vunpack.c.l.b16 %v3735
  %v4452 = vunpack.c.h.b16 %v3735
  %v4453 = vunpack.c.l.b16 %v3736
  %v4454 = vunpack.c.h.b16 %v3736
  %v4455 = vunpack.c.l.b16 %v3737
  %v4456 = vunpack.c.h.b16 %v3737
  %v4457 = vunpack.c.l.b16 %v3738
  %v4458 = vunpack.c.h.b16 %v3738
  %v4459 = vunpack.c.l.b16 %v3739
  %v4460 = vunpack.c.h.b16 %v3739
  %v4461 = vunpack.c.l.b16 %v3740
  %v4462 = vunpack.c.h.b16 %v3740
  %v4463 = vunpack.c.l.b16 %v3741
  %v4464 = vunpack.c.h.b16 %v3741
  %v4465 = vunpack.c.l.b16 %v3742
  %v4466 = vunpack.c.h.b16 %v3742
  %v4467 = vunpack.c.l.b16 %v3743
  %v4468 = vunpack.c.h.b16 %v3743
  %v4469 = vunpack.c.l.b16 %v3744
  %v4470 = vunpack.c.h.b16 %v3744
  %v4471 = vunpack.c.l.b16 %v3745
  %v4472 = vunpack.c.h.b16 %v3745
  %v4473 = vunpack.c.l.b16 %v3746
  %v4474 = vunpack.c.h.b16 %v3746
  %v4475 = vunpack.c.l.b16 %v3747
  %v4476 = vunpack.c.h.b16 %v3747
  %v4477 = vunpack.c.l.b16 %v3748
  %v4478 = vunpack.c.h.b16 %v3748
  %v4479 = vunpack.c.l.b16 %v3749
  %v4480 = vunpack.c.h.b16 %v3749
  %v4481 = vunpack.c.l.b16 %v3750
  %v4482 = vunpack.c.h.b16 %v3750
  %v4483 = vunpack.c.l.b16 %v3751
  %v4484 = vunpack.c.h.b16 %v3751
  %v4485 = vunpack.c.l.b16 %v3752
  %v4486 = vunpack.c.h.b16 %v3752
  %v4487 = vunpack.c.l.b16 %v3753
  %v4488 = vunpack.c.h.b16 %v3753
  %v4489 = vunpack.c.l.b16 %v3754
  %v4490 = vunpack.c.h.b16 %v3754
  %v4491 = vunpack.c.l.b16 %v3755
  %v4492 = vunpack.c.h.b16 %v3755
  %v4493 = vunpack.c.l.b16 %v3756
  %v4494 = vunpack.c.h.b16 %v3756
  %v4495 = vunpack.c.l.b16 %v3757
  %v4496 = vunpack.c.h.b16 %v3757
  %v4497 = vunpack.c.l.b16 %v3758
  %v4498 = vunpack.c.h.b16 %v3758
  %v4499 = vunpack.c.l.b16 %v3759
  %v4500 = vunpack.c.h.b16 %v3759
  %v4501 = vunpack.c.l.b16 %v3760
  %v4502 = vunpack.c.h.b16 %v3760
  %v4503 = vunpack.c.l.b16 %v3761
  %v4504 = vunpack.c.h.b16 %v3761
  %v4505 = vunpack.c.l.b16 %v3762
  %v4506 = vunpack.c.h.b16 %v3762
  %v4507 = vunpack.c.l.b16 %v3763
  %v4508 = vunpack.c.h.b16 %v3763
  %v4509 = vunpack.c.l.b16 %v3764
  %v4510 = vunpack.c.h.b16 %v3764
  %v4511 = vunpack.c.l.b16 %v3765
  %v4512 = vunpack.c.h.b16 %v3765
  %v4513 = vunpack.c.l.b16 %v3766
  %v4514 = vunpack.c.h.b16 %v3766
  %v4515 = vunpack.c.l.b16 %v3767
  %v4516 = vunpack.c.h.b16 %v3767
  %v4517 = vunpack.c.l.b16 %v3768
  %v4518 = vunpack.c.h.b16 %v3768
  %v4519 = vunpack.c.l.b16 %v3769
  %v4520 = vunpack.c.h.b16 %v3769
  %v4521 = vunpack.c.l.b16 %v3770
  %v4522 = vunpack.c.h.b16 %v3770
  %v4523 = vunpack.c.l.b16 %v3771
  %v4524 = vunpack.c.h.b16 %v3771
  %v4525 = vunpack.c.l.b16 %v3772
  %v4526 = vunpack.c.h.b16 %v3772
  %v4527 = vunpack.c.l.b16 %v3773
  %v4528 = vunpack.c.h.b16 %v3773
  %v4529 = vunpack.c.l.b16 %v3774
  %v4530 = vunpack.c.h.b16 %v3774
  %v4531 = vunpack.c.l.b16 %v3775
  %v4532 = vunpack.c.h.b16 %v3775
  %v4533 = vunpack.c.l.b16 %v3776
  %v4534 = vunpack.c.h.b16 %v3776
  %v4535 = vunpack.c.l.b16 %v3777
  %v4536 = vunpack.c.h.b16 %v3777
  %v4537 = vunpack.c.l.b16 %v3778
  %v4538 = vunpack.c.h.b16 %v3778
  %v4539 = vunpack.c.l.b16 %v3779
  %v4540 = vunpack.c.h.b16 %v3779
  %v4541 = vunpack.c.l.b16 %v3780
  %v4542 = vunpack.c.h.b16 %v3780
  %v4543 = vunpack.c.l.b16 %v3781
  %v4544 = vunpack.c.h.b16 %v3781
  %v4545 = vunpack.c.l.b16 %v3782
  %v4546 = vunpack.c.h.b16 %v3782
  %v4547 = vunpack.c.l.b16 %v3783
  %v4548 = vunpack.c.h.b16 %v3783
  %v4549 = vunpack.c.l.b16 %v3784
  %v4550 = vunpack.c.h.b16 %v3784
  %v4551 = vunpack.c.l.b16 %v3785
  %v4552 = vunpack.c.h.b16 %v3785
  %v4553 = vunpack.c.l.b16 %v3786
  %v4554 = vunpack.c.h.b16 %v3786
  %v4555 = vunpack.c.l.b16 %v3787
  %v4556 = vunpack.c.h.b16 %v3787
  %v4557 = vunpack.c.l.b16 %v3788
  %v4558 = vunpack.c.h.b16 %v3788
  %v4559 = vunpack.c.l.b16 %v3789
  %v4560 = vunpack.c.h.b16 %v3789
  %v4561 = vunpack.c.l.b16 %v3790
  %v4562 = vunpack.c.h.b16 %v3790
  %v4563 = vunpack.c.l.b16 %v3791
  %v4564 = vunpack.c.h.b16 %v3791
  %v4565 = vunpack.c.l.b16 %v3792
  %v4566 = vunpack.c.h.b16 %v3792
  %v4567 = vunpack.c.l.b16 %v3793
  %v4568 = vunpack.c.h.b16 %v3793
  %v4569 = vunpack.c.l.b16 %v3794
  %v4570 = vunpack.c.h.b16 %v3794
  %v4571 = vunpack.c.l.b16 %v3795
  %v4572 = vunpack.c.h.b16 %v3795
  %v4573 = vunpack.c.l.b16 %v3796
  %v4574 = vunpack.c.h.b16 %v3796
  %v4575 = vunpack.c.l.b16 %v3797
  %v4576 = vunpack.c.h.b16 %v3797
  %v4577 = vunpack.c.l.b16 %v3798
  %v4578 = vunpack.c.h.b16 %v3798
  %v4579 = vunpack.c.l.b16 %v3799
  %v4580 = vunpack.c.h.b16 %v3799
  %v4581 = vunpack.c.l.b16 %v3800
  %v4582 = vunpack.c.h.b16 %v3800
  %v4583 = vunpack.c.l.b16 %v3801
  %v4584 = vunpack.c.h.b16 %v3801
  %v4585 = vunpack.c.l.b16 %v3802
  %v4586 = vunpack.c.h.b16 %v3802
  %v4587 = vunpack.c.l.b16 %v3803
  %v4588 = vunpack.c.h.b16 %v3803
  %v4589 = vunpack.c.l.b16 %v3804
  %v4590 = vunpack.c.h.b16 %v3804
  %v4591 = vunpack.c.l.b16 %v3805
  %v4592 = vunpack.c.h.b16 %v3805
  %v4593 = vunpack.c.l.b16 %v3806
  %v4594 = vunpack.c.h.b16 %v3806
  %v4595 = vunpack.c.l.b16 %v3807
  %v4596 = vunpack.c.h.b16 %v3807
  %v4597 = vunpack.c.l.b16 %v3808
  %v4598 = vunpack.c.h.b16 %v3808
  %v4599 = vpack.c.b16 %v4091, %v4087
  %v4600 = vpack.c.b16 %v4092, %v4088
  %v4601 = vpack.c.b16 %v4093, %v4089
  %v4602 = vpack.c.b16 %v4094, %v4090
  %v4603 = vpack.c.b16 %v4099, %v4095
  %v4604 = vpack.c.b16 %v4100, %v4096
  %v4605 = vpack.c.b16 %v4101, %v4097
  %v4606 = vpack.c.b16 %v4102, %v4098
  %v4607 = vpack.c.b16 %v4107, %v4103
  %v4608 = vpack.c.b16 %v4108, %v4104
  %v4609 = vpack.c.b16 %v4109, %v4105
  %v4610 = vpack.c.b16 %v4110, %v4106
  %v4611 = vpack.c.b16 %v4115, %v4111
  %v4612 = vpack.c.b16 %v4116, %v4112
  %v4613 = vpack.c.b16 %v4117, %v4113
  %v4614 = vpack.c.b16 %v4118, %v4114
  %v4615 = vpack.c.b16 %v4123, %v4119
  %v4616 = vpack.c.b16 %v4124, %v4120
  %v4617 = vpack.c.b16 %v4125, %v4121
  %v4618 = vpack.c.b16 %v4126, %v4122
  %v4619 = vpack.c.b16 %v4131, %v4127
  %v4620 = vpack.c.b16 %v4132, %v4128
  %v4621 = vpack.c.b16 %v4133, %v4129
  %v4622 = vpack.c.b16 %v4134, %v4130
  %v4623 = vpack.c.b16 %v4139, %v4135
  %v4624 = vpack.c.b16 %v4140, %v4136
  %v4625 = vpack.c.b16 %v4141, %v4137
  %v4626 = vpack.c.b16 %v4142, %v4138
  %v4627 = vpack.c.b16 %v4147, %v4143
  %v4628 = vpack.c.b16 %v4148, %v4144
  %v4629 = vpack.c.b16 %v4149, %v4145
  %v4630 = vpack.c.b16 %v4150, %v4146
  %v4631 = vpack.c.b16 %v4155, %v4151
  %v4632 = vpack.c.b16 %v4156, %v4152
  %v4633 = vpack.c.b16 %v4157, %v4153
  %v4634 = vpack.c.b16 %v4158, %v4154
  %v4635 = vpack.c.b16 %v4163, %v4159
  %v4636 = vpack.c.b16 %v4164, %v4160
  %v4637 = vpack.c.b16 %v4165, %v4161
  %v4638 = vpack.c.b16 %v4166, %v4162
  %v4639 = vpack.c.b16 %v4171, %v4167
  %v4640 = vpack.c.b16 %v4172, %v4168
  %v4641 = vpack.c.b16 %v4173, %v4169
  %v4642 = vpack.c.b16 %v4174, %v4170
  %v4643 = vpack.c.b16 %v4179, %v4175
  %v4644 = vpack.c.b16 %v4180, %v4176
  %v4645 = vpack.c.b16 %v4181, %v4177
  %v4646 = vpack.c.b16 %v4182, %v4178
  %v4647 = vpack.c.b16 %v4187, %v4183
  %v4648 = vpack.c.b16 %v4188, %v4184
  %v4649 = vpack.c.b16 %v4189, %v4185
  %v4650 = vpack.c.b16 %v4190, %v4186
  %v4651 = vpack.c.b16 %v4195, %v4191
  %v4652 = vpack.c.b16 %v4196, %v4192
  %v4653 = vpack.c.b16 %v4197, %v4193
  %v4654 = vpack.c.b16 %v4198, %v4194
  %v4655 = vpack.c.b16 %v4203, %v4199
  %v4656 = vpack.c.b16 %v4204, %v4200
  %v4657 = vpack.c.b16 %v4205, %v4201
  %v4658 = vpack.c.b16 %v4206, %v4202
  %v4659 = vpack.c.b16 %v4211, %v4207
  %v4660 = vpack.c.b16 %v4212, %v4208
  %v4661 = vpack.c.b16 %v4213, %v4209
  %v4662 = vpack.c.b16 %v4214, %v4210
  %v4663 = vpack.c.b16 %v4219, %v4215
  %v4664 = vpack.c.b16 %v4220, %v4216
  %v4665 = vpack.c.b16 %v4221, %v4217
  %v4666 = vpack.c.b16 %v4222, %v4218
  %v4667 = vpack.c.b16 %v4227, %v4223
  %v4668 = vpack.c.b16 %v4228, %v4224
  %v4669 = vpack.c.b16 %v4229, %v4225
  %v4670 = vpack.c.b16 %v4230, %v4226
  %v4671 = vpack.c.b16 %v4235, %v4231
  %v4672 = vpack.c.b16 %v4236, %v4232
  %v4673 = vpack.c.b16 %v4237, %v4233
  %v4674 = vpack.c.b16 %v4238, %v4234
  %v4675 = vpack.c.b16 %v4243, %v4239
  %v4676 = vpack.c.b16 %v4244, %v4240
  %v4677 = vpack.c.b16 %v4245, %v4241
  %v4678 = vpack.c.b16 %v4246, %v4242
  %v4679 = vpack.c.b16 %v4251, %v4247
  %v4680 = vpack.c.b16 %v4252, %v4248
  %v4681 = vpack.c.b16 %v4253, %v4249
  %v4682 = vpack.c.b16 %v4254, %v4250
  %v4683 = vpack.c.b16 %v4259, %v4255
  %v4684 = vpack.c.b16 %v4260, %v4256
  %v4685 = vpack.c.b16 %v4261, %v4257
  %v4686 = vpack.c.b16 %v4262, %v4258
  %v4687 = vpack.c.b16 %v4267, %v4263
  %v4688 = vpack.c.b16 %v4268, %v4264
  %v4689 = vpack.c.b16 %v4269, %v4265
  %v4690 = vpack.c.b16 %v4270, %v4266
  %v4691 = vpack.c.b16 %v4275, %v4271
  %v4692 = vpack.c.b16 %v4276, %v4272
  %v4693 = vpack.c.b16 %v4277, %v4273
  %v4694 = vpack.c.b16 %v4278, %v4274
  %v4695 = vpack.c.b16 %v4283, %v4279
  %v4696 = vpack.c.b16 %v4284, %v4280
  %v4697 = vpack.c.b16 %v4285, %v4281
  %v4698 = vpack.c.b16 %v4286, %v4282
  %v4699 = vpack.c.b16 %v4291, %v4287
  %v4700 = vpack.c.b16 %v4292, %v4288
  %v4701 = vpack.c.b16 %v4293, %v4289
  %v4702 = vpack.c.b16 %v4294, %v4290
  %v4703 = vpack.c.b16 %v4299, %v4295
  %v4704 = vpack.c.b16 %v4300, %v4296
  %v4705 = vpack.c.b16 %v4301, %v4297
  %v4706 = vpack.c.b16 %v4302, %v4298
  %v4707 = vpack.c.b16 %v4307, %v4303
  %v4708 = vpack.c.b16 %v4308, %v4304
  %v4709 = vpack.c.b16 %v4309, %v4305
  %v4710 = vpack.c.b16 %v4310, %v4306
  %v4711 = vpack.c.b16 %v4315, %v4311
  %v4712 = vpack.c.b16 %v4316, %v4312
  %v4713 = vpack.c.b16 %v4317, %v4313
  %v4714 = vpack.c.b16 %v4318, %v4314
  %v4715 = vpack.c.b16 %v4323, %v4319
  %v4716 = vpack.c.b16 %v4324, %v4320
  %v4717 = vpack.c.b16 %v4325, %v4321
  %v4718 = vpack.c.b16 %v4326, %v4322
  %v4719 = vpack.c.b16 %v4331, %v4327
  %v4720 = vpack.c.b16 %v4332, %v4328
  %v4721 = vpack.c.b16 %v4333, %v4329
  %v4722 = vpack.c.b16 %v4334, %v4330
  %v4723 = vpack.c.b16 %v4339, %v4335
  %v4724 = vpack.c.b16 %v4340, %v4336
  %v4725 = vpack.c.b16 %v4341, %v4337
  %v4726 = vpack.c.b16 %v4342, %v4338
  %v4727 = vpack.c.b16 %v4347, %v4343
  %v4728 = vpack.c.b16 %v4348, %v4344
  %v4729 = vpack.c.b16 %v4349, %v4345
  %v4730 = vpack.c.b16 %v4350, %v4346
  %v4731 = vpack.c.b16 %v4355, %v4351
  %v4732 = vpack.c.b16 %v4356, %v4352
  %v4733 = vpack.c.b16 %v4357, %v4353
  %v4734 = vpack.c.b16 %v4358, %v4354
  %v4735 = vpack.c.b16 %v4363, %v4359
  %v4736 = vpack.c.b16 %v4364, %v4360
  %v4737 = vpack.c.b16 %v4365, %v4361
  %v4738 = vpack.c.b16 %v4366, %v4362
  %v4739 = vpack.c.b16 %v4371, %v4367
  %v4740 = vpack.c.b16 %v4372, %v4368
  %v4741 = vpack.c.b16 %v4373, %v4369
  %v4742 = vpack.c.b16 %v4374, %v4370
  %v4743 = vpack.c.b16 %v4379, %v4375
  %v4744 = vpack.c.b16 %v4380, %v4376
  %v4745 = vpack.c.b16 %v4381, %v4377
  %v4746 = vpack.c.b16 %v4382, %v4378
  %v4747 = vpack.c.b16 %v4387, %v4383
  %v4748 = vpack.c.b16 %v4388, %v4384
  %v4749 = vpack.c.b16 %v4389, %v4385
  %v4750 = vpack.c.b16 %v4390, %v4386
  %v4751 = vpack.c.b16 %v4395, %v4391
  %v4752 = vpack.c.b16 %v4396, %v4392
  %v4753 = vpack.c.b16 %v4397, %v4393
  %v4754 = vpack.c.b16 %v4398, %v4394
  %v4755 = vpack.c.b16 %v4403, %v4399
  %v4756 = vpack.c.b16 %v4404, %v4400
  %v4757 = vpack.c.b16 %v4405, %v4401
  %v4758 = vpack.c.b16 %v4406, %v4402
  %v4759 = vpack.c.b16 %v4411, %v4407
  %v4760 = vpack.c.b16 %v4412, %v4408
  %v4761 = vpack.c.b16 %v4413, %v4409
  %v4762 = vpack.c.b16 %v4414, %v4410
  %v4763 = vpack.c.b16 %v4419, %v4415
  %v4764 = vpack.c.b16 %v4420, %v4416
  %v4765 = vpack.c.b16 %v4421, %v4417
  %v4766 = vpack.c.b16 %v4422, %v4418
  %v4767 = vpack.c.b16 %v4427, %v4423
  %v4768 = vpack.c.b16 %v4428, %v4424
  %v4769 = vpack.c.b16 %v4429, %v4425
  %v4770 = vpack.c.b16 %v4430, %v4426
  %v4771 = vpack.c.b16 %v4435, %v4431
  %v4772 = vpack.c.b16 %v4436, %v4432
  %v4773 = vpack.c.b16 %v4437, %v4433
  %v4774 = vpack.c.b16 %v4438, %v4434
  %v4775 = vpack.c.b16 %v4443, %v4439
  %v4776 = vpack.c.b16 %v4444, %v4440
  %v4777 = vpack.c.b16 %v4445, %v4441
  %v4778 = vpack.c.b16 %v4446, %v4442
  %v4779 = vpack.c.b16 %v4451, %v4447
  %v4780 = vpack.c.b16 %v4452, %v4448
  %v4781 = vpack.c.b16 %v4453, %v4449
  %v4782 = vpack.c.b16 %v4454, %v4450
  %v4783 = vpack.c.b16 %v4459, %v4455
  %v4784 = vpack.c.b16 %v4460, %v4456
  %v4785 = vpack.c.b16 %v4461, %v4457
  %v4786 = vpack.c.b16 %v4462, %v4458
  %v4787 = vpack.c.b16 %v4467, %v4463
  %v4788 = vpack.c.b16 %v4468, %v4464
  %v4789 = vpack.c.b16 %v4469, %v4465
  %v4790 = vpack.c.b16 %v4470, %v4466
  %v4791 = vpack.c.b16 %v4475, %v4471
  %v4792 = vpack.c.b16 %v4476, %v4472
  %v4793 = vpack.c.b16 %v4477, %v4473
  %v4794 = vpack.c.b16 %v4478, %v4474
  %v4795 = vpack.c.b16 %v4483, %v4479
  %v4796 = vpack.c.b16 %v4484, %v4480
  %v4797 = vpack.c.b16 %v4485, %v4481
  %v4798 = vpack.c.b16 %v4486, %v4482
  %v4799 = vpack.c.b16 %v4491, %v4487
  %v4800 = vpack.c.b16 %v4492, %v4488
  %v4801 = vpack.c.b16 %v4493, %v4489
  %v4802 = vpack.c.b16 %v4494, %v4490
  %v4803 = vpack.c.b16 %v4499, %v4495
  %v4804 = vpack.c.b16 %v4500, %v4496
  %v4805 = vpack.c.b16 %v4501, %v4497
  %v4806 = vpack.c.b16 %v4502, %v4498
  %v4807 = vpack.c.b16 %v4507, %v4503
  %v4808 = vpack.c.b16 %v4508, %v4504
  %v4809 = vpack.c.b16 %v4509, %v4505
  %v4810 = vpack.c.b16 %v4510, %v4506
  %v4811 = vpack.c.b16 %v4515, %v4511
  %v4812 = vpack.c.b16 %v4516, %v4512
  %v4813 = vpack.c.b16 %v4517, %v4513
  %v4814 = vpack.c.b16 %v4518, %v4514
  %v4815 = vpack.c.b16 %v4523, %v4519
  %v4816 = vpack.c.b16 %v4524, %v4520
  %v4817 = vpack.c.b16 %v4525, %v4521
  %v4818 = vpack.c.b16 %v4526, %v4522
  %v4819 = vpack.c.b16 %v4531, %v4527
  %v4820 = vpack.c.b16 %v4532, %v4528
  %v4821 = vpack.c.b16 %v4533, %v4529
  %v4822 = vpack.c.b16 %v4534, %v4530
  %v4823 = vpack.c.b16 %v4539, %v4535
  %v4824 = vpack.c.b16 %v4540, %v4536
  %v4825 = vpack.c.b16 %v4541, %v4537
  %v4826 = vpack.c.b16 %v4542, %v4538
  %v4827 = vpack.c.b16 %v4547, %v4543
  %v4828 = vpack.c.b16 %v4548, %v4544
  %v4829 = vpack.c.b16 %v4549, %v4545
  %v4830 = vpack.c.b16 %v4550, %v4546
  %v4831 = vpack.c.b16 %v4555, %v4551
  %v4832 = vpack.c.b16 %v4556, %v4552
  %v4833 = vpack.c.b16 %v4557, %v4553
  %v4834 = vpack.c.b16 %v4558, %v4554
  %v4835 = vpack.c.b16 %v4563, %v4559
  %v4836 = vpack.c.b16 %v4564, %v4560
  %v4837 = vpack.c.b16 %v4565, %v4561
  %v4838 = vpack.c.b16 %v4566, %v4562
  %v4839 = vpack.c.b16 %v4571, %v4567
  %v4840 = vpack.c.b16 %v4572, %v4568
  %v4841 = vpack.c.b16 %v4573, %v4569
  %v4842 = vpack.c.b16 %v4574, %v4570
  %v4843 = vpack.c.b16 %v4579, %v4575
  %v4844 = vpack.c.b16 %v4580, %v4576
  %v4845 = vpack.c.b16 %v4581, %v4577
  %v4846 = vpack.c.b16 %v4582, %v4578
  %v4847 = vpack.c.b16 %v4587, %v4583
  %v4848 = vpack.c.b16 %v4588, %v4584
  %v4849 = vpack.c.b16 %v4589, %v4585
  %v4850 = vpack.c.b16 %v4590, %v4586
  %v4851 = vpack.c.b16 %v4595, %v4591
  %v4852 = vpack.c.b16 %v4596, %v4592
  %v4853 = vpack.c.b16 %v4597, %v4593
  %v4854 = vpack.c.b16 %v4598, %v4594
  %5111 = vmatprep.subr.bf16.mxu0 %v4600
  %5112 = vmatpush1.bf16.msra.mxu0 %v4599
  %5113 = vmatprep.subr.bf16.mxu0 %v4604
  %5114 = vmatpush1.bf16.msra.mxu0 %v4603
  %5115 = vmatprep.subr.bf16.mxu0 %v4608
  %5116 = vmatpush1.bf16.msra.mxu0 %v4607
  %5117 = vmatprep.subr.bf16.mxu0 %v4612
  %5118 = vmatpush1.bf16.msra.mxu0 %v4611
  %5119 = vmatprep.subr.bf16.mxu0 %v4616
  %5120 = vmatpush1.bf16.msra.mxu0 %v4615
  %5121 = vmatprep.subr.bf16.mxu0 %v4620
  %5122 = vmatpush1.bf16.msra.mxu0 %v4619
  %5123 = vmatprep.subr.bf16.mxu0 %v4624
  %5124 = vmatpush1.bf16.msra.mxu0 %v4623
  %5125 = vmatprep.subr.bf16.mxu0 %v4628
  %5126 = vmatpush1.bf16.msra.mxu0 %v4627
  %5127 = vmatprep.subr.bf16.mxu0 %v4632
  %5128 = vmatpush1.bf16.msra.mxu0 %v4631
  %5129 = vmatprep.subr.bf16.mxu0 %v4636
  %5130 = vmatpush1.bf16.msra.mxu0 %v4635
  %5131 = vmatprep.subr.bf16.mxu0 %v4640
  %5132 = vmatpush1.bf16.msra.mxu0 %v4639
  %5133 = vmatprep.subr.bf16.mxu0 %v4644
  %5134 = vmatpush1.bf16.msra.mxu0 %v4643
  %5135 = vmatprep.subr.bf16.mxu0 %v4648
  %5136 = vmatpush1.bf16.msra.mxu0 %v4647
  %5137 = vmatprep.subr.bf16.mxu0 %v4652
  %5138 = vmatpush1.bf16.msra.mxu0 %v4651
  %5139 = vmatprep.subr.bf16.mxu0 %v4656
  %5140 = vmatpush1.bf16.msra.mxu0 %v4655
  %5141 = vmatprep.subr.bf16.mxu0 %v4660
  %5142 = vmatpush1.bf16.msra.mxu0 %v4659
  %5143 = vmatprep.mubr.bf16.mxu0 %v3546
  %5144 = vmatmul.mubr.bf16.gmra.mrb[0].mxu0 %v3545
  %v5145 = vpop.f32.mrb[0].mxu0
  %v5146 = vadd.f32 %v3814, %v5145
  %v5147 = vpop.f32.mrb[0].mxu0
  %v5148 = vadd.f32 %v3818, %v5147
  %v5149 = vpop.f32.mrb[0].mxu0
  %v5150 = vadd.f32 %v3814, %v5149
  %v5151 = vpop.f32.mrb[0].mxu0
  %v5152 = vadd.f32 %v3818, %v5151
  %5153 = vdwg.mxu0
  %5154 = vmatprep.subr.bf16.mxu0 %v4664
  %5155 = vmatpush1.bf16.msra.mxu0 %v4663
  %5156 = vmatprep.subr.bf16.mxu0 %v4668
  %5157 = vmatpush1.bf16.msra.mxu0 %v4667
  %5158 = vmatprep.subr.bf16.mxu0 %v4672
  %5159 = vmatpush1.bf16.msra.mxu0 %v4671
  %5160 = vmatprep.subr.bf16.mxu0 %v4676
  %5161 = vmatpush1.bf16.msra.mxu0 %v4675
  %5162 = vmatprep.subr.bf16.mxu0 %v4680
  %5163 = vmatpush1.bf16.msra.mxu0 %v4679
  %5164 = vmatprep.subr.bf16.mxu0 %v4684
  %5165 = vmatpush1.bf16.msra.mxu0 %v4683
  %5166 = vmatprep.subr.bf16.mxu0 %v4688
  %5167 = vmatpush1.bf16.msra.mxu0 %v4687
  %5168 = vmatprep.subr.bf16.mxu0 %v4692
  %5169 = vmatpush1.bf16.msra.mxu0 %v4691
  %5170 = vmatprep.subr.bf16.mxu0 %v4696
  %5171 = vmatpush1.bf16.msra.mxu0 %v4695
  %5172 = vmatprep.subr.bf16.mxu0 %v4700
  %5173 = vmatpush1.bf16.msra.mxu0 %v4699
  %5174 = vmatprep.subr.bf16.mxu0 %v4704
  %5175 = vmatpush1.bf16.msra.mxu0 %v4703
  %5176 = vmatprep.subr.bf16.mxu0 %v4708
  %5177 = vmatpush1.bf16.msra.mxu0 %v4707
  %5178 = vmatprep.subr.bf16.mxu0 %v4712
  %5179 = vmatpush1.bf16.msra.mxu0 %v4711
  %5180 = vmatprep.subr.bf16.mxu0 %v4716
  %5181 = vmatpush1.bf16.msra.mxu0 %v4715
  %5182 = vmatprep.subr.bf16.mxu0 %v4720
  %5183 = vmatpush1.bf16.msra.mxu0 %v4719
  %5184 = vmatprep.subr.bf16.mxu0 %v4724
  %5185 = vmatpush1.bf16.msra.mxu0 %v4723
  %5186 = vmatprep.mubr.bf16.mxu0 %v3548
  %5187 = vmatmul.mubr.bf16.gmra.mrb[0].mxu0 %v3547
  %v5188 = vpop.f32.mrb[0].mxu0
  %v5189 = vadd.f32 %v5146, %v5188
  %v5190 = vpop.f32.mrb[0].mxu0
  %v5191 = vadd.f32 %v5148, %v5190
  %v5192 = vpop.f32.mrb[0].mxu0
  %v5193 = vadd.f32 %v5150, %v5192
  %v5194 = vpop.f32.mrb[0].mxu0
  %v5195 = vadd.f32 %v5152, %v5194
  %5196 = vdwg.mxu0
  %5197 = vmatprep.subr.bf16.mxu0 %v4728
  %5198 = vmatpush1.bf16.msra.mxu0 %v4727
  %5199 = vmatprep.subr.bf16.mxu0 %v4732
  %5200 = vmatpush1.bf16.msra.mxu0 %v4731
  %5201 = vmatprep.subr.bf16.mxu0 %v4736
  %5202 = vmatpush1.bf16.msra.mxu0 %v4735
  %5203 = vmatprep.subr.bf16.mxu0 %v4740
  %5204 = vmatpush1.bf16.msra.mxu0 %v4739
  %5205 = vmatprep.subr.bf16.mxu0 %v4744
  %5206 = vmatpush1.bf16.msra.mxu0 %v4743
  %5207 = vmatprep.subr.bf16.mxu0 %v4748
  %5208 = vmatpush1.bf16.msra.mxu0 %v4747
  %5209 = vmatprep.subr.bf16.mxu0 %v4752
  %5210 = vmatpush1.bf16.msra.mxu0 %v4751
  %5211 = vmatprep.subr.bf16.mxu0 %v4756
  %5212 = vmatpush1.bf16.msra.mxu0 %v4755
  %5213 = vmatprep.subr.bf16.mxu0 %v4760
  %5214 = vmatpush1.bf16.msra.mxu0 %v4759
  %5215 = vmatprep.subr.bf16.mxu0 %v4764
  %5216 = vmatpush1.bf16.msra.mxu0 %v4763
  %5217 = vmatprep.subr.bf16.mxu0 %v4768
  %5218 = vmatpush1.bf16.msra.mxu0 %v4767
  %5219 = vmatprep.subr.bf16.mxu0 %v4772
  %5220 = vmatpush1.bf16.msra.mxu0 %v4771
  %5221 = vmatprep.subr.bf16.mxu0 %v4776
  %5222 = vmatpush1.bf16.msra.mxu0 %v4775
  %5223 = vmatprep.subr.bf16.mxu0 %v4780
  %5224 = vmatpush1.bf16.msra.mxu0 %v4779
  %5225 = vmatprep.subr.bf16.mxu0 %v4784
  %5226 = vmatpush1.bf16.msra.mxu0 %v4783
  %5227 = vmatprep.subr.bf16.mxu0 %v4788
  %5228 = vmatpush1.bf16.msra.mxu0 %v4787
  %5229 = vmatprep.mubr.bf16.mxu0 %v3550
  %5230 = vmatmul.mubr.bf16.gmra.mrb[0].mxu0 %v3549
  %v5231 = vpop.f32.mrb[0].mxu0
  %v5232 = vadd.f32 %v5189, %v5231
  %v5233 = vpop.f32.mrb[0].mxu0
  %v5234 = vadd.f32 %v5191, %v5233
  %v5235 = vpop.f32.mrb[0].mxu0
  %v5236 = vadd.f32 %v5193, %v5235
  %v5237 = vpop.f32.mrb[0].mxu0
  %v5238 = vadd.f32 %v5195, %v5237
  %5239 = vdwg.mxu0
  %5240 = vmatprep.subr.bf16.mxu0 %v4792
  %5241 = vmatpush1.bf16.msra.mxu0 %v4791
  %5242 = vmatprep.subr.bf16.mxu0 %v4796
  %5243 = vmatpush1.bf16.msra.mxu0 %v4795
  %5244 = vmatprep.subr.bf16.mxu0 %v4800
  %5245 = vmatpush1.bf16.msra.mxu0 %v4799
  %5246 = vmatprep.subr.bf16.mxu0 %v4804
  %5247 = vmatpush1.bf16.msra.mxu0 %v4803
  %5248 = vmatprep.subr.bf16.mxu0 %v4808
  %5249 = vmatpush1.bf16.msra.mxu0 %v4807
  %5250 = vmatprep.subr.bf16.mxu0 %v4812
  %5251 = vmatpush1.bf16.msra.mxu0 %v4811
  %5252 = vmatprep.subr.bf16.mxu0 %v4816
  %5253 = vmatpush1.bf16.msra.mxu0 %v4815
  %5254 = vmatprep.subr.bf16.mxu0 %v4820
  %5255 = vmatpush1.bf16.msra.mxu0 %v4819
  %5256 = vmatprep.subr.bf16.mxu0 %v4824
  %5257 = vmatpush1.bf16.msra.mxu0 %v4823
  %5258 = vmatprep.subr.bf16.mxu0 %v4828
  %5259 = vmatpush1.bf16.msra.mxu0 %v4827
  %5260 = vmatprep.subr.bf16.mxu0 %v4832
  %5261 = vmatpush1.bf16.msra.mxu0 %v4831
  %5262 = vmatprep.subr.bf16.mxu0 %v4836
  %5263 = vmatpush1.bf16.msra.mxu0 %v4835
  %5264 = vmatprep.subr.bf16.mxu0 %v4840
  %5265 = vmatpush1.bf16.msra.mxu0 %v4839
  %5266 = vmatprep.subr.bf16.mxu0 %v4844
  %5267 = vmatpush1.bf16.msra.mxu0 %v4843
  %5268 = vmatprep.subr.bf16.mxu0 %v4848
  %5269 = vmatpush1.bf16.msra.mxu0 %v4847
  %5270 = vmatprep.subr.bf16.mxu0 %v4852
  %5271 = vmatpush1.bf16.msra.mxu0 %v4851
  %5272 = vmatprep.mubr.bf16.mxu0 %v3552
  %5273 = vmatmul.mubr.bf16.gmra.mrb[0].mxu0 %v3551
  %v5274 = vpop.f32.mrb[0].mxu0
  %v5275 = vadd.f32 %v5232, %v5274
  %v5276 = vpop.f32.mrb[0].mxu0
  %v5277 = vadd.f32 %v5234, %v5276
  %v5278 = vpop.f32.mrb[0].mxu0
  %v5279 = vadd.f32 %v5236, %v5278
  %v5280 = vpop.f32.mrb[0].mxu0
  %v5281 = vadd.f32 %v5238, %v5280
  %5282 = vdwg.mxu0
  %5283 = vmatprep.subr.bf16.mxu0 %v4602
  %5284 = vmatpush1.bf16.msra.mxu0 %v4601
  %5285 = vmatprep.subr.bf16.mxu0 %v4606
  %5286 = vmatpush1.bf16.msra.mxu0 %v4605
  %5287 = vmatprep.subr.bf16.mxu0 %v4610
  %5288 = vmatpush1.bf16.msra.mxu0 %v4609
  %5289 = vmatprep.subr.bf16.mxu0 %v4614
  %5290 = vmatpush1.bf16.msra.mxu0 %v4613
  %5291 = vmatprep.subr.bf16.mxu0 %v4618
  %5292 = vmatpush1.bf16.msra.mxu0 %v4617
  %5293 = vmatprep.subr.bf16.mxu0 %v4622
  %5294 = vmatpush1.bf16.msra.mxu0 %v4621
  %5295 = vmatprep.subr.bf16.mxu0 %v4626
  %5296 = vmatpush1.bf16.msra.mxu0 %v4625
  %5297 = vmatprep.subr.bf16.mxu0 %v4630
  %5298 = vmatpush1.bf16.msra.mxu0 %v4629
  %5299 = vmatprep.subr.bf16.mxu0 %v4634
  %5300 = vmatpush1.bf16.msra.mxu0 %v4633
  %5301 = vmatprep.subr.bf16.mxu0 %v4638
  %5302 = vmatpush1.bf16.msra.mxu0 %v4637
  %5303 = vmatprep.subr.bf16.mxu0 %v4642
  %5304 = vmatpush1.bf16.msra.mxu0 %v4641
  %5305 = vmatprep.subr.bf16.mxu0 %v4646
  %5306 = vmatpush1.bf16.msra.mxu0 %v4645
  %5307 = vmatprep.subr.bf16.mxu0 %v4650
  %5308 = vmatpush1.bf16.msra.mxu0 %v4649
  %5309 = vmatprep.subr.bf16.mxu0 %v4654
  %5310 = vmatpush1.bf16.msra.mxu0 %v4653
  %5311 = vmatprep.subr.bf16.mxu0 %v4658
  %5312 = vmatpush1.bf16.msra.mxu0 %v4657
  %5313 = vmatprep.subr.bf16.mxu0 %v4662
  %5314 = vmatpush1.bf16.msra.mxu0 %v4661
  %5315 = vmatprep.mubr.bf16.mxu0 %v3546
  %5316 = vmatmul.mubr.bf16.gmra.mrb[0].mxu0 %v3545
  %v5317 = vpop.f32.mrb[0].mxu0
  %v5318 = vadd.f32 %v3822, %v5317
  %v5319 = vpop.f32.mrb[0].mxu0
  %v5320 = vadd.f32 %v3826, %v5319
  %v5321 = vpop.f32.mrb[0].mxu0
  %v5322 = vadd.f32 %v3822, %v5321
  %v5323 = vpop.f32.mrb[0].mxu0
  %v5324 = vadd.f32 %v3826, %v5323
  %5325 = vdwg.mxu0
  %5326 = vmatprep.subr.bf16.mxu0 %v4666
  %5327 = vmatpush1.bf16.msra.mxu0 %v4665
  %5328 = vmatprep.subr.bf16.mxu0 %v4670
  %5329 = vmatpush1.bf16.msra.mxu0 %v4669
  %5330 = vmatprep.subr.bf16.mxu0 %v4674
  %5331 = vmatpush1.bf16.msra.mxu0 %v4673
  %5332 = vmatprep.subr.bf16.mxu0 %v4678
  %5333 = vmatpush1.bf16.msra.mxu0 %v4677
  %5334 = vmatprep.subr.bf16.mxu0 %v4682
  %5335 = vmatpush1.bf16.msra.mxu0 %v4681
  %5336 = vmatprep.subr.bf16.mxu0 %v4686
  %5337 = vmatpush1.bf16.msra.mxu0 %v4685
  %5338 = vmatprep.subr.bf16.mxu0 %v4690
  %5339 = vmatpush1.bf16.msra.mxu0 %v4689
  %5340 = vmatprep.subr.bf16.mxu0 %v4694
  %5341 = vmatpush1.bf16.msra.mxu0 %v4693
  %5342 = vmatprep.subr.bf16.mxu0 %v4698
  %5343 = vmatpush1.bf16.msra.mxu0 %v4697
  %5344 = vmatprep.subr.bf16.mxu0 %v4702
  %5345 = vmatpush1.bf16.msra.mxu0 %v4701
  %5346 = vmatprep.subr.bf16.mxu0 %v4706
  %5347 = vmatpush1.bf16.msra.mxu0 %v4705
  %5348 = vmatprep.subr.bf16.mxu0 %v4710
  %5349 = vmatpush1.bf16.msra.mxu0 %v4709
  %5350 = vmatprep.subr.bf16.mxu0 %v4714
  %5351 = vmatpush1.bf16.msra.mxu0 %v4713
  %5352 = vmatprep.subr.bf16.mxu0 %v4718
  %5353 = vmatpush1.bf16.msra.mxu0 %v4717
  %5354 = vmatprep.subr.bf16.mxu0 %v4722
  %5355 = vmatpush1.bf16.msra.mxu0 %v4721
  %5356 = vmatprep.subr.bf16.mxu0 %v4726
  %5357 = vmatpush1.bf16.msra.mxu0 %v4725
  %5358 = vmatprep.mubr.bf16.mxu0 %v3548
  %5359 = vmatmul.mubr.bf16.gmra.mrb[0].mxu0 %v3547
  %v5360 = vpop.f32.mrb[0].mxu0
  %v5361 = vadd.f32 %v5318, %v5360
  %v5362 = vpop.f32.mrb[0].mxu0
  %v5363 = vadd.f32 %v5320, %v5362
  %v5364 = vpop.f32.mrb[0].mxu0
  %v5365 = vadd.f32 %v5322, %v5364
  %v5366 = vpop.f32.mrb[0].mxu0
  %v5367 = vadd.f32 %v5324, %v5366
  %5368 = vdwg.mxu0
  %5369 = vmatprep.subr.bf16.mxu0 %v4730
  %5370 = vmatpush1.bf16.msra.mxu0 %v4729
  %5371 = vmatprep.subr.bf16.mxu0 %v4734
  %5372 = vmatpush1.bf16.msra.mxu0 %v4733
  %5373 = vmatprep.subr.bf16.mxu0 %v4738
  %5374 = vmatpush1.bf16.msra.mxu0 %v4737
  %5375 = vmatprep.subr.bf16.mxu0 %v4742
  %5376 = vmatpush1.bf16.msra.mxu0 %v4741
  %5377 = vmatprep.subr.bf16.mxu0 %v4746
  %5378 = vmatpush1.bf16.msra.mxu0 %v4745
  %5379 = vmatprep.subr.bf16.mxu0 %v4750
  %5380 = vmatpush1.bf16.msra.mxu0 %v4749
  %5381 = vmatprep.subr.bf16.mxu0 %v4754
  %5382 = vmatpush1.bf16.msra.mxu0 %v4753
  %5383 = vmatprep.subr.bf16.mxu0 %v4758
  %5384 = vmatpush1.bf16.msra.mxu0 %v4757
  %5385 = vmatprep.subr.bf16.mxu0 %v4762
  %5386 = vmatpush1.bf16.msra.mxu0 %v4761
  %5387 = vmatprep.subr.bf16.mxu0 %v4766
  %5388 = vmatpush1.bf16.msra.mxu0 %v4765
  %5389 = vmatprep.subr.bf16.mxu0 %v4770
  %5390 = vmatpush1.bf16.msra.mxu0 %v4769
  %5391 = vmatprep.subr.bf16.mxu0 %v4774
  %5392 = vmatpush1.bf16.msra.mxu0 %v4773
  %5393 = vmatprep.subr.bf16.mxu0 %v4778
  %5394 = vmatpush1.bf16.msra.mxu0 %v4777
  %5395 = vmatprep.subr.bf16.mxu0 %v4782
  %5396 = vmatpush1.bf16.msra.mxu0 %v4781
  %5397 = vmatprep.subr.bf16.mxu0 %v4786
  %5398 = vmatpush1.bf16.msra.mxu0 %v4785
  %5399 = vmatprep.subr.bf16.mxu0 %v4790
  %5400 = vmatpush1.bf16.msra.mxu0 %v4789
  %5401 = vmatprep.mubr.bf16.mxu0 %v3550
  %5402 = vmatmul.mubr.bf16.gmra.mrb[0].mxu0 %v3549
  %v5403 = vpop.f32.mrb[0].mxu0
  %v5404 = vadd.f32 %v5361, %v5403
  %v5405 = vpop.f32.mrb[0].mxu0
  %v5406 = vadd.f32 %v5363, %v5405
  %v5407 = vpop.f32.mrb[0].mxu0
  %v5408 = vadd.f32 %v5365, %v5407
  %v5409 = vpop.f32.mrb[0].mxu0
  %v5410 = vadd.f32 %v5367, %v5409
  %5411 = vdwg.mxu0
  %5412 = vmatprep.subr.bf16.mxu0 %v4794
  %5413 = vmatpush1.bf16.msra.mxu0 %v4793
  %5414 = vmatprep.subr.bf16.mxu0 %v4798
  %5415 = vmatpush1.bf16.msra.mxu0 %v4797
  %5416 = vmatprep.subr.bf16.mxu0 %v4802
  %5417 = vmatpush1.bf16.msra.mxu0 %v4801
  %5418 = vmatprep.subr.bf16.mxu0 %v4806
  %5419 = vmatpush1.bf16.msra.mxu0 %v4805
  %5420 = vmatprep.subr.bf16.mxu0 %v4810
  %5421 = vmatpush1.bf16.msra.mxu0 %v4809
  %5422 = vmatprep.subr.bf16.mxu0 %v4814
  %5423 = vmatpush1.bf16.msra.mxu0 %v4813
  %5424 = vmatprep.subr.bf16.mxu0 %v4818
  %5425 = vmatpush1.bf16.msra.mxu0 %v4817
  %5426 = vmatprep.subr.bf16.mxu0 %v4822
  %5427 = vmatpush1.bf16.msra.mxu0 %v4821
  %5428 = vmatprep.subr.bf16.mxu0 %v4826
  %5429 = vmatpush1.bf16.msra.mxu0 %v4825
  %5430 = vmatprep.subr.bf16.mxu0 %v4830
  %5431 = vmatpush1.bf16.msra.mxu0 %v4829
  %5432 = vmatprep.subr.bf16.mxu0 %v4834
  %5433 = vmatpush1.bf16.msra.mxu0 %v4833
  %5434 = vmatprep.subr.bf16.mxu0 %v4838
  %5435 = vmatpush1.bf16.msra.mxu0 %v4837
  %5436 = vmatprep.subr.bf16.mxu0 %v4842
  %5437 = vmatpush1.bf16.msra.mxu0 %v4841
  %5438 = vmatprep.subr.bf16.mxu0 %v4846
  %5439 = vmatpush1.bf16.msra.mxu0 %v4845
  %5440 = vmatprep.subr.bf16.mxu0 %v4850
  %5441 = vmatpush1.bf16.msra.mxu0 %v4849
  %5442 = vmatprep.subr.bf16.mxu0 %v4854
  %5443 = vmatpush1.bf16.msra.mxu0 %v4853
  %5444 = vmatprep.mubr.bf16.mxu0 %v3552
  %5445 = vmatmul.mubr.bf16.gmra.mrb[0].mxu0 %v3551
  %v5446 = vpop.f32.mrb[0].mxu0
  %v5447 = vadd.f32 %v5404, %v5446
  %v5448 = vpop.f32.mrb[0].mxu0
  %v5449 = vadd.f32 %v5406, %v5448
  %v5450 = vpop.f32.mrb[0].mxu0
  %v5451 = vadd.f32 %v5408, %v5450
  %v5452 = vpop.f32.mrb[0].mxu0
  %v5453 = vadd.f32 %v5410, %v5452
  %5454 = vdwg.mxu0
  %vm5455 = vcmp.gt.f32.partialorder %v5275, 0.0
  %vm5456 = vcmp.gt.f32.partialorder %v5277, 0.0
  %vm5457 = vcmp.gt.f32.partialorder %v5447, 0.0
  %vm5458 = vcmp.gt.f32.partialorder %v5449, 0.0
  %vm5459 = vcmp.gt.f32.partialorder %v5279, 0.0
  %vm5460 = vcmp.gt.f32.partialorder %v5281, 0.0
  %vm5461 = vcmp.gt.f32.partialorder %v5451, 0.0
  %vm5462 = vcmp.gt.f32.partialorder %v5453, 0.0
  %v5463 = vmul.f32 %v5275, 0.2
  %v5464 = vmul.f32 %v5277, 0.2
  %v5465 = vmul.f32 %v5447, 0.2
  %v5466 = vmul.f32 %v5449, 0.2
  %v5467 = vmul.f32 %v5279, 0.2
  %v5468 = vmul.f32 %v5281, 0.2
  %v5469 = vmul.f32 %v5451, 0.2
  %v5470 = vmul.f32 %v5453, 0.2
  %v5471 = vsel %vm5455, %v5275, %v5463
  %v5472 = vsel %vm5456, %v5277, %v5464
  %v5473 = vsel %vm5457, %v5447, %v5465
  %v5474 = vsel %vm5458, %v5449, %v5466
  %v5475 = vsel %vm5459, %v5279, %v5467
  %v5476 = vsel %vm5460, %v5281, %v5468
  %v5477 = vsel %vm5461, %v5451, %v5469
  %v5478 = vsel %vm5462, %v5453, %v5470
  %v5479 = vpack.c.bf16 %v5475, %v5471
  %v5480 = vpack.c.bf16 %v5476, %v5472
  %v5481 = vpack.c.bf16 %v5477, %v5473
  %v5482 = vpack.c.bf16 %v5478, %v5474
  %v5483 = vld [vmem:[%s5] sm:$0xff]
  %v5484 = vld [vmem:[%s5 + $0x8] sm:$0xff]
  %v5485 = vld [vmem:[%s5 + $0x10] sm:$0xff]
  %v5486 = vld [vmem:[%s5 + $0x18] sm:$0xff]
  %v5487 = vld [vmem:[%s5 + $0x20] sm:$0xff]
  %v5488 = vld [vmem:[%s5 + $0x28] sm:$0xff]
  %v5489 = vld [vmem:[%s5 + $0x30] sm:$0xff]
  %v5490 = vld [vmem:[%s5 + $0x38] sm:$0xff]
  %v5491 = vld [vmem:[%s5 + $0x40] sm:$0xff]
  %v5492 = vld [vmem:[%s5 + $0x48] sm:$0xff]
  %v5493 = vld [vmem:[%s5 + $0x50] sm:$0xff]
  %v5494 = vld [vmem:[%s5 + $0x58] sm:$0xff]
  %v5495 = vld [vmem:[%s5 + $0x60] sm:$0xff]
  %v5496 = vld [vmem:[%s5 + $0x68] sm:$0xff]
  %v5497 = vld [vmem:[%s5 + $0x70] sm:$0xff]
  %v5498 = vld [vmem:[%s5 + $0x78] sm:$0xff]
  %v5499 = vld [vmem:[%s5 + $0x80] sm:$0xff]
  %v5500 = vld [vmem:[%s5 + $0x88] sm:$0xff]
  %v5501 = vld [vmem:[%s5 + $0x90] sm:$0xff]
  %v5502 = vld [vmem:[%s5 + $0x98] sm:$0xff]
  %v5503 = vld [vmem:[%s5 + $0xa0] sm:$0xff]
  %v5504 = vld [vmem:[%s5 + $0xa8] sm:$0xff]
  %v5505 = vld [vmem:[%s5 + $0xb0] sm:$0xff]
  %v5506 = vld [vmem:[%s5 + $0xb8] sm:$0xff]
  %v5507 = vld [vmem:[%s5 + $0xc0] sm:$0xff]
  %v5508 = vld [vmem:[%s5 + $0xc8] sm:$0xff]
  %v5509 = vld [vmem:[%s5 + $0xd0] sm:$0xff]
  %v5510 = vld [vmem:[%s5 + $0xd8] sm:$0xff]
  %v5511 = vld [vmem:[%s5 + $0xe0] sm:$0xff]
  %v5512 = vld [vmem:[%s5 + $0xe8] sm:$0xff]
  %v5513 = vld [vmem:[%s5 + $0xf0] sm:$0xff]
  %v5514 = vld [vmem:[%s5 + $0xf8] sm:$0xff]
  %v5515 = vld [vmem:[%s5 + $0x100] sm:$0xff]
  %v5516 = vld [vmem:[%s5 + $0x108] sm:$0xff]
  %v5517 = vld [vmem:[%s5 + $0x110] sm:$0xff]
  %v5518 = vld [vmem:[%s5 + $0x118] sm:$0xff]
  %v5519 = vld [vmem:[%s5 + $0x120] sm:$0xff]
  %v5520 = vld [vmem:[%s5 + $0x128] sm:$0xff]
  %v5521 = vld [vmem:[%s5 + $0x130] sm:$0xff]
  %v5522 = vld [vmem:[%s5 + $0x138] sm:$0xff]
  %v5523 = vld [vmem:[%s5 + $0x140] sm:$0xff]
  %v5524 = vld [vmem:[%s5 + $0x148] sm:$0xff]
  %v5525 = vld [vmem:[%s5 + $0x150] sm:$0xff]
  %v5526 = vld [vmem:[%s5 + $0x158] sm:$0xff]
  %v5527 = vld [vmem:[%s5 + $0x160] sm:$0xff]
  %v5528 = vld [vmem:[%s5 + $0x168] sm:$0xff]
  %v5529 = vld [vmem:[%s5 + $0x170] sm:$0xff]
  %v5530 = vld [vmem:[%s5 + $0x178] sm:$0xff]
  %v5531 = vld [vmem:[%s5 + $0x180] sm:$0xff]
  %v5532 = vld [vmem:[%s5 + $0x188] sm:$0xff]
  %v5533 = vld [vmem:[%s5 + $0x190] sm:$0xff]
  %v5534 = vld [vmem:[%s5 + $0x198] sm:$0xff]
  %v5535 = vld [vmem:[%s5 + $0x1a0] sm:$0xff]
  %v5536 = vld [vmem:[%s5 + $0x1a8] sm:$0xff]
  %v5537 = vld [vmem:[%s5 + $0x1b0] sm:$0xff]
  %v5538 = vld [vmem:[%s5 + $0x1b8] sm:$0xff]
  %v5539 = vld [vmem:[%s5 + $0x1c0] sm:$0xff]
  %v5540 = vld [vmem:[%s5 + $0x1c8] sm:$0xff]
  %v5541 = vld [vmem:[%s5 + $0x1d0] sm:$0xff]
  %v5542 = vld [vmem:[%s5 + $0x1d8] sm:$0xff]
  %v5543 = vld [vmem:[%s5 + $0x1e0] sm:$0xff]
  %v5544 = vld [vmem:[%s5 + $0x1e8] sm:$0xff]
  %v5545 = vld [vmem:[%s5 + $0x1f0] sm:$0xff]
  %v5546 = vld [vmem:[%s5 + $0x1f8] sm:$0xff]
  %v5547 = vld [vmem:[%s6] sm:$0x3]
  %v5549 = vlaneseq
  %v5550 = vshrl.u32 %v5549, 7
  %v5551 = vsub.s32 0, %v5550
  %v5552 = vrot.slane %v5547, %v5551
  %v5553 = vlaneseq
  %v5554 = vshrl.u32 %v5553, 7
  %v5555 = vsub.s32 1, %v5554
  %v5556 = vrot.slane %v5547, %v5555
  %v5623 = vunpack.c.l.b16 %v5483
  %v5624 = vunpack.c.h.b16 %v5483
  %v5625 = vunpack.c.l.b16 %v5484
  %v5626 = vunpack.c.h.b16 %v5484
  %v5627 = vunpack.c.l.b16 %v5485
  %v5628 = vunpack.c.h.b16 %v5485
  %v5629 = vunpack.c.l.b16 %v5486
  %v5630 = vunpack.c.h.b16 %v5486
  %v5631 = vunpack.c.l.b16 %v5487
  %v5632 = vunpack.c.h.b16 %v5487
  %v5633 = vunpack.c.l.b16 %v5488
  %v5634 = vunpack.c.h.b16 %v5488
  %v5635 = vunpack.c.l.b16 %v5489
  %v5636 = vunpack.c.h.b16 %v5489
  %v5637 = vunpack.c.l.b16 %v5490
  %v5638 = vunpack.c.h.b16 %v5490
  %v5639 = vunpack.c.l.b16 %v5491
  %v5640 = vunpack.c.h.b16 %v5491
  %v5641 = vunpack.c.l.b16 %v5492
  %v5642 = vunpack.c.h.b16 %v5492
  %v5643 = vunpack.c.l.b16 %v5493
  %v5644 = vunpack.c.h.b16 %v5493
  %v5645 = vunpack.c.l.b16 %v5494
  %v5646 = vunpack.c.h.b16 %v5494
  %v5647 = vunpack.c.l.b16 %v5495
  %v5648 = vunpack.c.h.b16 %v5495
  %v5649 = vunpack.c.l.b16 %v5496
  %v5650 = vunpack.c.h.b16 %v5496
  %v5651 = vunpack.c.l.b16 %v5497
  %v5652 = vunpack.c.h.b16 %v5497
  %v5653 = vunpack.c.l.b16 %v5498
  %v5654 = vunpack.c.h.b16 %v5498
  %v5655 = vunpack.c.l.b16 %v5499
  %v5656 = vunpack.c.h.b16 %v5499
  %v5657 = vunpack.c.l.b16 %v5500
  %v5658 = vunpack.c.h.b16 %v5500
  %v5659 = vunpack.c.l.b16 %v5501
  %v5660 = vunpack.c.h.b16 %v5501
  %v5661 = vunpack.c.l.b16 %v5502
  %v5662 = vunpack.c.h.b16 %v5502
  %v5663 = vunpack.c.l.b16 %v5503
  %v5664 = vunpack.c.h.b16 %v5503
  %v5665 = vunpack.c.l.b16 %v5504
  %v5666 = vunpack.c.h.b16 %v5504
  %v5667 = vunpack.c.l.b16 %v5505
  %v5668 = vunpack.c.h.b16 %v5505
  %v5669 = vunpack.c.l.b16 %v5506
  %v5670 = vunpack.c.h.b16 %v5506
  %v5671 = vunpack.c.l.b16 %v5507
  %v5672 = vunpack.c.h.b16 %v5507
  %v5673 = vunpack.c.l.b16 %v5508
  %v5674 = vunpack.c.h.b16 %v5508
  %v5675 = vunpack.c.l.b16 %v5509
  %v5676 = vunpack.c.h.b16 %v5509
  %v5677 = vunpack.c.l.b16 %v5510
  %v5678 = vunpack.c.h.b16 %v5510
  %v5679 = vunpack.c.l.b16 %v5511
  %v5680 = vunpack.c.h.b16 %v5511
  %v5681 = vunpack.c.l.b16 %v5512
  %v5682 = vunpack.c.h.b16 %v5512
  %v5683 = vunpack.c.l.b16 %v5513
  %v5684 = vunpack.c.h.b16 %v5513
  %v5685 = vunpack.c.l.b16 %v5514
  %v5686 = vunpack.c.h.b16 %v5514
  %v5687 = vunpack.c.l.b16 %v5515
  %v5688 = vunpack.c.h.b16 %v5515
  %v5689 = vunpack.c.l.b16 %v5516
  %v5690 = vunpack.c.h.b16 %v5516
  %v5691 = vunpack.c.l.b16 %v5517
  %v5692 = vunpack.c.h.b16 %v5517
  %v5693 = vunpack.c.l.b16 %v5518
  %v5694 = vunpack.c.h.b16 %v5518
  %v5695 = vunpack.c.l.b16 %v5519
  %v5696 = vunpack.c.h.b16 %v5519
  %v5697 = vunpack.c.l.b16 %v5520
  %v5698 = vunpack.c.h.b16 %v5520
  %v5699 = vunpack.c.l.b16 %v5521
  %v5700 = vunpack.c.h.b16 %v5521
  %v5701 = vunpack.c.l.b16 %v5522
  %v5702 = vunpack.c.h.b16 %v5522
  %v5703 = vunpack.c.l.b16 %v5523
  %v5704 = vunpack.c.h.b16 %v5523
  %v5705 = vunpack.c.l.b16 %v5524
  %v5706 = vunpack.c.h.b16 %v5524
  %v5707 = vunpack.c.l.b16 %v5525
  %v5708 = vunpack.c.h.b16 %v5525
  %v5709 = vunpack.c.l.b16 %v5526
  %v5710 = vunpack.c.h.b16 %v5526
  %v5711 = vunpack.c.l.b16 %v5527
  %v5712 = vunpack.c.h.b16 %v5527
  %v5713 = vunpack.c.l.b16 %v5528
  %v5714 = vunpack.c.h.b16 %v5528
  %v5715 = vunpack.c.l.b16 %v5529
  %v5716 = vunpack.c.h.b16 %v5529
  %v5717 = vunpack.c.l.b16 %v5530
  %v5718 = vunpack.c.h.b16 %v5530
  %v5719 = vunpack.c.l.b16 %v5531
  %v5720 = vunpack.c.h.b16 %v5531
  %v5721 = vunpack.c.l.b16 %v5532
  %v5722 = vunpack.c.h.b16 %v5532
  %v5723 = vunpack.c.l.b16 %v5533
  %v5724 = vunpack.c.h.b16 %v5533
  %v5725 = vunpack.c.l.b16 %v5534
  %v5726 = vunpack.c.h.b16 %v5534
  %v5727 = vunpack.c.l.b16 %v5535
  %v5728 = vunpack.c.h.b16 %v5535
  %v5729 = vunpack.c.l.b16 %v5536
  %v5730 = vunpack.c.h.b16 %v5536
  %v5731 = vunpack.c.l.b16 %v5537
  %v5732 = vunpack.c.h.b16 %v5537
  %v5733 = vunpack.c.l.b16 %v5538
  %v5734 = vunpack.c.h.b16 %v5538
  %v5735 = vunpack.c.l.b16 %v5539
  %v5736 = vunpack.c.h.b16 %v5539
  %v5737 = vunpack.c.l.b16 %v5540
  %v5738 = vunpack.c.h.b16 %v5540
  %v5739 = vunpack.c.l.b16 %v5541
  %v5740 = vunpack.c.h.b16 %v5541
  %v5741 = vunpack.c.l.b16 %v5542
  %v5742 = vunpack.c.h.b16 %v5542
  %v5743 = vunpack.c.l.b16 %v5543
  %v5744 = vunpack.c.h.b16 %v5543
  %v5745 = vunpack.c.l.b16 %v5544
  %v5746 = vunpack.c.h.b16 %v5544
  %v5747 = vunpack.c.l.b16 %v5545
  %v5748 = vunpack.c.h.b16 %v5545
  %v5749 = vunpack.c.l.b16 %v5546
  %v5750 = vunpack.c.h.b16 %v5546
  %v5751 = vpack.c.b16 %v5625, %v5623
  %v5752 = vpack.c.b16 %v5626, %v5624
  %v5753 = vpack.c.b16 %v5629, %v5627
  %v5754 = vpack.c.b16 %v5630, %v5628
  %v5755 = vpack.c.b16 %v5633, %v5631
  %v5756 = vpack.c.b16 %v5634, %v5632
  %v5757 = vpack.c.b16 %v5637, %v5635
  %v5758 = vpack.c.b16 %v5638, %v5636
  %v5759 = vpack.c.b16 %v5641, %v5639
  %v5760 = vpack.c.b16 %v5642, %v5640
  %v5761 = vpack.c.b16 %v5645, %v5643
  %v5762 = vpack.c.b16 %v5646, %v5644
  %v5763 = vpack.c.b16 %v5649, %v5647
  %v5764 = vpack.c.b16 %v5650, %v5648
  %v5765 = vpack.c.b16 %v5653, %v5651
  %v5766 = vpack.c.b16 %v5654, %v5652
  %v5767 = vpack.c.b16 %v5657, %v5655
  %v5768 = vpack.c.b16 %v5658, %v5656
  %v5769 = vpack.c.b16 %v5661, %v5659
  %v5770 = vpack.c.b16 %v5662, %v5660
  %v5771 = vpack.c.b16 %v5665, %v5663
  %v5772 = vpack.c.b16 %v5666, %v5664
  %v5773 = vpack.c.b16 %v5669, %v5667
  %v5774 = vpack.c.b16 %v5670, %v5668
  %v5775 = vpack.c.b16 %v5673, %v5671
  %v5776 = vpack.c.b16 %v5674, %v5672
  %v5777 = vpack.c.b16 %v5677, %v5675
  %v5778 = vpack.c.b16 %v5678, %v5676
  %v5779 = vpack.c.b16 %v5681, %v5679
  %v5780 = vpack.c.b16 %v5682, %v5680
  %v5781 = vpack.c.b16 %v5685, %v5683
  %v5782 = vpack.c.b16 %v5686, %v5684
  %v5783 = vpack.c.b16 %v5689, %v5687
  %v5784 = vpack.c.b16 %v5690, %v5688
  %v5785 = vpack.c.b16 %v5693, %v5691
  %v5786 = vpack.c.b16 %v5694, %v5692
  %v5787 = vpack.c.b16 %v5697, %v5695
  %v5788 = vpack.c.b16 %v5698, %v5696
  %v5789 = vpack.c.b16 %v5701, %v5699
  %v5790 = vpack.c.b16 %v5702, %v5700
  %v5791 = vpack.c.b16 %v5705, %v5703
  %v5792 = vpack.c.b16 %v5706, %v5704
  %v5793 = vpack.c.b16 %v5709, %v5707
  %v5794 = vpack.c.b16 %v5710, %v5708
  %v5795 = vpack.c.b16 %v5713, %v5711
  %v5796 = vpack.c.b16 %v5714, %v5712
  %v5797 = vpack.c.b16 %v5717, %v5715
  %v5798 = vpack.c.b16 %v5718, %v5716
  %v5799 = vpack.c.b16 %v5721, %v5719
  %v5800 = vpack.c.b16 %v5722, %v5720
  %v5801 = vpack.c.b16 %v5725, %v5723
  %v5802 = vpack.c.b16 %v5726, %v5724
  %v5803 = vpack.c.b16 %v5729, %v5727
  %v5804 = vpack.c.b16 %v5730, %v5728
  %v5805 = vpack.c.b16 %v5733, %v5731
  %v5806 = vpack.c.b16 %v5734, %v5732
  %v5807 = vpack.c.b16 %v5737, %v5735
  %v5808 = vpack.c.b16 %v5738, %v5736
  %v5809 = vpack.c.b16 %v5741, %v5739
  %v5810 = vpack.c.b16 %v5742, %v5740
  %v5811 = vpack.c.b16 %v5745, %v5743
  %v5812 = vpack.c.b16 %v5746, %v5744
  %v5813 = vpack.c.b16 %v5749, %v5747
  %v5814 = vpack.c.b16 %v5750, %v5748
  %5879 = vmatprep.subr.bf16.mxu0 %v5752
  %5880 = vmatpush1.bf16.msra.mxu0 %v5751
  %5881 = vmatprep.subr.bf16.mxu0 %v5754
  %5882 = vmatpush1.bf16.msra.mxu0 %v5753
  %5883 = vmatprep.subr.bf16.mxu0 %v5756
  %5884 = vmatpush1.bf16.msra.mxu0 %v5755
  %5885 = vmatprep.subr.bf16.mxu0 %v5758
  %5886 = vmatpush1.bf16.msra.mxu0 %v5757
  %5887 = vmatprep.subr.bf16.mxu0 %v5760
  %5888 = vmatpush1.bf16.msra.mxu0 %v5759
  %5889 = vmatprep.subr.bf16.mxu0 %v5762
  %5890 = vmatpush1.bf16.msra.mxu0 %v5761
  %5891 = vmatprep.subr.bf16.mxu0 %v5764
  %5892 = vmatpush1.bf16.msra.mxu0 %v5763
  %5893 = vmatprep.subr.bf16.mxu0 %v5766
  %5894 = vmatpush1.bf16.msra.mxu0 %v5765
  %5895 = vmatprep.subr.bf16.mxu0 %v5768
  %5896 = vmatpush1.bf16.msra.mxu0 %v5767
  %5897 = vmatprep.subr.bf16.mxu0 %v5770
  %5898 = vmatpush1.bf16.msra.mxu0 %v5769
  %5899 = vmatprep.subr.bf16.mxu0 %v5772
  %5900 = vmatpush1.bf16.msra.mxu0 %v5771
  %5901 = vmatprep.subr.bf16.mxu0 %v5774
  %5902 = vmatpush1.bf16.msra.mxu0 %v5773
  %5903 = vmatprep.subr.bf16.mxu0 %v5776
  %5904 = vmatpush1.bf16.msra.mxu0 %v5775
  %5905 = vmatprep.subr.bf16.mxu0 %v5778
  %5906 = vmatpush1.bf16.msra.mxu0 %v5777
  %5907 = vmatprep.subr.bf16.mxu0 %v5780
  %5908 = vmatpush1.bf16.msra.mxu0 %v5779
  %5909 = vmatprep.subr.bf16.mxu0 %v5782
  %5910 = vmatpush1.bf16.msra.mxu0 %v5781
  %5911 = vmatprep.mubr.bf16.mxu0 %v5480
  %5912 = vmatmul.mubr.bf16.gmra.mrb[0].mxu0 %v5479
  %v5913 = vpop.f32.mrb[0].mxu0
  %v5914 = vadd.f32 %v5552, %v5913
  %v5915 = vpop.f32.mrb[0].mxu0
  %v5916 = vadd.f32 %v5556, %v5915
  %v5917 = vpop.f32.mrb[0].mxu0
  %v5918 = vadd.f32 %v5552, %v5917
  %v5919 = vpop.f32.mrb[0].mxu0
  %v5920 = vadd.f32 %v5556, %v5919
  %5921 = vdwg.mxu0
  %5922 = vmatprep.subr.bf16.mxu0 %v5784
  %5923 = vmatpush1.bf16.msra.mxu0 %v5783
  %5924 = vmatprep.subr.bf16.mxu0 %v5786
  %5925 = vmatpush1.bf16.msra.mxu0 %v5785
  %5926 = vmatprep.subr.bf16.mxu0 %v5788
  %5927 = vmatpush1.bf16.msra.mxu0 %v5787
  %5928 = vmatprep.subr.bf16.mxu0 %v5790
  %5929 = vmatpush1.bf16.msra.mxu0 %v5789
  %5930 = vmatprep.subr.bf16.mxu0 %v5792
  %5931 = vmatpush1.bf16.msra.mxu0 %v5791
  %5932 = vmatprep.subr.bf16.mxu0 %v5794
  %5933 = vmatpush1.bf16.msra.mxu0 %v5793
  %5934 = vmatprep.subr.bf16.mxu0 %v5796
  %5935 = vmatpush1.bf16.msra.mxu0 %v5795
  %5936 = vmatprep.subr.bf16.mxu0 %v5798
  %5937 = vmatpush1.bf16.msra.mxu0 %v5797
  %5938 = vmatprep.subr.bf16.mxu0 %v5800
  %5939 = vmatpush1.bf16.msra.mxu0 %v5799
  %5940 = vmatprep.subr.bf16.mxu0 %v5802
  %5941 = vmatpush1.bf16.msra.mxu0 %v5801
  %5942 = vmatprep.subr.bf16.mxu0 %v5804
  %5943 = vmatpush1.bf16.msra.mxu0 %v5803
  %5944 = vmatprep.subr.bf16.mxu0 %v5806
  %5945 = vmatpush1.bf16.msra.mxu0 %v5805
  %5946 = vmatprep.subr.bf16.mxu0 %v5808
  %5947 = vmatpush1.bf16.msra.mxu0 %v5807
  %5948 = vmatprep.subr.bf16.mxu0 %v5810
  %5949 = vmatpush1.bf16.msra.mxu0 %v5809
  %5950 = vmatprep.subr.bf16.mxu0 %v5812
  %5951 = vmatpush1.bf16.msra.mxu0 %v5811
  %5952 = vmatprep.subr.bf16.mxu0 %v5814
  %5953 = vmatpush1.bf16.msra.mxu0 %v5813
  %5954 = vmatprep.mubr.bf16.mxu0 %v5482
  %5955 = vmatmul.mubr.bf16.gmra.mrb[0].mxu0 %v5481
  %v5956 = vpop.f32.mrb[0].mxu0
  %v5957 = vadd.f32 %v5914, %v5956
  %v5958 = vpop.f32.mrb[0].mxu0
  %v5959 = vadd.f32 %v5916, %v5958
  %v5960 = vpop.f32.mrb[0].mxu0
  %v5961 = vadd.f32 %v5918, %v5960
  %v5962 = vpop.f32.mrb[0].mxu0
  %v5963 = vadd.f32 %v5920, %v5962
  %5964 = vdwg.mxu0
  %vm5965 = vcmp.gt.f32.partialorder %v5957, 0.0
  %vm5966 = vcmp.gt.f32.partialorder %v5959, 0.0
  %vm5967 = vcmp.gt.f32.partialorder %v5961, 0.0
  %vm5968 = vcmp.gt.f32.partialorder %v5963, 0.0
  %v5969 = vmul.f32 %v5957, 0.2
  %v5970 = vmul.f32 %v5959, 0.2
  %v5971 = vmul.f32 %v5961, 0.2
  %v5972 = vmul.f32 %v5963, 0.2
  %v5973 = vsel %vm5965, %v5957, %v5969
  %v5974 = vsel %vm5966, %v5959, %v5970
  %v5975 = vsel %vm5967, %v5961, %v5971
  %v5976 = vsel %vm5968, %v5963, %v5972
  %v5977 = vld [vmem:[%s7] sm:$0x3]
  %v5979 = vlaneseq
  %v5980 = vshrl.u32 %v5979, 7
  %v5981 = vsub.s32 0, %v5980
  %v5982 = vrot.slane %v5977, %v5981
  %v5983 = vlaneseq
  %v5984 = vshrl.u32 %v5983, 7
  %v5985 = vsub.s32 1, %v5984
  %v5986 = vrot.slane %v5977, %v5985
  %v5989 = vmul.f32 %v5973, %v5982
  %v5990 = vmul.f32 %v5974, %v5986
  %v5991 = vmul.f32 %v5975, %v5982
  %v5992 = vmul.f32 %v5976, %v5986
  %v5993 = vadd.f32 %v5989, %v5990
  %5994 = vadd.xlane.f32.xlu0 %v5993
  %v5995 = vpop.xlane.xlu0 %5994
  %v5996 = vadd.f32 %v5991, %v5992
  %5997 = vadd.xlane.f32.xlu0 %v5996
  %v5998 = vpop.xlane.xlu0 %5997
  %v5999 = vld [vmem:[#allocation2] sm:$0x1]
  %v6001 = vlaneseq
  %v6002 = vshrl.u32 %v6001, 7
  %v6003 = vsub.s32 0, %v6002
  %v6004 = vrot.slane %v5999, %v6003
  %v6006 = vadd.f32 %v5995, %v6004
  %v6007 = vadd.f32 %v5998, %v6004
  %v6008 = vxor.u32 %v6006, 2147483648
  %v6009 = vxor.u32 %v6007, 2147483648
  %v6010 = vmul.f32 %v6008, 1.442695
  %v6011 = vpow.pop %v6010
  %v6012 = vmul.f32 %v6009, 1.442695
  %v6013 = vpow.pop %v6012
  %v6014 = vadd.f32 %v6011, 1.0
  %v6015 = vadd.f32 %v6013, 1.0
  %v6016 = vrcp.pop %v6014
  %v6017 = vmul.f32 1.0, %v6016
  %v6018 = vrcp.pop %v6015
  %v6019 = vmul.f32 1.0, %v6018
  %vm6020 = vcmask 7168
  %6021 = vst.msk [vmem:[%s9] sm:$0xff] %vm6020, %v6017
  %6022 = vst.msk [vmem:[%s9 + $0x8] sm:$0xff] %vm6020, %v6019
  // Predicated region
  $region38: #{discriminator_forward.1} parent=0 // pred_check
    _
  $region39: #{discriminator_forward.1} parent=0 // pred_check_branch
    %6024 = sbr.rel (0) target = $region41
  $region40: #{discriminator_forward.1} parent=0 // pred_region
    _
  $region41: #{discriminator_forward.1} parent=0 // pred_fallthru
    _
  // Predicated region
  $region42: #{discriminator_forward.1} parent=0 // pred_check
    _
  $region43: #{discriminator_forward.1} parent=0 // pred_check_branch
    %6026 = sbr.rel (0) target = $region45
  $region44: #{discriminator_forward.1} parent=0 // pred_region
    _
  $region45: #{discriminator_forward.1} parent=0 // pred_fallthru
    _

</llo_original>
